<compile_context>
chip_gen: v5e
topology: v5e:2x2
jax: 0.10.0
libtpu: 0.0.40
codegen_flags: <defaults>
</compile_context>

<pallas_src>
import functools

import jax
import jax.numpy as jnp
from jax.experimental import pallas as pl
from jax.experimental.pallas import tpu as pltpu


# ----------------------------------------------------------------------------
# Kernel 1: fused detector.
#   backbone 3x3 conv (im2col matmul) + bias + ReLU
#   -> fused heads matmul into a lane-dense 128-wide slab
#      columns: [0]=sigmoid(hm) | [1:3]=wh | [3:5]=reg | [5:5+emb]=L2-norm id
#      remaining lanes are zeroed padding.
#   The heatmap column is also written to a dedicated (tm, 1) output so the
#   decode kernel never has to re-read the 128-wide slab from HBM.
# ----------------------------------------------------------------------------
def _detector_kernel(cols_ref, wbb_ref, bbb_ref, whd_ref, bhd_ref,
                     slab_ref, hm_ref, *, emb_dim):
    # backbone conv (bf16 MXU matmul, f32 accumulate); feat stays on-chip
    feat = jnp.dot(cols_ref[...], wbb_ref[...],
                   preferred_element_type=jnp.float32)
    feat = jnp.maximum(feat + bbb_ref[...], 0.0)

    # all four heads in one lane-dense matmul
    y = jnp.dot(feat.astype(jnp.bfloat16), whd_ref[...],
                preferred_element_type=jnp.float32)
    y = y + bhd_ref[...]

    col = jax.lax.broadcasted_iota(jnp.int32, y.shape, 1)
    hm = jax.nn.sigmoid(y[:, 0:1])                       # EUP, (tm, 1)

    # L2-normalize ONLY the real id-embedding columns (exclude pad/other heads)
    id_mask = (col >= 5) & (col < 5 + emb_dim)
    id_vals = jnp.where(id_mask, y, 0.0)
    inv_n = jax.lax.rsqrt(jnp.sum(id_vals * id_vals, axis=-1, keepdims=True)
                          + 1e-12)
    y = jnp.where(id_mask, y * inv_n, y)
    y = jnp.where(col == 0, hm, y)                       # sigmoid hm in column 0
    y = jnp.where(col < 5 + emb_dim, y, 0.0)             # zero lane padding

    slab_ref[...] = y
    hm_ref[...] = hm


def pallas_detector(cols_bf16, wbb, bbb, whd, bhd, *, emb_dim, tm=512):
    """cols: (M, 9C) bf16, wbb: (9C, c_mid) bf16, whd: (c_mid, 128) bf16."""
    M, K = cols_bf16.shape
    c_mid = wbb.shape[1]
    n_out = whd.shape[1]
    m_pad = pl.cdiv(M, tm) * tm
    if m_pad != M:
        cols_bf16 = jnp.pad(cols_bf16, ((0, m_pad - M), (0, 0)))

    slab, hm = pl.pallas_call(
        functools.partial(_detector_kernel, emb_dim=emb_dim),
        out_shape=(jax.ShapeDtypeStruct((m_pad, n_out), jnp.float32),
                   jax.ShapeDtypeStruct((m_pad, 1), jnp.float32)),
        grid_spec=pltpu.PrefetchScalarGridSpec(
            num_scalar_prefetch=0,
            grid=(m_pad // tm,),
            in_specs=[
                pl.BlockSpec((tm, K), lambda i: (i, 0)),
                # weights/biases: constant block index -> stay VMEM-resident
                pl.BlockSpec((K, c_mid), lambda i: (0, 0)),
                pl.BlockSpec((1, c_mid), lambda i: (0, 0)),
                pl.BlockSpec((c_mid, n_out), lambda i: (0, 0)),
                pl.BlockSpec((1, n_out), lambda i: (0, 0)),
            ],
            out_specs=(pl.BlockSpec((tm, n_out), lambda i: (i, 0)),
                       pl.BlockSpec((tm, 1), lambda i: (i, 0))),
        ),
        compiler_params=pltpu.CompilerParams(
            dimension_semantics=("parallel",),
            vmem_limit_bytes=64 * 1024 * 1024,
        ),
    )(cols_bf16, wbb, bbb, whd, bhd)
    return slab[:M], hm[:M]


# ----------------------------------------------------------------------------
# Kernel 2: CenterNet decode, per image.
# Separable 3x3 max-pool peak NMS via pltpu.roll (XLU lane/sublane rotates),
# boundary-masked to 0 (safe: sigmoid heatmap is strictly in (0, 1)), then
# thresholded.  pred_ids are 1-based per-image pixel indices; 0 == "no
# detection" (exactly what FairMOT.postprocess filters out).
# ----------------------------------------------------------------------------
def _decode_kernel(hm_ref, scores_ref, ids_ref, *, thresh):
    hm = hm_ref[...]                                     # (H, W)
    H, W = hm.shape
    rows = jax.lax.broadcasted_iota(jnp.int32, (H, W), 0)
    cols = jax.lax.broadcasted_iota(jnp.int32, (H, W), 1)

    # horizontal max over {w-1, w, w+1} (lane-axis rolls, zero-fill boundary)
    right = jnp.where(cols + 1 < W, pltpu.roll(hm, shift=W - 1, axis=1), 0.0)
    left = jnp.where(cols - 1 >= 0, pltpu.roll(hm, shift=1, axis=1), 0.0)
    rowmax = jnp.maximum(hm, jnp.maximum(left, right))
    # vertical max over {h-1, h, h+1} (sublane-axis rolls)
    below = jnp.where(rows + 1 < H, pltpu.roll(rowmax, shift=H - 1, axis=0), 0.0)
    above = jnp.where(rows - 1 >= 0, pltpu.roll(rowmax, shift=1, axis=0), 0.0)
    pooled = jnp.maximum(rowmax, jnp.maximum(above, below))

    peak = (hm >= pooled) & (hm > thresh)
    flat_id = rows * W + cols + 1                        # per-image, 1-based
    scores_ref[...] = jnp.where(peak, hm, 0.0)
    ids_ref[...] = jnp.where(peak, flat_id, 0)


def pallas_decode(hm_nhw, thresh=0.05):
    N, H, W = hm_nhw.shape
    return pl.pallas_call(
        functools.partial(_decode_kernel, thresh=thresh),
        out_shape=(jax.ShapeDtypeStruct((N, H, W), jnp.float32),
                   jax.ShapeDtypeStruct((N, H, W), jnp.int32)),
        grid_spec=pltpu.PrefetchScalarGridSpec(
            num_scalar_prefetch=0,
            grid=(N,),
            in_specs=[pl.BlockSpec((None, H, W), lambda n: (n, 0, 0))],
            out_specs=(pl.BlockSpec((None, H, W), lambda n: (n, 0, 0)),
                       pl.BlockSpec((None, H, W), lambda n: (n, 0, 0))),
        ),
        compiler_params=pltpu.CompilerParams(
            dimension_semantics=("parallel",),
            vmem_limit_bytes=32 * 1024 * 1024,
        ),
    )(hm_nhw)


# ----------------------------------------------------------------------------
# JAX glue: im2col, parameters, one-time weight packing, full forward.
# ----------------------------------------------------------------------------
def im2col3x3(x_nhwc):
    N, H, W, C = x_nhwc.shape
    xp = jnp.pad(x_nhwc, ((0, 0), (1, 1), (1, 1), (0, 0)))
    patches = [xp[:, dy:dy + H, dx:dx + W, :] for dy in range(3) for dx in range(3)]
    cols = jnp.concatenate(patches, axis=-1)             # (N, H, W, 9*C)
    return cols.reshape(N * H * W, 9 * C)


def init_params(key, c_in=3, c_mid=32, emb_dim=16):
    ks = jax.random.split(key, 6)
    p = {}
    p["bb_w"] = (0.1 * jax.random.normal(ks[0], (3, 3, c_in, c_mid), jnp.float32)
                 ).reshape(9 * c_in, c_mid)
    p["bb_b"] = jnp.zeros((1, c_mid), jnp.float32)
    p["hm_w"] = 0.1 * jax.random.normal(ks[1], (c_mid, 1), jnp.float32)
    p["hm_b"] = jnp.full((1, 1), -2.19, jnp.float32)     # CenterNet focal bias
    p["wh_w"] = 0.1 * jax.random.normal(ks[2], (c_mid, 2), jnp.float32)
    p["wh_b"] = jnp.zeros((1, 2), jnp.float32)
    p["reg_w"] = 0.1 * jax.random.normal(ks[3], (c_mid, 2), jnp.float32)
    p["reg_b"] = jnp.zeros((1, 2), jnp.float32)
    p["id_w"] = 0.1 * jax.random.normal(ks[4], (c_mid, emb_dim), jnp.float32)
    p["id_b"] = jnp.zeros((1, emb_dim), jnp.float32)
    return p


def pack_params(params, n_out=128):
    """One-time packing (hoisted out of the per-frame path): concatenate the
    four head weights into a single lane-dense, 128-wide bf16 matrix."""
    c_mid = params["bb_w"].shape[1]
    emb = params["id_w"].shape[1]
    w = jnp.zeros((c_mid, n_out), jnp.float32)
    w = w.at[:, 0:1].set(params["hm_w"])
    w = w.at[:, 1:3].set(params["wh_w"])
    w = w.at[:, 3:5].set(params["reg_w"])
    w = w.at[:, 5:5 + emb].set(params["id_w"])
    b = jnp.zeros((1, n_out), jnp.float32)
    b = b.at[:, 0:1].set(params["hm_b"])
    b = b.at[:, 1:3].set(params["wh_b"])
    b = b.at[:, 3:5].set(params["reg_b"])
    b = b.at[:, 5:5 + emb].set(params["id_b"])
    return {
        "bb_w": params["bb_w"].astype(jnp.bfloat16),
        "bb_b": params["bb_b"],
        "head_w": w.astype(jnp.bfloat16),
        "head_b": b,
    }


def fairmot_forward(x_nchw, packed, *, emb_dim=16, thresh=0.05, tm=512):
    """Inference branch of FairMOT.forward (self.training == False)."""
    N, C, H, W = x_nchw.shape
    x = jnp.transpose(x_nchw, (0, 2, 3, 1))              # NCHW -> NHWC
    # TODO(synk): for production resolutions move im2col into the kernel
    # (raw NHWC tile + 1-row halo DMA) to avoid the 9x input-bandwidth blowup.
    cols = im2col3x3(x).astype(jnp.bfloat16)             # (N*H*W, 9*C) bf16

    slab, hm_flat = pallas_detector(cols, packed["bb_w"], packed["bb_b"],
                                    packed["head_w"], packed["head_b"],
                                    emb_dim=emb_dim, tm=tm)

    hm = hm_flat.reshape(N, H, W)
    scores, pred_ids = pallas_decode(hm, thresh=thresh)

    wh = slab[:, 1:3].reshape(N, H, W, 2)
    reg = slab[:, 3:5].reshape(N, H, W, 2)
    idf = slab[:, 5:5 + emb_dim].reshape(N, H, W, emb_dim)

    # TODO(synk): the online tracker (Kalman filter + Hungarian assignment,
    # per-sequence state) and the dynamic-shape postprocess
    # `inst[inst.pred_ids != 0]` are stateful host logic with no static-shape
    # Pallas equivalent; pred_ids == 0 marks entries to filter.
    return {
        "hm": hm,
        "wh": wh,
        "reg": reg,
        "id": idf,
        "scores": scores,
        "pred_ids": pred_ids,
    }


if __name__ == "__main__":
    key = jax.random.PRNGKey(0)
    k_x, k_p = jax.random.split(key)
    # PyTorch-convention NCHW input image batch.
    x = jax.random.normal(k_x, (2, 3, 16, 16), jnp.float32)
    params = init_params(k_p, c_in=3, c_mid=32, emb_dim=16)
    packed = pack_params(params)

    fwd = jax.jit(functools.partial(fairmot_forward, emb_dim=16))
    out = fwd(x, packed)
    jax.block_until_ready(out)

    assert out["hm"].shape == (2, 16, 16)
    assert out["wh"].shape == (2, 16, 16, 2)
    assert out["reg"].shape == (2, 16, 16, 2)
    assert out["id"].shape == (2, 16, 16, 16)
    assert out["scores"].shape == (2, 16, 16)
    assert out["pred_ids"].dtype == jnp.int32
    # sanity: id embeddings are unit-norm, heatmap in (0,1)
    norms = jnp.linalg.norm(out["id"], axis=-1)
    assert bool(jnp.all(jnp.abs(norms - 1.0) < 1e-2))
    assert bool(jnp.all((out["hm"] > 0.0) & (out["hm"] < 1.0)))
    print("KERNEL_OK")
</pallas_src>

<mosaic_0001>
module attributes {stable_mosaic.version = 11 : i64} {
  func.func @_detector_kernel(%arg0: i32, %arg1: memref<512x27xbf16, #tpu.memory_space<vmem>>, %arg2: memref<27x32xbf16, #tpu.memory_space<vmem>>, %arg3: memref<1x32xf32, #tpu.memory_space<vmem>>, %arg4: memref<32x128xbf16, #tpu.memory_space<vmem>>, %arg5: memref<1x128xf32, #tpu.memory_space<vmem>>, %arg6: memref<512x128xf32, #tpu.memory_space<vmem>>, %arg7: memref<512x1xf32, #tpu.memory_space<vmem>>) attributes {dimension_semantics = [#tpu.dimension_semantics<parallel>], iteration_bounds = array<i64: 1>, scalar_prefetch = 0 : i64, scratch_operands = 0 : i64, tpu.core_type = #tpu.core_type<tc>, window_params = [{transform_indices = @transform_0, window_bounds = array<i64: 512, 27>}, {pipeline_mode = #tpu.pipeline_mode<synchronous>, transform_indices = @transform_1, window_bounds = array<i64: 27, 32>}, {pipeline_mode = #tpu.pipeline_mode<synchronous>, transform_indices = @transform_2, window_bounds = array<i64: 1, 32>}, {pipeline_mode = #tpu.pipeline_mode<synchronous>, transform_indices = @transform_3, window_bounds = array<i64: 32, 128>}, {pipeline_mode = #tpu.pipeline_mode<synchronous>, transform_indices = @transform_4, window_bounds = array<i64: 1, 128>}, {transform_indices = @transform_5, window_bounds = array<i64: 512, 128>}, {transform_indices = @transform_6, window_bounds = array<i64: 512, 1>}]} {
    %c0 = arith.constant 0 : index
    %c0_0 = arith.constant 0 : index
    %0 = vector.load %arg1[%c0, %c0_0] : memref<512x27xbf16, #tpu.memory_space<vmem>>, vector<512x27xbf16>
    %c0_1 = arith.constant 0 : index
    %c0_2 = arith.constant 0 : index
    %1 = vector.load %arg2[%c0_1, %c0_2] : memref<27x32xbf16, #tpu.memory_space<vmem>>, vector<27x32xbf16>
    %cst = arith.constant dense<0.000000e+00> : vector<512x32xf32>
    %2 = tpu.matmul %0, %1, %cst {dimension_numbers = #tpu.dot_dimension_numbers<[1], [0], [0], [1], [0, 0, 1, 1], [], []>} : vector<512x27xbf16>, vector<27x32xbf16>, vector<512x32xf32> -> vector<512x32xf32>
    %c0_3 = arith.constant 0 : index
    %c0_4 = arith.constant 0 : index
    %3 = vector.load %arg3[%c0_3, %c0_4] : memref<1x32xf32, #tpu.memory_space<vmem>>, vector<1x32xf32>
    %4 = vector.broadcast %3 : vector<1x32xf32> to vector<512x32xf32>
    %5 = arith.addf %2, %4 : vector<512x32xf32>
    %cst_5 = arith.constant 0.000000e+00 : f32
    %6 = vector.broadcast %cst_5 : f32 to vector<512x32xf32>
    %7 = arith.maximumf %5, %6 : vector<512x32xf32>
    %8 = arith.truncf %7 : vector<512x32xf32> to vector<512x32xbf16>
    %c0_6 = arith.constant 0 : index
    %c0_7 = arith.constant 0 : index
    %9 = vector.load %arg4[%c0_6, %c0_7] : memref<32x128xbf16, #tpu.memory_space<vmem>>, vector<32x128xbf16>
    %cst_8 = arith.constant dense<0.000000e+00> : vector<512x128xf32>
    %10 = tpu.matmul %8, %9, %cst_8 {dimension_numbers = #tpu.dot_dimension_numbers<[1], [0], [0], [1], [0, 0, 1, 1], [], []>} : vector<512x32xbf16>, vector<32x128xbf16>, vector<512x128xf32> -> vector<512x128xf32>
    %c0_9 = arith.constant 0 : index
    %c0_10 = arith.constant 0 : index
    %11 = vector.load %arg5[%c0_9, %c0_10] : memref<1x128xf32, #tpu.memory_space<vmem>>, vector<1x128xf32>
    %12 = vector.broadcast %11 : vector<1x128xf32> to vector<512x128xf32>
    %13 = arith.addf %10, %12 : vector<512x128xf32>
    %14 = tpu.iota {dimensions = array<i32: 1>} : vector<512x128xi32>
    %15 = vector.extract_strided_slice %13 {offsets = [0, 0], sizes = [512, 1], strides = [1, 1]} : vector<512x128xf32> to vector<512x1xf32>
    %16 = arith.negf %15 : vector<512x1xf32>
    %17 = math.exp %16 : vector<512x1xf32>
    %cst_11 = arith.constant 1.000000e+00 : f32
    %18 = vector.broadcast %cst_11 : f32 to vector<512x1xf32>
    %19 = arith.addf %18, %17 : vector<512x1xf32>
    %20 = arith.divf %18, %19 : vector<512x1xf32>
    %c5_i32 = arith.constant 5 : i32
    %21 = vector.broadcast %c5_i32 : i32 to vector<512x128xi32>
    %22 = arith.cmpi sge, %14, %21 : vector<512x128xi32>
    %c21_i32 = arith.constant 21 : i32
    %23 = vector.broadcast %c21_i32 : i32 to vector<512x128xi32>
    %24 = arith.cmpi slt, %14, %23 : vector<512x128xi32>
    %25 = arith.andi %22, %24 : vector<512x128xi1>
    %cst_12 = arith.constant 0.000000e+00 : f32
    %26 = vector.broadcast %cst_12 : f32 to vector<512x128xf32>
    %27 = arith.select %25, %13, %26 : vector<512x128xi1>, vector<512x128xf32>
    %28 = arith.mulf %27, %27 : vector<512x128xf32>
    %cst_13 = arith.constant dense<0.000000e+00> : vector<512xf32>
    %29 = vector.multi_reduction <add>, %28, %cst_13 [1] : vector<512x128xf32> to vector<512xf32>
    %30 = vector.shape_cast %29 : vector<512xf32> to vector<512x1xf32>
    %cst_14 = arith.constant 9.99999996E-13 : f32
    %31 = vector.broadcast %cst_14 : f32 to vector<512x1xf32>
    %32 = arith.addf %30, %31 : vector<512x1xf32>
    %33 = math.rsqrt %32 : vector<512x1xf32>
    %34 = vector.broadcast %33 : vector<512x1xf32> to vector<512x128xf32>
    %35 = arith.mulf %13, %34 : vector<512x128xf32>
    %36 = arith.select %25, %35, %13 : vector<512x128xi1>, vector<512x128xf32>
    %c0_i32 = arith.constant 0 : i32
    %37 = vector.broadcast %c0_i32 : i32 to vector<512x128xi32>
    %38 = arith.cmpi eq, %14, %37 : vector<512x128xi32>
    %39 = vector.shape_cast %20 : vector<512x1xf32> to vector<512x1xf32>
    %40 = vector.broadcast %39 : vector<512x1xf32> to vector<512x128xf32>
    %41 = arith.select %38, %40, %36 : vector<512x128xi1>, vector<512x128xf32>
    %c21_i32_15 = arith.constant 21 : i32
    %42 = vector.broadcast %c21_i32_15 : i32 to vector<512x128xi32>
    %43 = arith.cmpi slt, %14, %42 : vector<512x128xi32>
    %cst_16 = arith.constant 0.000000e+00 : f32
    %44 = vector.broadcast %cst_16 : f32 to vector<512x128xf32>
    %45 = arith.select %43, %41, %44 : vector<512x128xi1>, vector<512x128xf32>
    %c0_17 = arith.constant 0 : index
    %c0_18 = arith.constant 0 : index
    %46 = vector.load %arg6[%c0_17, %c0_18] : memref<512x128xf32, #tpu.memory_space<vmem>>, vector<512x128xf32>
    tpu.vector_store %arg6[%c0_17, %c0_18], %45 {strides = array<i32>} : memref<512x128xf32, #tpu.memory_space<vmem>>, vector<512x128xf32>,
    %c0_19 = arith.constant 0 : index
    %c0_20 = arith.constant 0 : index
    %47 = vector.load %arg7[%c0_19, %c0_20] : memref<512x1xf32, #tpu.memory_space<vmem>>, vector<512x1xf32>
    tpu.vector_store %arg7[%c0_19, %c0_20], %20 {strides = array<i32>} : memref<512x1xf32, #tpu.memory_space<vmem>>, vector<512x1xf32>,
    return
  }
  func.func @transform_0(%arg0: i32) -> (i32, i32) {
    %c0_i32 = arith.constant 0 : i32
    %c0_i32_0 = arith.constant 0 : i32
    return %arg0, %c0_i32 : i32, i32
  }
  func.func @transform_1(%arg0: i32) -> (i32, i32) {
    %c0_i32 = arith.constant 0 : i32
    %c0_i32_0 = arith.constant 0 : i32
    %c0_i32_1 = arith.constant 0 : i32
    return %c0_i32, %c0_i32_0 : i32, i32
  }
  func.func @transform_2(%arg0: i32) -> (i32, i32) {
    %c0_i32 = arith.constant 0 : i32
    %c0_i32_0 = arith.constant 0 : i32
    %c0_i32_1 = arith.constant 0 : i32
    return %c0_i32, %c0_i32_0 : i32, i32
  }
  func.func @transform_3(%arg0: i32) -> (i32, i32) {
    %c0_i32 = arith.constant 0 : i32
    %c0_i32_0 = arith.constant 0 : i32
    %c0_i32_1 = arith.constant 0 : i32
    return %c0_i32, %c0_i32_0 : i32, i32
  }
  func.func @transform_4(%arg0: i32) -> (i32, i32) {
    %c0_i32 = arith.constant 0 : i32
    %c0_i32_0 = arith.constant 0 : i32
    %c0_i32_1 = arith.constant 0 : i32
    return %c0_i32, %c0_i32_0 : i32, i32
  }
  func.func @transform_5(%arg0: i32) -> (i32, i32) {
    %c0_i32 = arith.constant 0 : i32
    %c0_i32_0 = arith.constant 0 : i32
    return %arg0, %c0_i32 : i32, i32
  }
  func.func @transform_6(%arg0: i32) -> (i32, i32) {
    %c0_i32 = arith.constant 0 : i32
    %c0_i32_0 = arith.constant 0 : i32
    return %arg0, %c0_i32 : i32, i32
  }
}

module attributes {stable_mosaic.version = 11 : i64} {
  func.func @_decode_kernel(%arg0: i32, %arg1: memref<1x16x16xf32, #tpu.memory_space<vmem>>, %arg2: memref<1x16x16xf32, #tpu.memory_space<vmem>>, %arg3: memref<1x16x16xi32, #tpu.memory_space<vmem>>) attributes {dimension_semantics = [#tpu.dimension_semantics<parallel>], iteration_bounds = array<i64: 2>, scalar_prefetch = 0 : i64, scratch_operands = 0 : i64, tpu.core_type = #tpu.core_type<tc>, window_params = [{transform_indices = @transform_0, window_bounds = array<i64: 1, 16, 16>}, {transform_indices = @transform_1, window_bounds = array<i64: 1, 16, 16>}, {transform_indices = @transform_2, window_bounds = array<i64: 1, 16, 16>}]} {
    %c0 = arith.constant 0 : index
    %c0_0 = arith.constant 0 : index
    %c0_1 = arith.constant 0 : index
    %0 = vector.load %arg1[%c0, %c0_0, %c0_1] : memref<1x16x16xf32, #tpu.memory_space<vmem>>, vector<1x16x16xf32>
    %1 = vector.shape_cast %0 : vector<1x16x16xf32> to vector<16x16xf32>
    %2 = tpu.iota {dimensions = array<i32: 0>} : vector<16x16xi32>
    %3 = tpu.iota {dimensions = array<i32: 1>} : vector<16x16xi32>
    %c1_i32 = arith.constant 1 : i32
    %4 = vector.broadcast %c1_i32 : i32 to vector<16x16xi32>
    %5 = arith.addi %3, %4 : vector<16x16xi32>
    %c16_i32 = arith.constant 16 : i32
    %6 = vector.broadcast %c16_i32 : i32 to vector<16x16xi32>
    %7 = arith.cmpi slt, %5, %6 : vector<16x16xi32>
    %c15_i32 = arith.constant 15 : i32
    %8 = tpu.dynamic_rotate %1 by %c15_i32 dim 1 : vector<16x16xf32>, i32 -> vector<16x16xf32>
    %cst = arith.constant 0.000000e+00 : f32
    %9 = vector.broadcast %cst : f32 to vector<16x16xf32>
    %10 = arith.select %7, %8, %9 : vector<16x16xi1>, vector<16x16xf32>
    %c1_i32_2 = arith.constant 1 : i32
    %11 = vector.broadcast %c1_i32_2 : i32 to vector<16x16xi32>
    %12 = arith.subi %3, %11 : vector<16x16xi32>
    %c0_i32 = arith.constant 0 : i32
    %13 = vector.broadcast %c0_i32 : i32 to vector<16x16xi32>
    %14 = arith.cmpi sge, %12, %13 : vector<16x16xi32>
    %c1_i32_3 = arith.constant 1 : i32
    %15 = tpu.dynamic_rotate %1 by %c1_i32_3 dim 1 : vector<16x16xf32>, i32 -> vector<16x16xf32>
    %cst_4 = arith.constant 0.000000e+00 : f32
    %16 = vector.broadcast %cst_4 : f32 to vector<16x16xf32>
    %17 = arith.select %14, %15, %16 : vector<16x16xi1>, vector<16x16xf32>
    %18 = arith.maximumf %17, %10 : vector<16x16xf32>
    %19 = arith.maximumf %1, %18 : vector<16x16xf32>
    %c1_i32_5 = arith.constant 1 : i32
    %20 = vector.broadcast %c1_i32_5 : i32 to vector<16x16xi32>
    %21 = arith.addi %2, %20 : vector<16x16xi32>
    %c16_i32_6 = arith.constant 16 : i32
    %22 = vector.broadcast %c16_i32_6 : i32 to vector<16x16xi32>
    %23 = arith.cmpi slt, %21, %22 : vector<16x16xi32>
    %c15_i32_7 = arith.constant 15 : i32
    %24 = tpu.dynamic_rotate %19 by %c15_i32_7 dim 0 : vector<16x16xf32>, i32 -> vector<16x16xf32>
    %cst_8 = arith.constant 0.000000e+00 : f32
    %25 = vector.broadcast %cst_8 : f32 to vector<16x16xf32>
    %26 = arith.select %23, %24, %25 : vector<16x16xi1>, vector<16x16xf32>
    %c1_i32_9 = arith.constant 1 : i32
    %27 = vector.broadcast %c1_i32_9 : i32 to vector<16x16xi32>
    %28 = arith.subi %2, %27 : vector<16x16xi32>
    %c0_i32_10 = arith.constant 0 : i32
    %29 = vector.broadcast %c0_i32_10 : i32 to vector<16x16xi32>
    %30 = arith.cmpi sge, %28, %29 : vector<16x16xi32>
    %c1_i32_11 = arith.constant 1 : i32
    %31 = tpu.dynamic_rotate %19 by %c1_i32_11 dim 0 : vector<16x16xf32>, i32 -> vector<16x16xf32>
    %cst_12 = arith.constant 0.000000e+00 : f32
    %32 = vector.broadcast %cst_12 : f32 to vector<16x16xf32>
    %33 = arith.select %30, %31, %32 : vector<16x16xi1>, vector<16x16xf32>
    %34 = arith.maximumf %33, %26 : vector<16x16xf32>
    %35 = arith.maximumf %19, %34 : vector<16x16xf32>
    %36 = arith.cmpf oge, %1, %35 : vector<16x16xf32>
    %cst_13 = arith.constant 5.000000e-02 : f32
    %37 = vector.broadcast %cst_13 : f32 to vector<16x16xf32>
    %38 = arith.cmpf ogt, %1, %37 : vector<16x16xf32>
    %39 = arith.andi %36, %38 : vector<16x16xi1>
    %c16_i32_14 = arith.constant 16 : i32
    %40 = vector.broadcast %c16_i32_14 : i32 to vector<16x16xi32>
    %41 = arith.muli %2, %40 : vector<16x16xi32>
    %42 = arith.addi %41, %3 : vector<16x16xi32>
    %c1_i32_15 = arith.constant 1 : i32
    %43 = vector.broadcast %c1_i32_15 : i32 to vector<16x16xi32>
    %44 = arith.addi %42, %43 : vector<16x16xi32>
    %cst_16 = arith.constant 0.000000e+00 : f32
    %45 = vector.broadcast %cst_16 : f32 to vector<16x16xf32>
    %46 = arith.select %39, %1, %45 : vector<16x16xi1>, vector<16x16xf32>
    %c0_17 = arith.constant 0 : index
    %c0_18 = arith.constant 0 : index
    %c0_19 = arith.constant 0 : index
    %47 = vector.load %arg2[%c0_17, %c0_18, %c0_19] : memref<1x16x16xf32, #tpu.memory_space<vmem>>, vector<1x16x16xf32>
    %48 = vector.shape_cast %47 : vector<1x16x16xf32> to vector<16x16xf32>
    %49 = vector.shape_cast %46 : vector<16x16xf32> to vector<1x16x16xf32>
    tpu.vector_store %arg2[%c0_17, %c0_18, %c0_19], %49 {strides = array<i32>} : memref<1x16x16xf32, #tpu.memory_space<vmem>>, vector<1x16x16xf32>,
    %c0_i32_20 = arith.constant 0 : i32
    %50 = vector.broadcast %c0_i32_20 : i32 to vector<16x16xi32>
    %51 = arith.select %39, %44, %50 : vector<16x16xi1>, vector<16x16xi32>
    %c0_21 = arith.constant 0 : index
    %c0_22 = arith.constant 0 : index
    %c0_23 = arith.constant 0 : index
    %52 = vector.load %arg3[%c0_21, %c0_22, %c0_23] : memref<1x16x16xi32, #tpu.memory_space<vmem>>, vector<1x16x16xi32>
    %53 = vector.shape_cast %52 : vector<1x16x16xi32> to vector<16x16xi32>
    %54 = vector.shape_cast %51 : vector<16x16xi32> to vector<1x16x16xi32>
    tpu.vector_store %arg3[%c0_21, %c0_22, %c0_23], %54 {strides = array<i32>} : memref<1x16x16xi32, #tpu.memory_space<vmem>>, vector<1x16x16xi32>,
    return
  }
  func.func @transform_0(%arg0: i32) -> (i32, i32, i32) {
    %c0_i32 = arith.constant 0 : i32
    %c0_i32_0 = arith.constant 0 : i32
    %c0_i32_1 = arith.constant 0 : i32
    return %arg0, %c0_i32, %c0_i32_0 : i32, i32, i32
  }
  func.func @transform_1(%arg0: i32) -> (i32, i32, i32) {
    %c0_i32 = arith.constant 0 : i32
    %c0_i32_0 = arith.constant 0 : i32
    %c0_i32_1 = arith.constant 0 : i32
    return %arg0, %c0_i32, %c0_i32_0 : i32, i32, i32
  }
  func.func @transform_2(%arg0: i32) -> (i32, i32, i32) {
    %c0_i32 = arith.constant 0 : i32
    %c0_i32_0 = arith.constant 0 : i32
    %c0_i32_1 = arith.constant 0 : i32
    return %arg0, %c0_i32, %c0_i32_0 : i32, i32, i32
  }
}

</mosaic_0001>

<llo_original>
// kernel: fairmot_forward.3
$region0: #{fairmot_forward.3}
  #allocation0 [shape = 'u32[]', space=smem, size = 0x4, offset = 0x4, fixed_abs, tag = 'smem constant byte address 0x4 - core index']
  #allocation1 [shape = 'u32[72,128]{1,0:T(1,128)}', space=vmem, size = 0x9000, scoped, tag = 'internal scratch']
  %s0 = inlined_call_operand.vmem [shape: f32[2,16,16], index: 0, kind: input, shape index: {}]
  %s1 = inlined_call_operand.hbm [shape: f32[2,16,16], index: 1, kind: output, shape index: {0}]
  %s2 = inlined_call_operand.hbm [shape: s32[2,16,16], index: 2, kind: output, shape index: {1}]
  %3 = xla_tuple %s1, %s2
  %s4 = sld [smem:[#allocation0]]
  $region45: #{fairmot_forward.3} parent=0
    _
  %s6 = ssub.s32 1, %s4
  %s7 = scalar_select 0, %s6, %s4
  $region1: #{fairmot_forward.3} parent=0
    #allocation2 [shape = 'u8[16384]{0}', space=vmem, size = 0x4000, scoped, tag = 'output window, operand 0']
    #allocation3 [shape = 's32[2]{0}', space=sflag, size = 0x8, scoped, tag = 'scoped memory for fairmot_forward.3']
    #allocation4 [shape = 'u8[16384]{0}', space=vmem, size = 0x4000, scoped, tag = 'output window, operand 1']
    #allocation5 [shape = 's32[2]{0}', space=sflag, size = 0x8, scoped, tag = 'scoped memory for fairmot_forward.3']
    %8 = vsyncpa [#allocation3], 0
    %s9 = scalar_lea.sflag [#allocation3], 1
    %10 = vsyncpa %s9, 0
    %11 = vsyncpa [#allocation5], 0
    %s12 = scalar_lea.sflag [#allocation5], 1
    %13 = vsyncpa %s12, 0
    loop: start=0, step=1, limit=4
    $region2: #{fairmot_forward.3} parent=1 // loop_pre_header
      _
    $region3: #{fairmot_forward.3} parent=1 // loop_header
      %s15 = sphi 0, %s19
      %p16 = scmp.ge.s32.totalorder %s15, 4
      %s25 = sphi 0, %s27
      %s28 = sphi 0, %s25
      %s29 = sphi 0, %s28
      %s45 = sphi 0, %s29
      %s51 = sphi 0, %s53
      %s54 = sphi 0, %s51
      %s55 = sphi 0, %s54
      %s71 = sphi 0, %s55
      %s77 = sphi 0, %s79
      %s80 = sphi 0, %s77
      %s81 = sphi 0, %s80
      %s97 = sphi 0, %s81
    $region4: #{fairmot_forward.3} parent=1 // loop_header_branch
      %18 = sbr.rel (%p16) target = $region8
    $region5: #{fairmot_forward.3} parent=1 // loop_body
      %s20 = ssub.s32 %s15, 1
      %s21 = ssub.s32 %s15, 2
      %s22 = sadd.s32 %s15, 1
      %s23 = ssub.s32 %s15, %s22
      %p24 = scmp.eq.s32.totalorder %s23, 0
      %s26 = sadd.s32 %s25, 1
      %s27 = scalar_select %p24, %s25, %s26
      %p30 = pneg %p24
      %p31 = scmp.eq.s32.totalorder %s15, 1
      %p32 = por %p30, %p31
      %p33 = scmp.ne.s32.totalorder %s25, %s28
      %p34 = scmp.eq.s32.totalorder %s15, 0
      %p35 = por %p33, %p34
      %p36 = scmp.ne.s32.totalorder %s25, %s28
      %p37 = scmp.eq.s32.totalorder %s20, 1
      %p38 = por %p36, %p37
      %p39 = scmp.ne.s32.totalorder %s28, %s29
      %p40 = scmp.eq.s32.totalorder %s20, 0
      %p41 = por %p39, %p40
      %p42 = scmp.ne.s32.totalorder %s28, %s29
      %p43 = scmp.eq.s32.totalorder %s21, 1
      %p44 = por %p42, %p43
      %p46 = scmp.ne.s32.totalorder %s29, %s45
      %p47 = scmp.eq.s32.totalorder %s21, 0
      %p48 = por %p46, %p47
      %s49 = ssub.s32 %s15, %s22
      %p50 = scmp.eq.s32.totalorder %s49, 0
      %s52 = sadd.s32 %s51, 1
      %s53 = scalar_select %p50, %s51, %s52
      %p56 = pneg %p50
      %p57 = scmp.eq.s32.totalorder %s15, 1
      %p58 = por %p56, %p57
      %p59 = scmp.ne.s32.totalorder %s51, %s54
      %p60 = scmp.eq.s32.totalorder %s15, 0
      %p61 = por %p59, %p60
      %p62 = scmp.ne.s32.totalorder %s51, %s54
      %p63 = scmp.eq.s32.totalorder %s20, 1
      %p64 = por %p62, %p63
      %p65 = scmp.ne.s32.totalorder %s54, %s55
      %p66 = scmp.eq.s32.totalorder %s20, 0
      %p67 = por %p65, %p66
      %p68 = scmp.ne.s32.totalorder %s54, %s55
      %p69 = scmp.eq.s32.totalorder %s21, 1
      %p70 = por %p68, %p69
      %p72 = scmp.ne.s32.totalorder %s55, %s71
      %p73 = scmp.eq.s32.totalorder %s21, 0
      %p74 = por %p72, %p73
      %s75 = ssub.s32 %s15, %s22
      %p76 = scmp.eq.s32.totalorder %s75, 0
      %s78 = sadd.s32 %s77, 1
      %s79 = scalar_select %p76, %s77, %s78
      %p82 = pneg %p76
      %p83 = scmp.eq.s32.totalorder %s15, 1
      %p84 = por %p82, %p83
      %p85 = scmp.ne.s32.totalorder %s77, %s80
      %p86 = scmp.eq.s32.totalorder %s15, 0
      %p87 = por %p85, %p86
      %p88 = scmp.ne.s32.totalorder %s77, %s80
      %p89 = scmp.eq.s32.totalorder %s20, 1
      %p90 = por %p88, %p89
      %p91 = scmp.ne.s32.totalorder %s80, %s81
      %p92 = scmp.eq.s32.totalorder %s20, 0
      %p93 = por %p91, %p92
      %p94 = scmp.ne.s32.totalorder %s80, %s81
      %p95 = scmp.eq.s32.totalorder %s21, 1
      %p96 = por %p94, %p95
      %p98 = scmp.ne.s32.totalorder %s81, %s97
      %p99 = scmp.eq.s32.totalorder %s21, 0
      %p100 = por %p98, %p99
      %p101 = scmp.le.s32.totalorder 1, %s15
      %p102 = scmp.lt.s32.totalorder %s15, 3
      %p103 = pnand %p101, %p102
      %p104 = pneg %p103
      // Predicated region
      $region9: #{fairmot_forward.3} parent=5 // pred_check
        _
      $region10: #{fairmot_forward.3} parent=5 // pred_check_branch
        %106 = sbr.rel (%p103) target = $region12
      $region11: #{fairmot_forward.3} parent=5 // pred_region
        %s107 = ssub.s32 %s15, 1
      $region12: #{fairmot_forward.3} parent=5 // pred_fallthru
        _
      %p108 = scmp.lt.s32.totalorder %s15, 2
      // Predicated region
      $region13: #{fairmot_forward.3} parent=5 // pred_check
        %p109 = pneg %p108
      $region14: #{fairmot_forward.3} parent=5 // pred_check_branch
        %111 = sbr.rel (%p109) target = $region16
      $region15: #{fairmot_forward.3} parent=5 // pred_region
        // Predicated region
        $region17: #{fairmot_forward.3} parent=15 // pred_check
          %p112 = pneg %p35
        $region18: #{fairmot_forward.3} parent=15 // pred_check_branch
          %114 = sbr.rel (%p112) target = $region20
        $region19: #{fairmot_forward.3} parent=15 // pred_region
          %p115 = scmp.lt.s32.totalorder %s15, 1
          %s116 = scalar_select %p115, %s15, 1
          %s117 = smul.addr %s116, 2
          %s118 = smul.addr %s117, 8
          %s119 = scalar_lea.vmem %s0, %s118
        $region20: #{fairmot_forward.3} parent=15 // pred_fallthru
          _
      $region16: #{fairmot_forward.3} parent=5 // pred_fallthru
        _
      %p120 = scmp.le.s32.totalorder 1, %s15
      %p121 = scmp.lt.s32.totalorder %s15, 3
      %p122 = pnand %p120, %p121
      %p123 = pneg %p122
      // Predicated region
      $region21: #{fairmot_forward.3} parent=5 // pred_check
        _
      $region22: #{fairmot_forward.3} parent=5 // pred_check_branch
        %125 = sbr.rel (%p122) target = $region24
      $region23: #{fairmot_forward.3} parent=5 // pred_region
        %s126 = ssub.s32 %s15, 1
        %p127 = scmp.lt.s32.totalorder %s20, 1
        %s128 = scalar_select %p127, %s20, 1
        %s129 = smul.addr %s128, 2
        %s130 = smul.addr %s129, 8
        %s131 = scalar_lea.vmem %s0, %s130
        %p132 = pneg %p41
        %p133 = pneg %p38
        %p134 = pneg %p67
        %p135 = pneg %p64
        %s136 = sand.u32 %s54, 1
        %s137 = scalar_lea.sflag [#allocation3], %s136
        %s138 = sand.u32 %s54, 1
        %s139 = smul.addr %s138, 16
        %s140 = scalar_lea.vmem [#allocation2], %s139
        %p141 = pneg %p93
        %p142 = pneg %p90
        %s143 = sand.u32 %s80, 1
        %s144 = scalar_lea.sflag [#allocation5], %s143
        %s145 = sand.u32 %s80, 1
        %s146 = smul.addr %s145, 16
        %s147 = scalar_lea.vmem [#allocation4], %s146
        %p148 = scmp.lt.s32.totalorder %s20, 1
        %s149 = scalar_select %p148, %s20, 1
        %s150 = smul.addr %s149, 2
        %s151 = smul.addr %s150, 8
        %s152 = scalar_lea.vmem %s0, %s151
        %v153 = vld [vmem:[%s152] sm:$0xff]
        %v154 = vld [vmem:[%s152 + $0x8] sm:$0xff]
        %v155 = vlaneseq
        %v156 = vshrl.u32 %v155, 7
        %v157 = vadd.s32 %v156, 8
        %v158 = vlaneseq
        %v159 = vand.u32 %v158, 127
        %v160 = vadd.s32 %v159, 1
        %vm161 = vcmp.lt.s32.totalorder %v160, 16
        %vm162 = vcmask 1047680
        %163 = vrot.lane.b32.xlu0 %v153, 16
        %v164 = vpop.permute.xlu0 %163
        %v165 = vsel %vm162, %v164, %v153
        %166 = vrot.lane.b32.xlu0 %v154, 16
        %v167 = vpop.permute.xlu0 %166
        %v168 = vsel %vm162, %v167, %v154
        %169 = vrot.lane.b32.xlu0 %v165, 16
        %v170 = vpop.permute.xlu0 %169
        %171 = vrot.lane.b32.xlu0 %v168, 16
        %v172 = vpop.permute.xlu0 %171
        %v173 = vsel %vm162, %v170, %v153
        %v174 = vsel %vm162, %v172, %v154
        %177 = vrot.lane.b32.xlu0 %v173, 127
        %v178 = vpop.permute.xlu0 %177
        %179 = vrot.lane.b32.xlu0 %v174, 127
        %v180 = vpop.permute.xlu0 %179
        %v183 = vsel %vm161, %v178, 0.0
        %v184 = vsel %vm161, %v180, 0.0
        %v185 = vsub.s32 %v159, 1
        %vm186 = vcmp.ge.s32.totalorder %v185, 0
        %187 = vrot.lane.b32.xlu0 %v173, 113
        %v188 = vpop.permute.xlu0 %187
        %189 = vrot.lane.b32.xlu0 %v174, 113
        %v190 = vpop.permute.xlu0 %189
        %v193 = vsel %vm186, %v188, 0.0
        %v194 = vsel %vm186, %v190, 0.0
        %v195 = vmax.f32 %v193, %v183
        %v196 = vmax.f32 %v194, %v184
        %v197 = vmax.f32 %v153, %v195
        %v198 = vmax.f32 %v154, %v196
        %v199 = vadd.s32 %v156, 1
        %v200 = vadd.s32 %v157, 1
        %vm201 = vcmp.lt.s32.totalorder %v199, 16
        %vm202 = vcmp.lt.s32.totalorder %v200, 16
        %v203 = vrot.slane %v197, 1
        %v204 = vrot.slane %v198, 1
        %vm205 = vcmp.lt.s32.totalorder %v156, 7
        %v206 = vsel %vm205, %v203, %v204
        %v207 = vsel %vm205, %v204, %v203
        %v208 = vsel %vm201, %v206, 0.0
        %v209 = vsel %vm202, %v207, 0.0
        %v210 = vsub.s32 %v156, 1
        %v211 = vsub.s32 %v157, 1
        %vm212 = vcmp.ge.s32.totalorder %v210, 0
        %vm213 = vcmp.ge.s32.totalorder %v211, 0
        %v214 = vrot.slane %v197, 7
        %v215 = vrot.slane %v198, 7
        %vm216 = vcmp.lt.s32.totalorder %v156, 1
        %v217 = vsel %vm216, %v214, %v215
        %v218 = vsel %vm216, %v215, %v214
        %v219 = vsel %vm212, %v218, 0.0
        %v220 = vsel %vm213, %v217, 0.0
        %v221 = vmax.f32 %v219, %v208
        %v222 = vmax.f32 %v220, %v209
        %v223 = vmax.f32 %v197, %v221
        %v224 = vmax.f32 %v198, %v222
        %vm225 = vcmp.ge.f32.partialorder %v153, %v223
        %vm226 = vcmp.ge.f32.partialorder %v154, %v224
        %vm227 = vcmp.gt.f32.partialorder %v153, 0.05
        %vm228 = vcmp.gt.f32.partialorder %v154, 0.05
        %vm229 = vmand %vm225, %vm227
        %vm230 = vmand %vm226, %vm228
        %v231 = vmul.u32 %v156, 16
        %v232 = vmul.u32 %v157, 16
        %v233 = vadd.s32 %v231, %v159
        %v234 = vadd.s32 %v232, %v159
        %v235 = vadd.s32 %v233, 1
        %v236 = vadd.s32 %v234, 1
        %v237 = vsel %vm229, %v153, 0.0
        %v238 = vsel %vm230, %v154, 0.0
        %vm239 = vcmask 130048
        %240 = vst.msk [vmem:[%s140] sm:$0xff] %vm239, %v237
        %241 = vst.msk [vmem:[%s140 + $0x8] sm:$0xff] %vm239, %v238
        %v242 = vsel %vm229, %v235, 0
        %v243 = vsel %vm230, %v236, 0
        %244 = vst.msk [vmem:[%s147] sm:$0xff] %vm239, %v242
        %245 = vst.msk [vmem:[%s147 + $0x8] sm:$0xff] %vm239, %v243
        %s246 = sand.u32 %s54, 1
        %s247 = scalar_lea.sflag [#allocation3], %s246
        %s248 = sand.u32 %s54, 1
        %s249 = smul.addr %s248, 16
        %s250 = scalar_lea.vmem [#allocation2], %s249
        %s251 = sand.u32 %s80, 1
        %s252 = scalar_lea.sflag [#allocation5], %s251
        %s253 = sand.u32 %s80, 1
        %s254 = smul.addr %s253, 16
        %s255 = scalar_lea.vmem [#allocation4], %s254
        // Predicated region
        $region25: #{fairmot_forward.3} parent=23 // pred_check
          %p256 = pneg %p64
        $region26: #{fairmot_forward.3} parent=23 // pred_check_branch
          %258 = sbr.rel (%p256) target = $region28
        $region27: #{fairmot_forward.3} parent=23 // pred_region
          %260 = vsyncadd %s247, 0
          %s261 = smul.addr %s20, 2
          %s262 = smul.addr %s261, 8
          %s263 = scalar_lea.hbm %s1, %s262
          %s264 = sshll.u32 %s250, 4
          %s265 = int_to_ptr.vmem [resolvable:$true] %s264
          %s266 = sshll.u32 %s263, 4
          %s267 = int_to_ptr.hbm [resolvable:$true] %s266
          %272 = dma.vmem_to_hbm [thread:$0]  %s265, 256, %s267, %s247, 128, 128, 8
        $region28: #{fairmot_forward.3} parent=23 // pred_fallthru
          _
        // Predicated region
        $region29: #{fairmot_forward.3} parent=23 // pred_check
          %p273 = pneg %p90
        $region30: #{fairmot_forward.3} parent=23 // pred_check_branch
          %275 = sbr.rel (%p273) target = $region32
        $region31: #{fairmot_forward.3} parent=23 // pred_region
          %277 = vsyncadd %s252, 0
          %s278 = smul.addr %s20, 2
          %s279 = smul.addr %s278, 8
          %s280 = scalar_lea.hbm %s2, %s279
          %s281 = sshll.u32 %s255, 4
          %s282 = int_to_ptr.vmem [resolvable:$true] %s281
          %s283 = sshll.u32 %s280, 4
          %s284 = int_to_ptr.hbm [resolvable:$true] %s283
          %289 = dma.vmem_to_hbm [thread:$0]  %s282, 256, %s284, %s252, 128, 128, 8
        $region32: #{fairmot_forward.3} parent=23 // pred_fallthru
          _
      $region24: #{fairmot_forward.3} parent=5 // pred_fallthru
        _
      %p290 = scmp.le.s32.totalorder 2, %s15
      // Predicated region
      $region33: #{fairmot_forward.3} parent=5 // pred_check
        %p291 = pneg %p290
      $region34: #{fairmot_forward.3} parent=5 // pred_check_branch
        %293 = sbr.rel (%p291) target = $region36
      $region35: #{fairmot_forward.3} parent=5 // pred_region
        %s294 = ssub.s32 %s15, 2
        // Predicated region
        $region37: #{fairmot_forward.3} parent=35 // pred_check
          %p295 = pneg %p70
        $region38: #{fairmot_forward.3} parent=35 // pred_check_branch
          %297 = sbr.rel (%p295) target = $region40
        $region39: #{fairmot_forward.3} parent=35 // pred_region
          %s298 = sand.u32 %s55, 1
          %s299 = scalar_lea.sflag [#allocation3], %s298
          %s300 = sand.u32 %s55, 1
          %s301 = smul.addr %s300, 16
          %s302 = scalar_lea.vmem [#allocation2], %s301
          %304 = dma.done %s299, 256
        $region40: #{fairmot_forward.3} parent=35 // pred_fallthru
          _
        // Predicated region
        $region41: #{fairmot_forward.3} parent=35 // pred_check
          %p305 = pneg %p96
        $region42: #{fairmot_forward.3} parent=35 // pred_check_branch
          %307 = sbr.rel (%p305) target = $region44
        $region43: #{fairmot_forward.3} parent=35 // pred_region
          %s308 = sand.u32 %s81, 1
          %s309 = scalar_lea.sflag [#allocation5], %s308
          %s310 = sand.u32 %s81, 1
          %s311 = smul.addr %s310, 16
          %s312 = scalar_lea.vmem [#allocation4], %s311
          %314 = dma.done %s309, 256
        $region44: #{fairmot_forward.3} parent=35 // pred_fallthru
          _
      $region36: #{fairmot_forward.3} parent=5 // pred_fallthru
        _
    $region6: #{fairmot_forward.3} parent=1 // loop_footer
      %s19 = sadd.s32 1, %s15
    $region7: #{fairmot_forward.3} parent=1 // loop_footer_branch
      %14 = sbr.rel target = $region3
    $region8: #{fairmot_forward.3} parent=1 // loop_exit
      _
    %315 = vsyncpa [#allocation3], 1
    %s316 = scalar_lea.sflag [#allocation3], 1
    %317 = vsyncpa %s316, 1
    %318 = vsyncpa [#allocation5], 1
    %s319 = scalar_lea.sflag [#allocation5], 1
    %320 = vsyncpa %s319, 1

// kernel: fairmot_forward.2
$region0: #{fairmot_forward.2}
  #allocation0 [shape = 'u32[]', space=smem, size = 0x4, offset = 0x4, fixed_abs, tag = 'smem constant byte address 0x4 - core index']
  #allocation1 [shape = 'u32[72,128]{1,0:T(1,128)}', space=vmem, size = 0x9000, scoped, tag = 'internal scratch']
  %s0 = inlined_call_operand.vmem [shape: bf16[512,27], index: 0, kind: input, shape index: {}]
  %s1 = inlined_call_operand.vmem [shape: bf16[27,32], index: 1, kind: input, shape index: {}]
  %s2 = inlined_call_operand.vmem [shape: f32[1,32], index: 2, kind: input, shape index: {}]
  %s3 = inlined_call_operand.vmem [shape: bf16[32,128], index: 3, kind: input, shape index: {}]
  %s4 = inlined_call_operand.vmem [shape: f32[1,128], index: 4, kind: input, shape index: {}]
  %s5 = inlined_call_operand.vmem [shape: f32[512,128], index: 5, kind: output, shape index: {0}]
  %s6 = inlined_call_operand.vmem [shape: f32[512,1], index: 6, kind: output, shape index: {1}]
  %7 = xla_tuple %s5, %s6
  %s8 = sld [smem:[#allocation0]]
  $region38: #{fairmot_forward.2} parent=0
    _
  %s10 = ssub.s32 1, %s8
  %s11 = scalar_select 0, %s10, %s8
  // Predicated region
  $region2: #{fairmot_forward.2} parent=0 // pred_check
    _
  $region3: #{fairmot_forward.2} parent=0 // pred_check_branch
    %13 = sbr.rel (0) target = $region5
  $region4: #{fairmot_forward.2} parent=0 // pred_region
    _
  $region5: #{fairmot_forward.2} parent=0 // pred_fallthru
    _
  // Predicated region
  $region6: #{fairmot_forward.2} parent=0 // pred_check
    _
  $region7: #{fairmot_forward.2} parent=0 // pred_check_branch
    %15 = sbr.rel (0) target = $region9
  $region8: #{fairmot_forward.2} parent=0 // pred_region
    _
  $region9: #{fairmot_forward.2} parent=0 // pred_fallthru
    _
  // Predicated region
  $region10: #{fairmot_forward.2} parent=0 // pred_check
    _
  $region11: #{fairmot_forward.2} parent=0 // pred_check_branch
    %17 = sbr.rel (0) target = $region13
  $region12: #{fairmot_forward.2} parent=0 // pred_region
    _
  $region13: #{fairmot_forward.2} parent=0 // pred_fallthru
    _
  // Predicated region
  $region14: #{fairmot_forward.2} parent=0 // pred_check
    _
  $region15: #{fairmot_forward.2} parent=0 // pred_check_branch
    %19 = sbr.rel (0) target = $region17
  $region16: #{fairmot_forward.2} parent=0 // pred_region
    _
  $region17: #{fairmot_forward.2} parent=0 // pred_fallthru
    _
  // Predicated region
  $region18: #{fairmot_forward.2} parent=0 // pred_check
    _
  $region19: #{fairmot_forward.2} parent=0 // pred_check_branch
    %21 = sbr.rel (0) target = $region21
  $region20: #{fairmot_forward.2} parent=0 // pred_region
    _
  $region21: #{fairmot_forward.2} parent=0 // pred_fallthru
    _
  %v23 = vld [vmem:[%s0] sm:$0xf]
  %v24 = vld [vmem:[%s0 + $0x4] sm:$0xf]
  %v25 = vld [vmem:[%s0 + $0x8] sm:$0xf]
  %v26 = vld [vmem:[%s0 + $0xc] sm:$0xf]
  %v27 = vld [vmem:[%s0 + $0x10] sm:$0xf]
  %v28 = vld [vmem:[%s0 + $0x14] sm:$0xf]
  %v29 = vld [vmem:[%s0 + $0x18] sm:$0xf]
  %v30 = vld [vmem:[%s0 + $0x1c] sm:$0xf]
  %v31 = vld [vmem:[%s0 + $0x20] sm:$0xf]
  %v32 = vld [vmem:[%s0 + $0x24] sm:$0xf]
  %v33 = vld [vmem:[%s0 + $0x28] sm:$0xf]
  %v34 = vld [vmem:[%s0 + $0x2c] sm:$0xf]
  %v35 = vld [vmem:[%s0 + $0x30] sm:$0xf]
  %v36 = vld [vmem:[%s0 + $0x34] sm:$0xf]
  %v37 = vld [vmem:[%s0 + $0x38] sm:$0xf]
  %v38 = vld [vmem:[%s0 + $0x3c] sm:$0xf]
  %v39 = vld [vmem:[%s0 + $0x40] sm:$0xf]
  %v40 = vld [vmem:[%s0 + $0x44] sm:$0xf]
  %v41 = vld [vmem:[%s0 + $0x48] sm:$0xf]
  %v42 = vld [vmem:[%s0 + $0x4c] sm:$0xf]
  %v43 = vld [vmem:[%s0 + $0x50] sm:$0xf]
  %v44 = vld [vmem:[%s0 + $0x54] sm:$0xf]
  %v45 = vld [vmem:[%s0 + $0x58] sm:$0xf]
  %v46 = vld [vmem:[%s0 + $0x5c] sm:$0xf]
  %v47 = vld [vmem:[%s0 + $0x60] sm:$0xf]
  %v48 = vld [vmem:[%s0 + $0x64] sm:$0xf]
  %v49 = vld [vmem:[%s0 + $0x68] sm:$0xf]
  %v50 = vld [vmem:[%s0 + $0x6c] sm:$0xf]
  %v51 = vld [vmem:[%s0 + $0x70] sm:$0xf]
  %v52 = vld [vmem:[%s0 + $0x74] sm:$0xf]
  %v53 = vld [vmem:[%s0 + $0x78] sm:$0xf]
  %v54 = vld [vmem:[%s0 + $0x7c] sm:$0xf]
  %v55 = vld [vmem:[%s0 + $0x80] sm:$0xf]
  %v56 = vld [vmem:[%s0 + $0x84] sm:$0xf]
  %v57 = vld [vmem:[%s0 + $0x88] sm:$0xf]
  %v58 = vld [vmem:[%s0 + $0x8c] sm:$0xf]
  %v59 = vld [vmem:[%s0 + $0x90] sm:$0xf]
  %v60 = vld [vmem:[%s0 + $0x94] sm:$0xf]
  %v61 = vld [vmem:[%s0 + $0x98] sm:$0xf]
  %v62 = vld [vmem:[%s0 + $0x9c] sm:$0xf]
  %v63 = vld [vmem:[%s0 + $0xa0] sm:$0xf]
  %v64 = vld [vmem:[%s0 + $0xa4] sm:$0xf]
  %v65 = vld [vmem:[%s0 + $0xa8] sm:$0xf]
  %v66 = vld [vmem:[%s0 + $0xac] sm:$0xf]
  %v67 = vld [vmem:[%s0 + $0xb0] sm:$0xf]
  %v68 = vld [vmem:[%s0 + $0xb4] sm:$0xf]
  %v69 = vld [vmem:[%s0 + $0xb8] sm:$0xf]
  %v70 = vld [vmem:[%s0 + $0xbc] sm:$0xf]
  %v71 = vld [vmem:[%s0 + $0xc0] sm:$0xf]
  %v72 = vld [vmem:[%s0 + $0xc4] sm:$0xf]
  %v73 = vld [vmem:[%s0 + $0xc8] sm:$0xf]
  %v74 = vld [vmem:[%s0 + $0xcc] sm:$0xf]
  %v75 = vld [vmem:[%s0 + $0xd0] sm:$0xf]
  %v76 = vld [vmem:[%s0 + $0xd4] sm:$0xf]
  %v77 = vld [vmem:[%s0 + $0xd8] sm:$0xf]
  %v78 = vld [vmem:[%s0 + $0xdc] sm:$0xf]
  %v79 = vld [vmem:[%s0 + $0xe0] sm:$0xf]
  %v80 = vld [vmem:[%s0 + $0xe4] sm:$0xf]
  %v81 = vld [vmem:[%s0 + $0xe8] sm:$0xf]
  %v82 = vld [vmem:[%s0 + $0xec] sm:$0xf]
  %v83 = vld [vmem:[%s0 + $0xf0] sm:$0xf]
  %v84 = vld [vmem:[%s0 + $0xf4] sm:$0xf]
  %v85 = vld [vmem:[%s0 + $0xf8] sm:$0xf]
  %v86 = vld [vmem:[%s0 + $0xfc] sm:$0xf]
  %v87 = vld [vmem:[%s1] sm:$0xf]
  %v88 = vld [vmem:[%s1 + $0x4] sm:$0xf]
  %v89 = vld [vmem:[%s1 + $0x8] sm:$0xf]
  %v90 = vld [vmem:[%s1 + $0xc] sm:$0x3]
  %v91 = vld [vmem:[%s2] sm:$0x1]
  %v93 = vperm.slane %v91, 0
  %v159 = vunpack.c.l.b16 %v23
  %v160 = vunpack.c.l.b16 %v24
  %v161 = vunpack.c.l.b16 %v25
  %v162 = vunpack.c.l.b16 %v26
  %v163 = vunpack.c.l.b16 %v27
  %v164 = vunpack.c.l.b16 %v28
  %v165 = vunpack.c.l.b16 %v29
  %v166 = vunpack.c.l.b16 %v30
  %v167 = vunpack.c.l.b16 %v31
  %v168 = vunpack.c.l.b16 %v32
  %v169 = vunpack.c.l.b16 %v33
  %v170 = vunpack.c.l.b16 %v34
  %v171 = vunpack.c.l.b16 %v35
  %v172 = vunpack.c.l.b16 %v36
  %v173 = vunpack.c.l.b16 %v37
  %v174 = vunpack.c.l.b16 %v38
  %v175 = vunpack.c.l.b16 %v39
  %v176 = vunpack.c.l.b16 %v40
  %v177 = vunpack.c.l.b16 %v41
  %v178 = vunpack.c.l.b16 %v42
  %v179 = vunpack.c.l.b16 %v43
  %v180 = vunpack.c.l.b16 %v44
  %v181 = vunpack.c.l.b16 %v45
  %v182 = vunpack.c.l.b16 %v46
  %v183 = vunpack.c.l.b16 %v47
  %v184 = vunpack.c.l.b16 %v48
  %v185 = vunpack.c.l.b16 %v49
  %v186 = vunpack.c.l.b16 %v50
  %v187 = vunpack.c.l.b16 %v51
  %v188 = vunpack.c.l.b16 %v52
  %v189 = vunpack.c.l.b16 %v53
  %v190 = vunpack.c.l.b16 %v54
  %v191 = vunpack.c.l.b16 %v55
  %v192 = vunpack.c.l.b16 %v56
  %v193 = vunpack.c.l.b16 %v57
  %v194 = vunpack.c.l.b16 %v58
  %v195 = vunpack.c.l.b16 %v59
  %v196 = vunpack.c.l.b16 %v60
  %v197 = vunpack.c.l.b16 %v61
  %v198 = vunpack.c.l.b16 %v62
  %v199 = vunpack.c.l.b16 %v63
  %v200 = vunpack.c.l.b16 %v64
  %v201 = vunpack.c.l.b16 %v65
  %v202 = vunpack.c.l.b16 %v66
  %v203 = vunpack.c.l.b16 %v67
  %v204 = vunpack.c.l.b16 %v68
  %v205 = vunpack.c.l.b16 %v69
  %v206 = vunpack.c.l.b16 %v70
  %v207 = vunpack.c.l.b16 %v71
  %v208 = vunpack.c.l.b16 %v72
  %v209 = vunpack.c.l.b16 %v73
  %v210 = vunpack.c.l.b16 %v74
  %v211 = vunpack.c.l.b16 %v75
  %v212 = vunpack.c.l.b16 %v76
  %v213 = vunpack.c.l.b16 %v77
  %v214 = vunpack.c.l.b16 %v78
  %v215 = vunpack.c.l.b16 %v79
  %v216 = vunpack.c.l.b16 %v80
  %v217 = vunpack.c.l.b16 %v81
  %v218 = vunpack.c.l.b16 %v82
  %v219 = vunpack.c.l.b16 %v83
  %v220 = vunpack.c.l.b16 %v84
  %v221 = vunpack.c.l.b16 %v85
  %v222 = vunpack.c.l.b16 %v86
  %v223 = vpack.c.b16 %v160, %v159
  %v224 = vpack.c.b16 %v162, %v161
  %v225 = vpack.c.b16 %v164, %v163
  %v226 = vpack.c.b16 %v166, %v165
  %v227 = vpack.c.b16 %v168, %v167
  %v228 = vpack.c.b16 %v170, %v169
  %v229 = vpack.c.b16 %v172, %v171
  %v230 = vpack.c.b16 %v174, %v173
  %v231 = vpack.c.b16 %v176, %v175
  %v232 = vpack.c.b16 %v178, %v177
  %v233 = vpack.c.b16 %v180, %v179
  %v234 = vpack.c.b16 %v182, %v181
  %v235 = vpack.c.b16 %v184, %v183
  %v236 = vpack.c.b16 %v186, %v185
  %v237 = vpack.c.b16 %v188, %v187
  %v238 = vpack.c.b16 %v190, %v189
  %v239 = vpack.c.b16 %v192, %v191
  %v240 = vpack.c.b16 %v194, %v193
  %v241 = vpack.c.b16 %v196, %v195
  %v242 = vpack.c.b16 %v198, %v197
  %v243 = vpack.c.b16 %v200, %v199
  %v244 = vpack.c.b16 %v202, %v201
  %v245 = vpack.c.b16 %v204, %v203
  %v246 = vpack.c.b16 %v206, %v205
  %v247 = vpack.c.b16 %v208, %v207
  %v248 = vpack.c.b16 %v210, %v209
  %v249 = vpack.c.b16 %v212, %v211
  %v250 = vpack.c.b16 %v214, %v213
  %v251 = vpack.c.b16 %v216, %v215
  %v252 = vpack.c.b16 %v218, %v217
  %v253 = vpack.c.b16 %v220, %v219
  %v254 = vpack.c.b16 %v222, %v221
  %v259 = vunpack.c.l.b16 %v87
  %v260 = vunpack.c.l.b16 %v88
  %v261 = vunpack.c.l.b16 %v89
  %v262 = vunpack.c.l.b16 %v90
  %v263 = vpack.c.b16 %v260, %v259
  %v264 = vpack.c.b16 %v262, %v261
  %vm266 = vcmask 220160
  %v268 = vsel %vm266, %v223, 0
  %v271 = vsel %vm266, %v224, 0
  %v274 = vsel %vm266, %v225, 0
  %v277 = vsel %vm266, %v226, 0
  %v280 = vsel %vm266, %v227, 0
  %v283 = vsel %vm266, %v228, 0
  %v286 = vsel %vm266, %v229, 0
  %v289 = vsel %vm266, %v230, 0
  %v292 = vsel %vm266, %v231, 0
  %v295 = vsel %vm266, %v232, 0
  %v298 = vsel %vm266, %v233, 0
  %v301 = vsel %vm266, %v234, 0
  %v304 = vsel %vm266, %v235, 0
  %v307 = vsel %vm266, %v236, 0
  %v310 = vsel %vm266, %v237, 0
  %v313 = vsel %vm266, %v238, 0
  %v316 = vsel %vm266, %v239, 0
  %v319 = vsel %vm266, %v240, 0
  %v322 = vsel %vm266, %v241, 0
  %v325 = vsel %vm266, %v242, 0
  %v328 = vsel %vm266, %v243, 0
  %v331 = vsel %vm266, %v244, 0
  %v334 = vsel %vm266, %v245, 0
  %v337 = vsel %vm266, %v246, 0
  %v340 = vsel %vm266, %v247, 0
  %v343 = vsel %vm266, %v248, 0
  %v346 = vsel %vm266, %v249, 0
  %v349 = vsel %vm266, %v250, 0
  %v352 = vsel %vm266, %v251, 0
  %v355 = vsel %vm266, %v252, 0
  %v358 = vsel %vm266, %v253, 0
  %v361 = vsel %vm266, %v254, 0
  %vm363 = vcmask 1044480
  %vm364 = vcmask 1045504
  %v365 = vsel %vm363, 4294967295, 65535
  %v366 = vsel %vm364, %v365, 0
  %v368 = vand.u32 %v264, %v366
  %370 = vmatpush.bf16.msra.mxu0 0
  %371 = vmatpush.bf16.msra.mxu0 0
  %372 = vmatpush.bf16.msra.mxu0 0
  %373 = vmatpush.bf16.msra.mxu0 0
  %374 = vmatpush.bf16.msra.mxu0 0
  %375 = vmatpush.bf16.msra.mxu0 0
  %376 = vmatpush.bf16.msra.mxu0 %v368
  %377 = vmatpush.bf16.msra.mxu0 %v263
  %378 = vmatmul.bf16.gmra.mxu0 %v268
  %v379 = vpop.f32.mrf.mxu0
  %v380 = vadd.f32 %v93, %v379
  %v381 = vpop.f32.mrf.mxu0
  %v382 = vadd.f32 %v93, %v381
  %383 = vmatmul.bf16.gmra.mxu0 %v271
  %v384 = vpop.f32.mrf.mxu0
  %v385 = vadd.f32 %v93, %v384
  %v386 = vpop.f32.mrf.mxu0
  %v387 = vadd.f32 %v93, %v386
  %388 = vmatmul.bf16.gmra.mxu0 %v274
  %v389 = vpop.f32.mrf.mxu0
  %v390 = vadd.f32 %v93, %v389
  %v391 = vpop.f32.mrf.mxu0
  %v392 = vadd.f32 %v93, %v391
  %393 = vmatmul.bf16.gmra.mxu0 %v277
  %v394 = vpop.f32.mrf.mxu0
  %v395 = vadd.f32 %v93, %v394
  %v396 = vpop.f32.mrf.mxu0
  %v397 = vadd.f32 %v93, %v396
  %398 = vmatmul.bf16.gmra.mxu0 %v280
  %v399 = vpop.f32.mrf.mxu0
  %v400 = vadd.f32 %v93, %v399
  %v401 = vpop.f32.mrf.mxu0
  %v402 = vadd.f32 %v93, %v401
  %403 = vmatmul.bf16.gmra.mxu0 %v283
  %v404 = vpop.f32.mrf.mxu0
  %v405 = vadd.f32 %v93, %v404
  %v406 = vpop.f32.mrf.mxu0
  %v407 = vadd.f32 %v93, %v406
  %408 = vmatmul.bf16.gmra.mxu0 %v286
  %v409 = vpop.f32.mrf.mxu0
  %v410 = vadd.f32 %v93, %v409
  %v411 = vpop.f32.mrf.mxu0
  %v412 = vadd.f32 %v93, %v411
  %413 = vmatmul.bf16.gmra.mxu0 %v289
  %v414 = vpop.f32.mrf.mxu0
  %v415 = vadd.f32 %v93, %v414
  %v416 = vpop.f32.mrf.mxu0
  %v417 = vadd.f32 %v93, %v416
  %418 = vmatmul.bf16.gmra.mxu0 %v292
  %v419 = vpop.f32.mrf.mxu0
  %v420 = vadd.f32 %v93, %v419
  %v421 = vpop.f32.mrf.mxu0
  %v422 = vadd.f32 %v93, %v421
  %423 = vmatmul.bf16.gmra.mxu0 %v295
  %v424 = vpop.f32.mrf.mxu0
  %v425 = vadd.f32 %v93, %v424
  %v426 = vpop.f32.mrf.mxu0
  %v427 = vadd.f32 %v93, %v426
  %428 = vmatmul.bf16.gmra.mxu0 %v298
  %v429 = vpop.f32.mrf.mxu0
  %v430 = vadd.f32 %v93, %v429
  %v431 = vpop.f32.mrf.mxu0
  %v432 = vadd.f32 %v93, %v431
  %433 = vmatmul.bf16.gmra.mxu0 %v301
  %v434 = vpop.f32.mrf.mxu0
  %v435 = vadd.f32 %v93, %v434
  %v436 = vpop.f32.mrf.mxu0
  %v437 = vadd.f32 %v93, %v436
  %438 = vmatmul.bf16.gmra.mxu0 %v304
  %v439 = vpop.f32.mrf.mxu0
  %v440 = vadd.f32 %v93, %v439
  %v441 = vpop.f32.mrf.mxu0
  %v442 = vadd.f32 %v93, %v441
  %443 = vmatmul.bf16.gmra.mxu0 %v307
  %v444 = vpop.f32.mrf.mxu0
  %v445 = vadd.f32 %v93, %v444
  %v446 = vpop.f32.mrf.mxu0
  %v447 = vadd.f32 %v93, %v446
  %448 = vmatmul.bf16.gmra.mxu0 %v310
  %v449 = vpop.f32.mrf.mxu0
  %v450 = vadd.f32 %v93, %v449
  %v451 = vpop.f32.mrf.mxu0
  %v452 = vadd.f32 %v93, %v451
  %453 = vmatmul.bf16.gmra.mxu0 %v313
  %v454 = vpop.f32.mrf.mxu0
  %v455 = vadd.f32 %v93, %v454
  %v456 = vpop.f32.mrf.mxu0
  %v457 = vadd.f32 %v93, %v456
  %458 = vmatmul.bf16.gmra.mxu0 %v316
  %v459 = vpop.f32.mrf.mxu0
  %v460 = vadd.f32 %v93, %v459
  %v461 = vpop.f32.mrf.mxu0
  %v462 = vadd.f32 %v93, %v461
  %463 = vmatmul.bf16.gmra.mxu0 %v319
  %v464 = vpop.f32.mrf.mxu0
  %v465 = vadd.f32 %v93, %v464
  %v466 = vpop.f32.mrf.mxu0
  %v467 = vadd.f32 %v93, %v466
  %468 = vmatmul.bf16.gmra.mxu0 %v322
  %v469 = vpop.f32.mrf.mxu0
  %v470 = vadd.f32 %v93, %v469
  %v471 = vpop.f32.mrf.mxu0
  %v472 = vadd.f32 %v93, %v471
  %473 = vmatmul.bf16.gmra.mxu0 %v325
  %v474 = vpop.f32.mrf.mxu0
  %v475 = vadd.f32 %v93, %v474
  %v476 = vpop.f32.mrf.mxu0
  %v477 = vadd.f32 %v93, %v476
  %478 = vmatmul.bf16.gmra.mxu0 %v328
  %v479 = vpop.f32.mrf.mxu0
  %v480 = vadd.f32 %v93, %v479
  %v481 = vpop.f32.mrf.mxu0
  %v482 = vadd.f32 %v93, %v481
  %483 = vmatmul.bf16.gmra.mxu0 %v331
  %v484 = vpop.f32.mrf.mxu0
  %v485 = vadd.f32 %v93, %v484
  %v486 = vpop.f32.mrf.mxu0
  %v487 = vadd.f32 %v93, %v486
  %488 = vmatmul.bf16.gmra.mxu0 %v334
  %v489 = vpop.f32.mrf.mxu0
  %v490 = vadd.f32 %v93, %v489
  %v491 = vpop.f32.mrf.mxu0
  %v492 = vadd.f32 %v93, %v491
  %493 = vmatmul.bf16.gmra.mxu0 %v337
  %v494 = vpop.f32.mrf.mxu0
  %v495 = vadd.f32 %v93, %v494
  %v496 = vpop.f32.mrf.mxu0
  %v497 = vadd.f32 %v93, %v496
  %498 = vmatmul.bf16.gmra.mxu0 %v340
  %v499 = vpop.f32.mrf.mxu0
  %v500 = vadd.f32 %v93, %v499
  %v501 = vpop.f32.mrf.mxu0
  %v502 = vadd.f32 %v93, %v501
  %503 = vmatmul.bf16.gmra.mxu0 %v343
  %v504 = vpop.f32.mrf.mxu0
  %v505 = vadd.f32 %v93, %v504
  %v506 = vpop.f32.mrf.mxu0
  %v507 = vadd.f32 %v93, %v506
  %508 = vmatmul.bf16.gmra.mxu0 %v346
  %v509 = vpop.f32.mrf.mxu0
  %v510 = vadd.f32 %v93, %v509
  %v511 = vpop.f32.mrf.mxu0
  %v512 = vadd.f32 %v93, %v511
  %513 = vmatmul.bf16.gmra.mxu0 %v349
  %v514 = vpop.f32.mrf.mxu0
  %v515 = vadd.f32 %v93, %v514
  %v516 = vpop.f32.mrf.mxu0
  %v517 = vadd.f32 %v93, %v516
  %518 = vmatmul.bf16.gmra.mxu0 %v352
  %v519 = vpop.f32.mrf.mxu0
  %v520 = vadd.f32 %v93, %v519
  %v521 = vpop.f32.mrf.mxu0
  %v522 = vadd.f32 %v93, %v521
  %523 = vmatmul.bf16.gmra.mxu0 %v355
  %v524 = vpop.f32.mrf.mxu0
  %v525 = vadd.f32 %v93, %v524
  %v526 = vpop.f32.mrf.mxu0
  %v527 = vadd.f32 %v93, %v526
  %528 = vmatmul.bf16.gmra.mxu0 %v358
  %v529 = vpop.f32.mrf.mxu0
  %v530 = vadd.f32 %v93, %v529
  %v531 = vpop.f32.mrf.mxu0
  %v532 = vadd.f32 %v93, %v531
  %533 = vmatmul.bf16.gmra.mxu0 %v361
  %v534 = vpop.f32.mrf.mxu0
  %v535 = vadd.f32 %v93, %v534
  %v536 = vpop.f32.mrf.mxu0
  %v537 = vadd.f32 %v93, %v536
  %538 = vdwg.mxu0
  %v539 = vmax.f32 %v380, 0.0
  %v540 = vmax.f32 %v382, 0.0
  %v541 = vmax.f32 %v385, 0.0
  %v542 = vmax.f32 %v387, 0.0
  %v543 = vmax.f32 %v390, 0.0
  %v544 = vmax.f32 %v392, 0.0
  %v545 = vmax.f32 %v395, 0.0
  %v546 = vmax.f32 %v397, 0.0
  %v547 = vmax.f32 %v400, 0.0
  %v548 = vmax.f32 %v402, 0.0
  %v549 = vmax.f32 %v405, 0.0
  %v550 = vmax.f32 %v407, 0.0
  %v551 = vmax.f32 %v410, 0.0
  %v552 = vmax.f32 %v412, 0.0
  %v553 = vmax.f32 %v415, 0.0
  %v554 = vmax.f32 %v417, 0.0
  %v555 = vmax.f32 %v420, 0.0
  %v556 = vmax.f32 %v422, 0.0
  %v557 = vmax.f32 %v425, 0.0
  %v558 = vmax.f32 %v427, 0.0
  %v559 = vmax.f32 %v430, 0.0
  %v560 = vmax.f32 %v432, 0.0
  %v561 = vmax.f32 %v435, 0.0
  %v562 = vmax.f32 %v437, 0.0
  %v563 = vmax.f32 %v440, 0.0
  %v564 = vmax.f32 %v442, 0.0
  %v565 = vmax.f32 %v445, 0.0
  %v566 = vmax.f32 %v447, 0.0
  %v567 = vmax.f32 %v450, 0.0
  %v568 = vmax.f32 %v452, 0.0
  %v569 = vmax.f32 %v455, 0.0
  %v570 = vmax.f32 %v457, 0.0
  %v571 = vmax.f32 %v460, 0.0
  %v572 = vmax.f32 %v462, 0.0
  %v573 = vmax.f32 %v465, 0.0
  %v574 = vmax.f32 %v467, 0.0
  %v575 = vmax.f32 %v470, 0.0
  %v576 = vmax.f32 %v472, 0.0
  %v577 = vmax.f32 %v475, 0.0
  %v578 = vmax.f32 %v477, 0.0
  %v579 = vmax.f32 %v480, 0.0
  %v580 = vmax.f32 %v482, 0.0
  %v581 = vmax.f32 %v485, 0.0
  %v582 = vmax.f32 %v487, 0.0
  %v583 = vmax.f32 %v490, 0.0
  %v584 = vmax.f32 %v492, 0.0
  %v585 = vmax.f32 %v495, 0.0
  %v586 = vmax.f32 %v497, 0.0
  %v587 = vmax.f32 %v500, 0.0
  %v588 = vmax.f32 %v502, 0.0
  %v589 = vmax.f32 %v505, 0.0
  %v590 = vmax.f32 %v507, 0.0
  %v591 = vmax.f32 %v510, 0.0
  %v592 = vmax.f32 %v512, 0.0
  %v593 = vmax.f32 %v515, 0.0
  %v594 = vmax.f32 %v517, 0.0
  %v595 = vmax.f32 %v520, 0.0
  %v596 = vmax.f32 %v522, 0.0
  %v597 = vmax.f32 %v525, 0.0
  %v598 = vmax.f32 %v527, 0.0
  %v599 = vmax.f32 %v530, 0.0
  %v600 = vmax.f32 %v532, 0.0
  %v601 = vmax.f32 %v535, 0.0
  %v602 = vmax.f32 %v537, 0.0
  %v603 = vpack.c.bf16 %v540, %v539
  %v604 = vpack.c.bf16 %v542, %v541
  %v605 = vpack.c.bf16 %v544, %v543
  %v606 = vpack.c.bf16 %v546, %v545
  %v607 = vpack.c.bf16 %v548, %v547
  %v608 = vpack.c.bf16 %v550, %v549
  %v609 = vpack.c.bf16 %v552, %v551
  %v610 = vpack.c.bf16 %v554, %v553
  %v611 = vpack.c.bf16 %v556, %v555
  %v612 = vpack.c.bf16 %v558, %v557
  %v613 = vpack.c.bf16 %v560, %v559
  %v614 = vpack.c.bf16 %v562, %v561
  %v615 = vpack.c.bf16 %v564, %v563
  %v616 = vpack.c.bf16 %v566, %v565
  %v617 = vpack.c.bf16 %v568, %v567
  %v618 = vpack.c.bf16 %v570, %v569
  %v619 = vpack.c.bf16 %v572, %v571
  %v620 = vpack.c.bf16 %v574, %v573
  %v621 = vpack.c.bf16 %v576, %v575
  %v622 = vpack.c.bf16 %v578, %v577
  %v623 = vpack.c.bf16 %v580, %v579
  %v624 = vpack.c.bf16 %v582, %v581
  %v625 = vpack.c.bf16 %v584, %v583
  %v626 = vpack.c.bf16 %v586, %v585
  %v627 = vpack.c.bf16 %v588, %v587
  %v628 = vpack.c.bf16 %v590, %v589
  %v629 = vpack.c.bf16 %v592, %v591
  %v630 = vpack.c.bf16 %v594, %v593
  %v631 = vpack.c.bf16 %v596, %v595
  %v632 = vpack.c.bf16 %v598, %v597
  %v633 = vpack.c.bf16 %v600, %v599
  %v634 = vpack.c.bf16 %v602, %v601
  %v635 = vld [vmem:[%s3] sm:$0xf]
  %v636 = vld [vmem:[%s3 + $0x4] sm:$0xf]
  %v637 = vld [vmem:[%s3 + $0x8] sm:$0xf]
  %v638 = vld [vmem:[%s3 + $0xc] sm:$0xf]
  %v639 = vld [vmem:[%s4] sm:$0x1]
  %v641 = vperm.slane %v639, 0
  %v647 = vunpack.c.l.b16 %v635
  %v648 = vunpack.c.l.b16 %v636
  %v649 = vunpack.c.l.b16 %v637
  %v650 = vunpack.c.l.b16 %v638
  %v651 = vpack.c.b16 %v648, %v647
  %v652 = vpack.c.b16 %v650, %v649
  %vm655 = vcmask 261120
  %v657 = vsel %vm655, %v603, 0
  %v660 = vsel %vm655, %v604, 0
  %v663 = vsel %vm655, %v605, 0
  %v666 = vsel %vm655, %v606, 0
  %v669 = vsel %vm655, %v607, 0
  %v672 = vsel %vm655, %v608, 0
  %v675 = vsel %vm655, %v609, 0
  %v678 = vsel %vm655, %v610, 0
  %v681 = vsel %vm655, %v611, 0
  %v684 = vsel %vm655, %v612, 0
  %v687 = vsel %vm655, %v613, 0
  %v690 = vsel %vm655, %v614, 0
  %v693 = vsel %vm655, %v615, 0
  %v696 = vsel %vm655, %v616, 0
  %v699 = vsel %vm655, %v617, 0
  %v702 = vsel %vm655, %v618, 0
  %v705 = vsel %vm655, %v619, 0
  %v708 = vsel %vm655, %v620, 0
  %v711 = vsel %vm655, %v621, 0
  %v714 = vsel %vm655, %v622, 0
  %v717 = vsel %vm655, %v623, 0
  %v720 = vsel %vm655, %v624, 0
  %v723 = vsel %vm655, %v625, 0
  %v726 = vsel %vm655, %v626, 0
  %v729 = vsel %vm655, %v627, 0
  %v732 = vsel %vm655, %v628, 0
  %v735 = vsel %vm655, %v629, 0
  %v738 = vsel %vm655, %v630, 0
  %v741 = vsel %vm655, %v631, 0
  %v744 = vsel %vm655, %v632, 0
  %v747 = vsel %vm655, %v633, 0
  %v750 = vsel %vm655, %v634, 0
  %752 = vmatpush.bf16.msra.mxu0 0
  %753 = vmatpush.bf16.msra.mxu0 0
  %754 = vmatpush.bf16.msra.mxu0 0
  %755 = vmatpush.bf16.msra.mxu0 0
  %756 = vmatpush.bf16.msra.mxu0 0
  %757 = vmatpush.bf16.msra.mxu0 0
  %758 = vmatpush.bf16.msra.mxu0 %v652
  %759 = vmatpush.bf16.msra.mxu0 %v651
  %760 = vmatmul.bf16.gmra.mxu0 %v657
  %v761 = vpop.f32.mrf.mxu0
  %v762 = vadd.f32 %v641, %v761
  %v763 = vpop.f32.mrf.mxu0
  %v764 = vadd.f32 %v641, %v763
  %765 = vmatmul.bf16.gmra.mxu0 %v660
  %v766 = vpop.f32.mrf.mxu0
  %v767 = vadd.f32 %v641, %v766
  %v768 = vpop.f32.mrf.mxu0
  %v769 = vadd.f32 %v641, %v768
  %770 = vmatmul.bf16.gmra.mxu0 %v663
  %v771 = vpop.f32.mrf.mxu0
  %v772 = vadd.f32 %v641, %v771
  %v773 = vpop.f32.mrf.mxu0
  %v774 = vadd.f32 %v641, %v773
  %775 = vmatmul.bf16.gmra.mxu0 %v666
  %v776 = vpop.f32.mrf.mxu0
  %v777 = vadd.f32 %v641, %v776
  %v778 = vpop.f32.mrf.mxu0
  %v779 = vadd.f32 %v641, %v778
  %780 = vmatmul.bf16.gmra.mxu0 %v669
  %v781 = vpop.f32.mrf.mxu0
  %v782 = vadd.f32 %v641, %v781
  %v783 = vpop.f32.mrf.mxu0
  %v784 = vadd.f32 %v641, %v783
  %785 = vmatmul.bf16.gmra.mxu0 %v672
  %v786 = vpop.f32.mrf.mxu0
  %v787 = vadd.f32 %v641, %v786
  %v788 = vpop.f32.mrf.mxu0
  %v789 = vadd.f32 %v641, %v788
  %790 = vmatmul.bf16.gmra.mxu0 %v675
  %v791 = vpop.f32.mrf.mxu0
  %v792 = vadd.f32 %v641, %v791
  %v793 = vpop.f32.mrf.mxu0
  %v794 = vadd.f32 %v641, %v793
  %795 = vmatmul.bf16.gmra.mxu0 %v678
  %v796 = vpop.f32.mrf.mxu0
  %v797 = vadd.f32 %v641, %v796
  %v798 = vpop.f32.mrf.mxu0
  %v799 = vadd.f32 %v641, %v798
  %800 = vmatmul.bf16.gmra.mxu0 %v681
  %v801 = vpop.f32.mrf.mxu0
  %v802 = vadd.f32 %v641, %v801
  %v803 = vpop.f32.mrf.mxu0
  %v804 = vadd.f32 %v641, %v803
  %805 = vmatmul.bf16.gmra.mxu0 %v684
  %v806 = vpop.f32.mrf.mxu0
  %v807 = vadd.f32 %v641, %v806
  %v808 = vpop.f32.mrf.mxu0
  %v809 = vadd.f32 %v641, %v808
  %810 = vmatmul.bf16.gmra.mxu0 %v687
  %v811 = vpop.f32.mrf.mxu0
  %v812 = vadd.f32 %v641, %v811
  %v813 = vpop.f32.mrf.mxu0
  %v814 = vadd.f32 %v641, %v813
  %815 = vmatmul.bf16.gmra.mxu0 %v690
  %v816 = vpop.f32.mrf.mxu0
  %v817 = vadd.f32 %v641, %v816
  %v818 = vpop.f32.mrf.mxu0
  %v819 = vadd.f32 %v641, %v818
  %820 = vmatmul.bf16.gmra.mxu0 %v693
  %v821 = vpop.f32.mrf.mxu0
  %v822 = vadd.f32 %v641, %v821
  %v823 = vpop.f32.mrf.mxu0
  %v824 = vadd.f32 %v641, %v823
  %825 = vmatmul.bf16.gmra.mxu0 %v696
  %v826 = vpop.f32.mrf.mxu0
  %v827 = vadd.f32 %v641, %v826
  %v828 = vpop.f32.mrf.mxu0
  %v829 = vadd.f32 %v641, %v828
  %830 = vmatmul.bf16.gmra.mxu0 %v699
  %v831 = vpop.f32.mrf.mxu0
  %v832 = vadd.f32 %v641, %v831
  %v833 = vpop.f32.mrf.mxu0
  %v834 = vadd.f32 %v641, %v833
  %835 = vmatmul.bf16.gmra.mxu0 %v702
  %v836 = vpop.f32.mrf.mxu0
  %v837 = vadd.f32 %v641, %v836
  %v838 = vpop.f32.mrf.mxu0
  %v839 = vadd.f32 %v641, %v838
  %840 = vmatmul.bf16.gmra.mxu0 %v705
  %v841 = vpop.f32.mrf.mxu0
  %v842 = vadd.f32 %v641, %v841
  %v843 = vpop.f32.mrf.mxu0
  %v844 = vadd.f32 %v641, %v843
  %845 = vmatmul.bf16.gmra.mxu0 %v708
  %v846 = vpop.f32.mrf.mxu0
  %v847 = vadd.f32 %v641, %v846
  %v848 = vpop.f32.mrf.mxu0
  %v849 = vadd.f32 %v641, %v848
  %850 = vmatmul.bf16.gmra.mxu0 %v711
  %v851 = vpop.f32.mrf.mxu0
  %v852 = vadd.f32 %v641, %v851
  %v853 = vpop.f32.mrf.mxu0
  %v854 = vadd.f32 %v641, %v853
  %855 = vmatmul.bf16.gmra.mxu0 %v714
  %v856 = vpop.f32.mrf.mxu0
  %v857 = vadd.f32 %v641, %v856
  %v858 = vpop.f32.mrf.mxu0
  %v859 = vadd.f32 %v641, %v858
  %860 = vmatmul.bf16.gmra.mxu0 %v717
  %v861 = vpop.f32.mrf.mxu0
  %v862 = vadd.f32 %v641, %v861
  %v863 = vpop.f32.mrf.mxu0
  %v864 = vadd.f32 %v641, %v863
  %865 = vmatmul.bf16.gmra.mxu0 %v720
  %v866 = vpop.f32.mrf.mxu0
  %v867 = vadd.f32 %v641, %v866
  %v868 = vpop.f32.mrf.mxu0
  %v869 = vadd.f32 %v641, %v868
  %870 = vmatmul.bf16.gmra.mxu0 %v723
  %v871 = vpop.f32.mrf.mxu0
  %v872 = vadd.f32 %v641, %v871
  %v873 = vpop.f32.mrf.mxu0
  %v874 = vadd.f32 %v641, %v873
  %875 = vmatmul.bf16.gmra.mxu0 %v726
  %v876 = vpop.f32.mrf.mxu0
  %v877 = vadd.f32 %v641, %v876
  %v878 = vpop.f32.mrf.mxu0
  %v879 = vadd.f32 %v641, %v878
  %880 = vmatmul.bf16.gmra.mxu0 %v729
  %v881 = vpop.f32.mrf.mxu0
  %v882 = vadd.f32 %v641, %v881
  %v883 = vpop.f32.mrf.mxu0
  %v884 = vadd.f32 %v641, %v883
  %885 = vmatmul.bf16.gmra.mxu0 %v732
  %v886 = vpop.f32.mrf.mxu0
  %v887 = vadd.f32 %v641, %v886
  %v888 = vpop.f32.mrf.mxu0
  %v889 = vadd.f32 %v641, %v888
  %890 = vmatmul.bf16.gmra.mxu0 %v735
  %v891 = vpop.f32.mrf.mxu0
  %v892 = vadd.f32 %v641, %v891
  %v893 = vpop.f32.mrf.mxu0
  %v894 = vadd.f32 %v641, %v893
  %895 = vmatmul.bf16.gmra.mxu0 %v738
  %v896 = vpop.f32.mrf.mxu0
  %v897 = vadd.f32 %v641, %v896
  %v898 = vpop.f32.mrf.mxu0
  %v899 = vadd.f32 %v641, %v898
  %900 = vmatmul.bf16.gmra.mxu0 %v741
  %v901 = vpop.f32.mrf.mxu0
  %v902 = vadd.f32 %v641, %v901
  %v903 = vpop.f32.mrf.mxu0
  %v904 = vadd.f32 %v641, %v903
  %905 = vmatmul.bf16.gmra.mxu0 %v744
  %v906 = vpop.f32.mrf.mxu0
  %v907 = vadd.f32 %v641, %v906
  %v908 = vpop.f32.mrf.mxu0
  %v909 = vadd.f32 %v641, %v908
  %910 = vmatmul.bf16.gmra.mxu0 %v747
  %v911 = vpop.f32.mrf.mxu0
  %v912 = vadd.f32 %v641, %v911
  %v913 = vpop.f32.mrf.mxu0
  %v914 = vadd.f32 %v641, %v913
  %915 = vmatmul.bf16.gmra.mxu0 %v750
  %v916 = vpop.f32.mrf.mxu0
  %v917 = vadd.f32 %v641, %v916
  %v918 = vpop.f32.mrf.mxu0
  %v919 = vadd.f32 %v641, %v918
  %920 = vdwg.mxu0
  %v921 = vlaneseq
  %v922 = vand.u32 %v921, 127
  %v923 = vxor.u32 %v762, 2147483648
  %v924 = vxor.u32 %v764, 2147483648
  %v925 = vxor.u32 %v767, 2147483648
  %v926 = vxor.u32 %v769, 2147483648
  %v927 = vxor.u32 %v772, 2147483648
  %v928 = vxor.u32 %v774, 2147483648
  %v929 = vxor.u32 %v777, 2147483648
  %v930 = vxor.u32 %v779, 2147483648
  %v931 = vxor.u32 %v782, 2147483648
  %v932 = vxor.u32 %v784, 2147483648
  %v933 = vxor.u32 %v787, 2147483648
  %v934 = vxor.u32 %v789, 2147483648
  %v935 = vxor.u32 %v792, 2147483648
  %v936 = vxor.u32 %v794, 2147483648
  %v937 = vxor.u32 %v797, 2147483648
  %v938 = vxor.u32 %v799, 2147483648
  %v939 = vxor.u32 %v802, 2147483648
  %v940 = vxor.u32 %v804, 2147483648
  %v941 = vxor.u32 %v807, 2147483648
  %v942 = vxor.u32 %v809, 2147483648
  %v943 = vxor.u32 %v812, 2147483648
  %v944 = vxor.u32 %v814, 2147483648
  %v945 = vxor.u32 %v817, 2147483648
  %v946 = vxor.u32 %v819, 2147483648
  %v947 = vxor.u32 %v822, 2147483648
  %v948 = vxor.u32 %v824, 2147483648
  %v949 = vxor.u32 %v827, 2147483648
  %v950 = vxor.u32 %v829, 2147483648
  %v951 = vxor.u32 %v832, 2147483648
  %v952 = vxor.u32 %v834, 2147483648
  %v953 = vxor.u32 %v837, 2147483648
  %v954 = vxor.u32 %v839, 2147483648
  %v955 = vxor.u32 %v842, 2147483648
  %v956 = vxor.u32 %v844, 2147483648
  %v957 = vxor.u32 %v847, 2147483648
  %v958 = vxor.u32 %v849, 2147483648
  %v959 = vxor.u32 %v852, 2147483648
  %v960 = vxor.u32 %v854, 2147483648
  %v961 = vxor.u32 %v857, 2147483648
  %v962 = vxor.u32 %v859, 2147483648
  %v963 = vxor.u32 %v862, 2147483648
  %v964 = vxor.u32 %v864, 2147483648
  %v965 = vxor.u32 %v867, 2147483648
  %v966 = vxor.u32 %v869, 2147483648
  %v967 = vxor.u32 %v872, 2147483648
  %v968 = vxor.u32 %v874, 2147483648
  %v969 = vxor.u32 %v877, 2147483648
  %v970 = vxor.u32 %v879, 2147483648
  %v971 = vxor.u32 %v882, 2147483648
  %v972 = vxor.u32 %v884, 2147483648
  %v973 = vxor.u32 %v887, 2147483648
  %v974 = vxor.u32 %v889, 2147483648
  %v975 = vxor.u32 %v892, 2147483648
  %v976 = vxor.u32 %v894, 2147483648
  %v977 = vxor.u32 %v897, 2147483648
  %v978 = vxor.u32 %v899, 2147483648
  %v979 = vxor.u32 %v902, 2147483648
  %v980 = vxor.u32 %v904, 2147483648
  %v981 = vxor.u32 %v907, 2147483648
  %v982 = vxor.u32 %v909, 2147483648
  %v983 = vxor.u32 %v912, 2147483648
  %v984 = vxor.u32 %v914, 2147483648
  %v985 = vxor.u32 %v917, 2147483648
  %v986 = vxor.u32 %v919, 2147483648
  %v987 = vmul.f32 %v923, 1.442695
  %v988 = vpow.pop %v987
  %v989 = vmul.f32 %v924, 1.442695
  %v990 = vpow.pop %v989
  %v991 = vmul.f32 %v925, 1.442695
  %v992 = vpow.pop %v991
  %v993 = vmul.f32 %v926, 1.442695
  %v994 = vpow.pop %v993
  %v995 = vmul.f32 %v927, 1.442695
  %v996 = vpow.pop %v995
  %v997 = vmul.f32 %v928, 1.442695
  %v998 = vpow.pop %v997
  %v999 = vmul.f32 %v929, 1.442695
  %v1000 = vpow.pop %v999
  %v1001 = vmul.f32 %v930, 1.442695
  %v1002 = vpow.pop %v1001
  %v1003 = vmul.f32 %v931, 1.442695
  %v1004 = vpow.pop %v1003
  %v1005 = vmul.f32 %v932, 1.442695
  %v1006 = vpow.pop %v1005
  %v1007 = vmul.f32 %v933, 1.442695
  %v1008 = vpow.pop %v1007
  %v1009 = vmul.f32 %v934, 1.442695
  %v1010 = vpow.pop %v1009
  %v1011 = vmul.f32 %v935, 1.442695
  %v1012 = vpow.pop %v1011
  %v1013 = vmul.f32 %v936, 1.442695
  %v1014 = vpow.pop %v1013
  %v1015 = vmul.f32 %v937, 1.442695
  %v1016 = vpow.pop %v1015
  %v1017 = vmul.f32 %v938, 1.442695
  %v1018 = vpow.pop %v1017
  %v1019 = vmul.f32 %v939, 1.442695
  %v1020 = vpow.pop %v1019
  %v1021 = vmul.f32 %v940, 1.442695
  %v1022 = vpow.pop %v1021
  %v1023 = vmul.f32 %v941, 1.442695
  %v1024 = vpow.pop %v1023
  %v1025 = vmul.f32 %v942, 1.442695
  %v1026 = vpow.pop %v1025
  %v1027 = vmul.f32 %v943, 1.442695
  %v1028 = vpow.pop %v1027
  %v1029 = vmul.f32 %v944, 1.442695
  %v1030 = vpow.pop %v1029
  %v1031 = vmul.f32 %v945, 1.442695
  %v1032 = vpow.pop %v1031
  %v1033 = vmul.f32 %v946, 1.442695
  %v1034 = vpow.pop %v1033
  %v1035 = vmul.f32 %v947, 1.442695
  %v1036 = vpow.pop %v1035
  %v1037 = vmul.f32 %v948, 1.442695
  %v1038 = vpow.pop %v1037
  %v1039 = vmul.f32 %v949, 1.442695
  %v1040 = vpow.pop %v1039
  %v1041 = vmul.f32 %v950, 1.442695
  %v1042 = vpow.pop %v1041
  %v1043 = vmul.f32 %v951, 1.442695
  %v1044 = vpow.pop %v1043
  %v1045 = vmul.f32 %v952, 1.442695
  %v1046 = vpow.pop %v1045
  %v1047 = vmul.f32 %v953, 1.442695
  %v1048 = vpow.pop %v1047
  %v1049 = vmul.f32 %v954, 1.442695
  %v1050 = vpow.pop %v1049
  %v1051 = vmul.f32 %v955, 1.442695
  %v1052 = vpow.pop %v1051
  %v1053 = vmul.f32 %v956, 1.442695
  %v1054 = vpow.pop %v1053
  %v1055 = vmul.f32 %v957, 1.442695
  %v1056 = vpow.pop %v1055
  %v1057 = vmul.f32 %v958, 1.442695
  %v1058 = vpow.pop %v1057
  %v1059 = vmul.f32 %v959, 1.442695
  %v1060 = vpow.pop %v1059
  %v1061 = vmul.f32 %v960, 1.442695
  %v1062 = vpow.pop %v1061
  %v1063 = vmul.f32 %v961, 1.442695
  %v1064 = vpow.pop %v1063
  %v1065 = vmul.f32 %v962, 1.442695
  %v1066 = vpow.pop %v1065
  %v1067 = vmul.f32 %v963, 1.442695
  %v1068 = vpow.pop %v1067
  %v1069 = vmul.f32 %v964, 1.442695
  %v1070 = vpow.pop %v1069
  %v1071 = vmul.f32 %v965, 1.442695
  %v1072 = vpow.pop %v1071
  %v1073 = vmul.f32 %v966, 1.442695
  %v1074 = vpow.pop %v1073
  %v1075 = vmul.f32 %v967, 1.442695
  %v1076 = vpow.pop %v1075
  %v1077 = vmul.f32 %v968, 1.442695
  %v1078 = vpow.pop %v1077
  %v1079 = vmul.f32 %v969, 1.442695
  %v1080 = vpow.pop %v1079
  %v1081 = vmul.f32 %v970, 1.442695
  %v1082 = vpow.pop %v1081
  %v1083 = vmul.f32 %v971, 1.442695
  %v1084 = vpow.pop %v1083
  %v1085 = vmul.f32 %v972, 1.442695
  %v1086 = vpow.pop %v1085
  %v1087 = vmul.f32 %v973, 1.442695
  %v1088 = vpow.pop %v1087
  %v1089 = vmul.f32 %v974, 1.442695
  %v1090 = vpow.pop %v1089
  %v1091 = vmul.f32 %v975, 1.442695
  %v1092 = vpow.pop %v1091
  %v1093 = vmul.f32 %v976, 1.442695
  %v1094 = vpow.pop %v1093
  %v1095 = vmul.f32 %v977, 1.442695
  %v1096 = vpow.pop %v1095
  %v1097 = vmul.f32 %v978, 1.442695
  %v1098 = vpow.pop %v1097
  %v1099 = vmul.f32 %v979, 1.442695
  %v1100 = vpow.pop %v1099
  %v1101 = vmul.f32 %v980, 1.442695
  %v1102 = vpow.pop %v1101
  %v1103 = vmul.f32 %v981, 1.442695
  %v1104 = vpow.pop %v1103
  %v1105 = vmul.f32 %v982, 1.442695
  %v1106 = vpow.pop %v1105
  %v1107 = vmul.f32 %v983, 1.442695
  %v1108 = vpow.pop %v1107
  %v1109 = vmul.f32 %v984, 1.442695
  %v1110 = vpow.pop %v1109
  %v1111 = vmul.f32 %v985, 1.442695
  %v1112 = vpow.pop %v1111
  %v1113 = vmul.f32 %v986, 1.442695
  %v1114 = vpow.pop %v1113
  %v1115 = vadd.f32 %v988, 1.0
  %v1116 = vadd.f32 %v990, 1.0
  %v1117 = vadd.f32 %v992, 1.0
  %v1118 = vadd.f32 %v994, 1.0
  %v1119 = vadd.f32 %v996, 1.0
  %v1120 = vadd.f32 %v998, 1.0
  %v1121 = vadd.f32 %v1000, 1.0
  %v1122 = vadd.f32 %v1002, 1.0
  %v1123 = vadd.f32 %v1004, 1.0
  %v1124 = vadd.f32 %v1006, 1.0
  %v1125 = vadd.f32 %v1008, 1.0
  %v1126 = vadd.f32 %v1010, 1.0
  %v1127 = vadd.f32 %v1012, 1.0
  %v1128 = vadd.f32 %v1014, 1.0
  %v1129 = vadd.f32 %v1016, 1.0
  %v1130 = vadd.f32 %v1018, 1.0
  %v1131 = vadd.f32 %v1020, 1.0
  %v1132 = vadd.f32 %v1022, 1.0
  %v1133 = vadd.f32 %v1024, 1.0
  %v1134 = vadd.f32 %v1026, 1.0
  %v1135 = vadd.f32 %v1028, 1.0
  %v1136 = vadd.f32 %v1030, 1.0
  %v1137 = vadd.f32 %v1032, 1.0
  %v1138 = vadd.f32 %v1034, 1.0
  %v1139 = vadd.f32 %v1036, 1.0
  %v1140 = vadd.f32 %v1038, 1.0
  %v1141 = vadd.f32 %v1040, 1.0
  %v1142 = vadd.f32 %v1042, 1.0
  %v1143 = vadd.f32 %v1044, 1.0
  %v1144 = vadd.f32 %v1046, 1.0
  %v1145 = vadd.f32 %v1048, 1.0
  %v1146 = vadd.f32 %v1050, 1.0
  %v1147 = vadd.f32 %v1052, 1.0
  %v1148 = vadd.f32 %v1054, 1.0
  %v1149 = vadd.f32 %v1056, 1.0
  %v1150 = vadd.f32 %v1058, 1.0
  %v1151 = vadd.f32 %v1060, 1.0
  %v1152 = vadd.f32 %v1062, 1.0
  %v1153 = vadd.f32 %v1064, 1.0
  %v1154 = vadd.f32 %v1066, 1.0
  %v1155 = vadd.f32 %v1068, 1.0
  %v1156 = vadd.f32 %v1070, 1.0
  %v1157 = vadd.f32 %v1072, 1.0
  %v1158 = vadd.f32 %v1074, 1.0
  %v1159 = vadd.f32 %v1076, 1.0
  %v1160 = vadd.f32 %v1078, 1.0
  %v1161 = vadd.f32 %v1080, 1.0
  %v1162 = vadd.f32 %v1082, 1.0
  %v1163 = vadd.f32 %v1084, 1.0
  %v1164 = vadd.f32 %v1086, 1.0
  %v1165 = vadd.f32 %v1088, 1.0
  %v1166 = vadd.f32 %v1090, 1.0
  %v1167 = vadd.f32 %v1092, 1.0
  %v1168 = vadd.f32 %v1094, 1.0
  %v1169 = vadd.f32 %v1096, 1.0
  %v1170 = vadd.f32 %v1098, 1.0
  %v1171 = vadd.f32 %v1100, 1.0
  %v1172 = vadd.f32 %v1102, 1.0
  %v1173 = vadd.f32 %v1104, 1.0
  %v1174 = vadd.f32 %v1106, 1.0
  %v1175 = vadd.f32 %v1108, 1.0
  %v1176 = vadd.f32 %v1110, 1.0
  %v1177 = vadd.f32 %v1112, 1.0
  %v1178 = vadd.f32 %v1114, 1.0
  %v1179 = vrcp.pop %v1115
  %v1180 = vmul.f32 %v1115, %v1179
  %v1181 = vsub.f32 1.0, %v1180
  %v1182 = vmul.f32 %v1179, %v1181
  %v1183 = vadd.f32 %v1179, %v1182
  %vm1184 = vweird.f32 %v1115
  %vm1185 = vweird.f32 %v1179
  %vm1186 = vmor %vm1184, %vm1185
  %v1187 = vsel %vm1186, %v1179, %v1183
  %v1188 = vand.u32 2147483647, %v1115
  %vm1189 = vcmp.eq.f32.partialorder %v1188, 8.507059e+37
  %v1190 = vand.u32 %v1115, 2147483648
  %v1191 = vor.u32 1.1754944e-38, %v1190
  %v1192 = vsel %vm1189, %v1191, %v1187
  %v1193 = vmul.f32 1.0, %v1192
  %v1194 = vrcp.pop %v1116
  %v1195 = vmul.f32 %v1116, %v1194
  %v1196 = vsub.f32 1.0, %v1195
  %v1197 = vmul.f32 %v1194, %v1196
  %v1198 = vadd.f32 %v1194, %v1197
  %vm1199 = vweird.f32 %v1116
  %vm1200 = vweird.f32 %v1194
  %vm1201 = vmor %vm1199, %vm1200
  %v1202 = vsel %vm1201, %v1194, %v1198
  %v1203 = vand.u32 2147483647, %v1116
  %vm1204 = vcmp.eq.f32.partialorder %v1203, 8.507059e+37
  %v1205 = vand.u32 %v1116, 2147483648
  %v1206 = vor.u32 1.1754944e-38, %v1205
  %v1207 = vsel %vm1204, %v1206, %v1202
  %v1208 = vmul.f32 1.0, %v1207
  %v1209 = vrcp.pop %v1117
  %v1210 = vmul.f32 %v1117, %v1209
  %v1211 = vsub.f32 1.0, %v1210
  %v1212 = vmul.f32 %v1209, %v1211
  %v1213 = vadd.f32 %v1209, %v1212
  %vm1214 = vweird.f32 %v1117
  %vm1215 = vweird.f32 %v1209
  %vm1216 = vmor %vm1214, %vm1215
  %v1217 = vsel %vm1216, %v1209, %v1213
  %v1218 = vand.u32 2147483647, %v1117
  %vm1219 = vcmp.eq.f32.partialorder %v1218, 8.507059e+37
  %v1220 = vand.u32 %v1117, 2147483648
  %v1221 = vor.u32 1.1754944e-38, %v1220
  %v1222 = vsel %vm1219, %v1221, %v1217
  %v1223 = vmul.f32 1.0, %v1222
  %v1224 = vrcp.pop %v1118
  %v1225 = vmul.f32 %v1118, %v1224
  %v1226 = vsub.f32 1.0, %v1225
  %v1227 = vmul.f32 %v1224, %v1226
  %v1228 = vadd.f32 %v1224, %v1227
  %vm1229 = vweird.f32 %v1118
  %vm1230 = vweird.f32 %v1224
  %vm1231 = vmor %vm1229, %vm1230
  %v1232 = vsel %vm1231, %v1224, %v1228
  %v1233 = vand.u32 2147483647, %v1118
  %vm1234 = vcmp.eq.f32.partialorder %v1233, 8.507059e+37
  %v1235 = vand.u32 %v1118, 2147483648
  %v1236 = vor.u32 1.1754944e-38, %v1235
  %v1237 = vsel %vm1234, %v1236, %v1232
  %v1238 = vmul.f32 1.0, %v1237
  %v1239 = vrcp.pop %v1119
  %v1240 = vmul.f32 %v1119, %v1239
  %v1241 = vsub.f32 1.0, %v1240
  %v1242 = vmul.f32 %v1239, %v1241
  %v1243 = vadd.f32 %v1239, %v1242
  %vm1244 = vweird.f32 %v1119
  %vm1245 = vweird.f32 %v1239
  %vm1246 = vmor %vm1244, %vm1245
  %v1247 = vsel %vm1246, %v1239, %v1243
  %v1248 = vand.u32 2147483647, %v1119
  %vm1249 = vcmp.eq.f32.partialorder %v1248, 8.507059e+37
  %v1250 = vand.u32 %v1119, 2147483648
  %v1251 = vor.u32 1.1754944e-38, %v1250
  %v1252 = vsel %vm1249, %v1251, %v1247
  %v1253 = vmul.f32 1.0, %v1252
  %v1254 = vrcp.pop %v1120
  %v1255 = vmul.f32 %v1120, %v1254
  %v1256 = vsub.f32 1.0, %v1255
  %v1257 = vmul.f32 %v1254, %v1256
  %v1258 = vadd.f32 %v1254, %v1257
  %vm1259 = vweird.f32 %v1120
  %vm1260 = vweird.f32 %v1254
  %vm1261 = vmor %vm1259, %vm1260
  %v1262 = vsel %vm1261, %v1254, %v1258
  %v1263 = vand.u32 2147483647, %v1120
  %vm1264 = vcmp.eq.f32.partialorder %v1263, 8.507059e+37
  %v1265 = vand.u32 %v1120, 2147483648
  %v1266 = vor.u32 1.1754944e-38, %v1265
  %v1267 = vsel %vm1264, %v1266, %v1262
  %v1268 = vmul.f32 1.0, %v1267
  %v1269 = vrcp.pop %v1121
  %v1270 = vmul.f32 %v1121, %v1269
  %v1271 = vsub.f32 1.0, %v1270
  %v1272 = vmul.f32 %v1269, %v1271
  %v1273 = vadd.f32 %v1269, %v1272
  %vm1274 = vweird.f32 %v1121
  %vm1275 = vweird.f32 %v1269
  %vm1276 = vmor %vm1274, %vm1275
  %v1277 = vsel %vm1276, %v1269, %v1273
  %v1278 = vand.u32 2147483647, %v1121
  %vm1279 = vcmp.eq.f32.partialorder %v1278, 8.507059e+37
  %v1280 = vand.u32 %v1121, 2147483648
  %v1281 = vor.u32 1.1754944e-38, %v1280
  %v1282 = vsel %vm1279, %v1281, %v1277
  %v1283 = vmul.f32 1.0, %v1282
  %v1284 = vrcp.pop %v1122
  %v1285 = vmul.f32 %v1122, %v1284
  %v1286 = vsub.f32 1.0, %v1285
  %v1287 = vmul.f32 %v1284, %v1286
  %v1288 = vadd.f32 %v1284, %v1287
  %vm1289 = vweird.f32 %v1122
  %vm1290 = vweird.f32 %v1284
  %vm1291 = vmor %vm1289, %vm1290
  %v1292 = vsel %vm1291, %v1284, %v1288
  %v1293 = vand.u32 2147483647, %v1122
  %vm1294 = vcmp.eq.f32.partialorder %v1293, 8.507059e+37
  %v1295 = vand.u32 %v1122, 2147483648
  %v1296 = vor.u32 1.1754944e-38, %v1295
  %v1297 = vsel %vm1294, %v1296, %v1292
  %v1298 = vmul.f32 1.0, %v1297
  %v1299 = vrcp.pop %v1123
  %v1300 = vmul.f32 %v1123, %v1299
  %v1301 = vsub.f32 1.0, %v1300
  %v1302 = vmul.f32 %v1299, %v1301
  %v1303 = vadd.f32 %v1299, %v1302
  %vm1304 = vweird.f32 %v1123
  %vm1305 = vweird.f32 %v1299
  %vm1306 = vmor %vm1304, %vm1305
  %v1307 = vsel %vm1306, %v1299, %v1303
  %v1308 = vand.u32 2147483647, %v1123
  %vm1309 = vcmp.eq.f32.partialorder %v1308, 8.507059e+37
  %v1310 = vand.u32 %v1123, 2147483648
  %v1311 = vor.u32 1.1754944e-38, %v1310
  %v1312 = vsel %vm1309, %v1311, %v1307
  %v1313 = vmul.f32 1.0, %v1312
  %v1314 = vrcp.pop %v1124
  %v1315 = vmul.f32 %v1124, %v1314
  %v1316 = vsub.f32 1.0, %v1315
  %v1317 = vmul.f32 %v1314, %v1316
  %v1318 = vadd.f32 %v1314, %v1317
  %vm1319 = vweird.f32 %v1124
  %vm1320 = vweird.f32 %v1314
  %vm1321 = vmor %vm1319, %vm1320
  %v1322 = vsel %vm1321, %v1314, %v1318
  %v1323 = vand.u32 2147483647, %v1124
  %vm1324 = vcmp.eq.f32.partialorder %v1323, 8.507059e+37
  %v1325 = vand.u32 %v1124, 2147483648
  %v1326 = vor.u32 1.1754944e-38, %v1325
  %v1327 = vsel %vm1324, %v1326, %v1322
  %v1328 = vmul.f32 1.0, %v1327
  %v1329 = vrcp.pop %v1125
  %v1330 = vmul.f32 %v1125, %v1329
  %v1331 = vsub.f32 1.0, %v1330
  %v1332 = vmul.f32 %v1329, %v1331
  %v1333 = vadd.f32 %v1329, %v1332
  %vm1334 = vweird.f32 %v1125
  %vm1335 = vweird.f32 %v1329
  %vm1336 = vmor %vm1334, %vm1335
  %v1337 = vsel %vm1336, %v1329, %v1333
  %v1338 = vand.u32 2147483647, %v1125
  %vm1339 = vcmp.eq.f32.partialorder %v1338, 8.507059e+37
  %v1340 = vand.u32 %v1125, 2147483648
  %v1341 = vor.u32 1.1754944e-38, %v1340
  %v1342 = vsel %vm1339, %v1341, %v1337
  %v1343 = vmul.f32 1.0, %v1342
  %v1344 = vrcp.pop %v1126
  %v1345 = vmul.f32 %v1126, %v1344
  %v1346 = vsub.f32 1.0, %v1345
  %v1347 = vmul.f32 %v1344, %v1346
  %v1348 = vadd.f32 %v1344, %v1347
  %vm1349 = vweird.f32 %v1126
  %vm1350 = vweird.f32 %v1344
  %vm1351 = vmor %vm1349, %vm1350
  %v1352 = vsel %vm1351, %v1344, %v1348
  %v1353 = vand.u32 2147483647, %v1126
  %vm1354 = vcmp.eq.f32.partialorder %v1353, 8.507059e+37
  %v1355 = vand.u32 %v1126, 2147483648
  %v1356 = vor.u32 1.1754944e-38, %v1355
  %v1357 = vsel %vm1354, %v1356, %v1352
  %v1358 = vmul.f32 1.0, %v1357
  %v1359 = vrcp.pop %v1127
  %v1360 = vmul.f32 %v1127, %v1359
  %v1361 = vsub.f32 1.0, %v1360
  %v1362 = vmul.f32 %v1359, %v1361
  %v1363 = vadd.f32 %v1359, %v1362
  %vm1364 = vweird.f32 %v1127
  %vm1365 = vweird.f32 %v1359
  %vm1366 = vmor %vm1364, %vm1365
  %v1367 = vsel %vm1366, %v1359, %v1363
  %v1368 = vand.u32 2147483647, %v1127
  %vm1369 = vcmp.eq.f32.partialorder %v1368, 8.507059e+37
  %v1370 = vand.u32 %v1127, 2147483648
  %v1371 = vor.u32 1.1754944e-38, %v1370
  %v1372 = vsel %vm1369, %v1371, %v1367
  %v1373 = vmul.f32 1.0, %v1372
  %v1374 = vrcp.pop %v1128
  %v1375 = vmul.f32 %v1128, %v1374
  %v1376 = vsub.f32 1.0, %v1375
  %v1377 = vmul.f32 %v1374, %v1376
  %v1378 = vadd.f32 %v1374, %v1377
  %vm1379 = vweird.f32 %v1128
  %vm1380 = vweird.f32 %v1374
  %vm1381 = vmor %vm1379, %vm1380
  %v1382 = vsel %vm1381, %v1374, %v1378
  %v1383 = vand.u32 2147483647, %v1128
  %vm1384 = vcmp.eq.f32.partialorder %v1383, 8.507059e+37
  %v1385 = vand.u32 %v1128, 2147483648
  %v1386 = vor.u32 1.1754944e-38, %v1385
  %v1387 = vsel %vm1384, %v1386, %v1382
  %v1388 = vmul.f32 1.0, %v1387
  %v1389 = vrcp.pop %v1129
  %v1390 = vmul.f32 %v1129, %v1389
  %v1391 = vsub.f32 1.0, %v1390
  %v1392 = vmul.f32 %v1389, %v1391
  %v1393 = vadd.f32 %v1389, %v1392
  %vm1394 = vweird.f32 %v1129
  %vm1395 = vweird.f32 %v1389
  %vm1396 = vmor %vm1394, %vm1395
  %v1397 = vsel %vm1396, %v1389, %v1393
  %v1398 = vand.u32 2147483647, %v1129
  %vm1399 = vcmp.eq.f32.partialorder %v1398, 8.507059e+37
  %v1400 = vand.u32 %v1129, 2147483648
  %v1401 = vor.u32 1.1754944e-38, %v1400
  %v1402 = vsel %vm1399, %v1401, %v1397
  %v1403 = vmul.f32 1.0, %v1402
  %v1404 = vrcp.pop %v1130
  %v1405 = vmul.f32 %v1130, %v1404
  %v1406 = vsub.f32 1.0, %v1405
  %v1407 = vmul.f32 %v1404, %v1406
  %v1408 = vadd.f32 %v1404, %v1407
  %vm1409 = vweird.f32 %v1130
  %vm1410 = vweird.f32 %v1404
  %vm1411 = vmor %vm1409, %vm1410
  %v1412 = vsel %vm1411, %v1404, %v1408
  %v1413 = vand.u32 2147483647, %v1130
  %vm1414 = vcmp.eq.f32.partialorder %v1413, 8.507059e+37
  %v1415 = vand.u32 %v1130, 2147483648
  %v1416 = vor.u32 1.1754944e-38, %v1415
  %v1417 = vsel %vm1414, %v1416, %v1412
  %v1418 = vmul.f32 1.0, %v1417
  %v1419 = vrcp.pop %v1131
  %v1420 = vmul.f32 %v1131, %v1419
  %v1421 = vsub.f32 1.0, %v1420
  %v1422 = vmul.f32 %v1419, %v1421
  %v1423 = vadd.f32 %v1419, %v1422
  %vm1424 = vweird.f32 %v1131
  %vm1425 = vweird.f32 %v1419
  %vm1426 = vmor %vm1424, %vm1425
  %v1427 = vsel %vm1426, %v1419, %v1423
  %v1428 = vand.u32 2147483647, %v1131
  %vm1429 = vcmp.eq.f32.partialorder %v1428, 8.507059e+37
  %v1430 = vand.u32 %v1131, 2147483648
  %v1431 = vor.u32 1.1754944e-38, %v1430
  %v1432 = vsel %vm1429, %v1431, %v1427
  %v1433 = vmul.f32 1.0, %v1432
  %v1434 = vrcp.pop %v1132
  %v1435 = vmul.f32 %v1132, %v1434
  %v1436 = vsub.f32 1.0, %v1435
  %v1437 = vmul.f32 %v1434, %v1436
  %v1438 = vadd.f32 %v1434, %v1437
  %vm1439 = vweird.f32 %v1132
  %vm1440 = vweird.f32 %v1434
  %vm1441 = vmor %vm1439, %vm1440
  %v1442 = vsel %vm1441, %v1434, %v1438
  %v1443 = vand.u32 2147483647, %v1132
  %vm1444 = vcmp.eq.f32.partialorder %v1443, 8.507059e+37
  %v1445 = vand.u32 %v1132, 2147483648
  %v1446 = vor.u32 1.1754944e-38, %v1445
  %v1447 = vsel %vm1444, %v1446, %v1442
  %v1448 = vmul.f32 1.0, %v1447
  %v1449 = vrcp.pop %v1133
  %v1450 = vmul.f32 %v1133, %v1449
  %v1451 = vsub.f32 1.0, %v1450
  %v1452 = vmul.f32 %v1449, %v1451
  %v1453 = vadd.f32 %v1449, %v1452
  %vm1454 = vweird.f32 %v1133
  %vm1455 = vweird.f32 %v1449
  %vm1456 = vmor %vm1454, %vm1455
  %v1457 = vsel %vm1456, %v1449, %v1453
  %v1458 = vand.u32 2147483647, %v1133
  %vm1459 = vcmp.eq.f32.partialorder %v1458, 8.507059e+37
  %v1460 = vand.u32 %v1133, 2147483648
  %v1461 = vor.u32 1.1754944e-38, %v1460
  %v1462 = vsel %vm1459, %v1461, %v1457
  %v1463 = vmul.f32 1.0, %v1462
  %v1464 = vrcp.pop %v1134
  %v1465 = vmul.f32 %v1134, %v1464
  %v1466 = vsub.f32 1.0, %v1465
  %v1467 = vmul.f32 %v1464, %v1466
  %v1468 = vadd.f32 %v1464, %v1467
  %vm1469 = vweird.f32 %v1134
  %vm1470 = vweird.f32 %v1464
  %vm1471 = vmor %vm1469, %vm1470
  %v1472 = vsel %vm1471, %v1464, %v1468
  %v1473 = vand.u32 2147483647, %v1134
  %vm1474 = vcmp.eq.f32.partialorder %v1473, 8.507059e+37
  %v1475 = vand.u32 %v1134, 2147483648
  %v1476 = vor.u32 1.1754944e-38, %v1475
  %v1477 = vsel %vm1474, %v1476, %v1472
  %v1478 = vmul.f32 1.0, %v1477
  %v1479 = vrcp.pop %v1135
  %v1480 = vmul.f32 %v1135, %v1479
  %v1481 = vsub.f32 1.0, %v1480
  %v1482 = vmul.f32 %v1479, %v1481
  %v1483 = vadd.f32 %v1479, %v1482
  %vm1484 = vweird.f32 %v1135
  %vm1485 = vweird.f32 %v1479
  %vm1486 = vmor %vm1484, %vm1485
  %v1487 = vsel %vm1486, %v1479, %v1483
  %v1488 = vand.u32 2147483647, %v1135
  %vm1489 = vcmp.eq.f32.partialorder %v1488, 8.507059e+37
  %v1490 = vand.u32 %v1135, 2147483648
  %v1491 = vor.u32 1.1754944e-38, %v1490
  %v1492 = vsel %vm1489, %v1491, %v1487
  %v1493 = vmul.f32 1.0, %v1492
  %v1494 = vrcp.pop %v1136
  %v1495 = vmul.f32 %v1136, %v1494
  %v1496 = vsub.f32 1.0, %v1495
  %v1497 = vmul.f32 %v1494, %v1496
  %v1498 = vadd.f32 %v1494, %v1497
  %vm1499 = vweird.f32 %v1136
  %vm1500 = vweird.f32 %v1494
  %vm1501 = vmor %vm1499, %vm1500
  %v1502 = vsel %vm1501, %v1494, %v1498
  %v1503 = vand.u32 2147483647, %v1136
  %vm1504 = vcmp.eq.f32.partialorder %v1503, 8.507059e+37
  %v1505 = vand.u32 %v1136, 2147483648
  %v1506 = vor.u32 1.1754944e-38, %v1505
  %v1507 = vsel %vm1504, %v1506, %v1502
  %v1508 = vmul.f32 1.0, %v1507
  %v1509 = vrcp.pop %v1137
  %v1510 = vmul.f32 %v1137, %v1509
  %v1511 = vsub.f32 1.0, %v1510
  %v1512 = vmul.f32 %v1509, %v1511
  %v1513 = vadd.f32 %v1509, %v1512
  %vm1514 = vweird.f32 %v1137
  %vm1515 = vweird.f32 %v1509
  %vm1516 = vmor %vm1514, %vm1515
  %v1517 = vsel %vm1516, %v1509, %v1513
  %v1518 = vand.u32 2147483647, %v1137
  %vm1519 = vcmp.eq.f32.partialorder %v1518, 8.507059e+37
  %v1520 = vand.u32 %v1137, 2147483648
  %v1521 = vor.u32 1.1754944e-38, %v1520
  %v1522 = vsel %vm1519, %v1521, %v1517
  %v1523 = vmul.f32 1.0, %v1522
  %v1524 = vrcp.pop %v1138
  %v1525 = vmul.f32 %v1138, %v1524
  %v1526 = vsub.f32 1.0, %v1525
  %v1527 = vmul.f32 %v1524, %v1526
  %v1528 = vadd.f32 %v1524, %v1527
  %vm1529 = vweird.f32 %v1138
  %vm1530 = vweird.f32 %v1524
  %vm1531 = vmor %vm1529, %vm1530
  %v1532 = vsel %vm1531, %v1524, %v1528
  %v1533 = vand.u32 2147483647, %v1138
  %vm1534 = vcmp.eq.f32.partialorder %v1533, 8.507059e+37
  %v1535 = vand.u32 %v1138, 2147483648
  %v1536 = vor.u32 1.1754944e-38, %v1535
  %v1537 = vsel %vm1534, %v1536, %v1532
  %v1538 = vmul.f32 1.0, %v1537
  %v1539 = vrcp.pop %v1139
  %v1540 = vmul.f32 %v1139, %v1539
  %v1541 = vsub.f32 1.0, %v1540
  %v1542 = vmul.f32 %v1539, %v1541
  %v1543 = vadd.f32 %v1539, %v1542
  %vm1544 = vweird.f32 %v1139
  %vm1545 = vweird.f32 %v1539
  %vm1546 = vmor %vm1544, %vm1545
  %v1547 = vsel %vm1546, %v1539, %v1543
  %v1548 = vand.u32 2147483647, %v1139
  %vm1549 = vcmp.eq.f32.partialorder %v1548, 8.507059e+37
  %v1550 = vand.u32 %v1139, 2147483648
  %v1551 = vor.u32 1.1754944e-38, %v1550
  %v1552 = vsel %vm1549, %v1551, %v1547
  %v1553 = vmul.f32 1.0, %v1552
  %v1554 = vrcp.pop %v1140
  %v1555 = vmul.f32 %v1140, %v1554
  %v1556 = vsub.f32 1.0, %v1555
  %v1557 = vmul.f32 %v1554, %v1556
  %v1558 = vadd.f32 %v1554, %v1557
  %vm1559 = vweird.f32 %v1140
  %vm1560 = vweird.f32 %v1554
  %vm1561 = vmor %vm1559, %vm1560
  %v1562 = vsel %vm1561, %v1554, %v1558
  %v1563 = vand.u32 2147483647, %v1140
  %vm1564 = vcmp.eq.f32.partialorder %v1563, 8.507059e+37
  %v1565 = vand.u32 %v1140, 2147483648
  %v1566 = vor.u32 1.1754944e-38, %v1565
  %v1567 = vsel %vm1564, %v1566, %v1562
  %v1568 = vmul.f32 1.0, %v1567
  %v1569 = vrcp.pop %v1141
  %v1570 = vmul.f32 %v1141, %v1569
  %v1571 = vsub.f32 1.0, %v1570
  %v1572 = vmul.f32 %v1569, %v1571
  %v1573 = vadd.f32 %v1569, %v1572
  %vm1574 = vweird.f32 %v1141
  %vm1575 = vweird.f32 %v1569
  %vm1576 = vmor %vm1574, %vm1575
  %v1577 = vsel %vm1576, %v1569, %v1573
  %v1578 = vand.u32 2147483647, %v1141
  %vm1579 = vcmp.eq.f32.partialorder %v1578, 8.507059e+37
  %v1580 = vand.u32 %v1141, 2147483648
  %v1581 = vor.u32 1.1754944e-38, %v1580
  %v1582 = vsel %vm1579, %v1581, %v1577
  %v1583 = vmul.f32 1.0, %v1582
  %v1584 = vrcp.pop %v1142
  %v1585 = vmul.f32 %v1142, %v1584
  %v1586 = vsub.f32 1.0, %v1585
  %v1587 = vmul.f32 %v1584, %v1586
  %v1588 = vadd.f32 %v1584, %v1587
  %vm1589 = vweird.f32 %v1142
  %vm1590 = vweird.f32 %v1584
  %vm1591 = vmor %vm1589, %vm1590
  %v1592 = vsel %vm1591, %v1584, %v1588
  %v1593 = vand.u32 2147483647, %v1142
  %vm1594 = vcmp.eq.f32.partialorder %v1593, 8.507059e+37
  %v1595 = vand.u32 %v1142, 2147483648
  %v1596 = vor.u32 1.1754944e-38, %v1595
  %v1597 = vsel %vm1594, %v1596, %v1592
  %v1598 = vmul.f32 1.0, %v1597
  %v1599 = vrcp.pop %v1143
  %v1600 = vmul.f32 %v1143, %v1599
  %v1601 = vsub.f32 1.0, %v1600
  %v1602 = vmul.f32 %v1599, %v1601
  %v1603 = vadd.f32 %v1599, %v1602
  %vm1604 = vweird.f32 %v1143
  %vm1605 = vweird.f32 %v1599
  %vm1606 = vmor %vm1604, %vm1605
  %v1607 = vsel %vm1606, %v1599, %v1603
  %v1608 = vand.u32 2147483647, %v1143
  %vm1609 = vcmp.eq.f32.partialorder %v1608, 8.507059e+37
  %v1610 = vand.u32 %v1143, 2147483648
  %v1611 = vor.u32 1.1754944e-38, %v1610
  %v1612 = vsel %vm1609, %v1611, %v1607
  %v1613 = vmul.f32 1.0, %v1612
  %v1614 = vrcp.pop %v1144
  %v1615 = vmul.f32 %v1144, %v1614
  %v1616 = vsub.f32 1.0, %v1615
  %v1617 = vmul.f32 %v1614, %v1616
  %v1618 = vadd.f32 %v1614, %v1617
  %vm1619 = vweird.f32 %v1144
  %vm1620 = vweird.f32 %v1614
  %vm1621 = vmor %vm1619, %vm1620
  %v1622 = vsel %vm1621, %v1614, %v1618
  %v1623 = vand.u32 2147483647, %v1144
  %vm1624 = vcmp.eq.f32.partialorder %v1623, 8.507059e+37
  %v1625 = vand.u32 %v1144, 2147483648
  %v1626 = vor.u32 1.1754944e-38, %v1625
  %v1627 = vsel %vm1624, %v1626, %v1622
  %v1628 = vmul.f32 1.0, %v1627
  %v1629 = vrcp.pop %v1145
  %v1630 = vmul.f32 %v1145, %v1629
  %v1631 = vsub.f32 1.0, %v1630
  %v1632 = vmul.f32 %v1629, %v1631
  %v1633 = vadd.f32 %v1629, %v1632
  %vm1634 = vweird.f32 %v1145
  %vm1635 = vweird.f32 %v1629
  %vm1636 = vmor %vm1634, %vm1635
  %v1637 = vsel %vm1636, %v1629, %v1633
  %v1638 = vand.u32 2147483647, %v1145
  %vm1639 = vcmp.eq.f32.partialorder %v1638, 8.507059e+37
  %v1640 = vand.u32 %v1145, 2147483648
  %v1641 = vor.u32 1.1754944e-38, %v1640
  %v1642 = vsel %vm1639, %v1641, %v1637
  %v1643 = vmul.f32 1.0, %v1642
  %v1644 = vrcp.pop %v1146
  %v1645 = vmul.f32 %v1146, %v1644
  %v1646 = vsub.f32 1.0, %v1645
  %v1647 = vmul.f32 %v1644, %v1646
  %v1648 = vadd.f32 %v1644, %v1647
  %vm1649 = vweird.f32 %v1146
  %vm1650 = vweird.f32 %v1644
  %vm1651 = vmor %vm1649, %vm1650
  %v1652 = vsel %vm1651, %v1644, %v1648
  %v1653 = vand.u32 2147483647, %v1146
  %vm1654 = vcmp.eq.f32.partialorder %v1653, 8.507059e+37
  %v1655 = vand.u32 %v1146, 2147483648
  %v1656 = vor.u32 1.1754944e-38, %v1655
  %v1657 = vsel %vm1654, %v1656, %v1652
  %v1658 = vmul.f32 1.0, %v1657
  %v1659 = vrcp.pop %v1147
  %v1660 = vmul.f32 %v1147, %v1659
  %v1661 = vsub.f32 1.0, %v1660
  %v1662 = vmul.f32 %v1659, %v1661
  %v1663 = vadd.f32 %v1659, %v1662
  %vm1664 = vweird.f32 %v1147
  %vm1665 = vweird.f32 %v1659
  %vm1666 = vmor %vm1664, %vm1665
  %v1667 = vsel %vm1666, %v1659, %v1663
  %v1668 = vand.u32 2147483647, %v1147
  %vm1669 = vcmp.eq.f32.partialorder %v1668, 8.507059e+37
  %v1670 = vand.u32 %v1147, 2147483648
  %v1671 = vor.u32 1.1754944e-38, %v1670
  %v1672 = vsel %vm1669, %v1671, %v1667
  %v1673 = vmul.f32 1.0, %v1672
  %v1674 = vrcp.pop %v1148
  %v1675 = vmul.f32 %v1148, %v1674
  %v1676 = vsub.f32 1.0, %v1675
  %v1677 = vmul.f32 %v1674, %v1676
  %v1678 = vadd.f32 %v1674, %v1677
  %vm1679 = vweird.f32 %v1148
  %vm1680 = vweird.f32 %v1674
  %vm1681 = vmor %vm1679, %vm1680
  %v1682 = vsel %vm1681, %v1674, %v1678
  %v1683 = vand.u32 2147483647, %v1148
  %vm1684 = vcmp.eq.f32.partialorder %v1683, 8.507059e+37
  %v1685 = vand.u32 %v1148, 2147483648
  %v1686 = vor.u32 1.1754944e-38, %v1685
  %v1687 = vsel %vm1684, %v1686, %v1682
  %v1688 = vmul.f32 1.0, %v1687
  %v1689 = vrcp.pop %v1149
  %v1690 = vmul.f32 %v1149, %v1689
  %v1691 = vsub.f32 1.0, %v1690
  %v1692 = vmul.f32 %v1689, %v1691
  %v1693 = vadd.f32 %v1689, %v1692
  %vm1694 = vweird.f32 %v1149
  %vm1695 = vweird.f32 %v1689
  %vm1696 = vmor %vm1694, %vm1695
  %v1697 = vsel %vm1696, %v1689, %v1693
  %v1698 = vand.u32 2147483647, %v1149
  %vm1699 = vcmp.eq.f32.partialorder %v1698, 8.507059e+37
  %v1700 = vand.u32 %v1149, 2147483648
  %v1701 = vor.u32 1.1754944e-38, %v1700
  %v1702 = vsel %vm1699, %v1701, %v1697
  %v1703 = vmul.f32 1.0, %v1702
  %v1704 = vrcp.pop %v1150
  %v1705 = vmul.f32 %v1150, %v1704
  %v1706 = vsub.f32 1.0, %v1705
  %v1707 = vmul.f32 %v1704, %v1706
  %v1708 = vadd.f32 %v1704, %v1707
  %vm1709 = vweird.f32 %v1150
  %vm1710 = vweird.f32 %v1704
  %vm1711 = vmor %vm1709, %vm1710
  %v1712 = vsel %vm1711, %v1704, %v1708
  %v1713 = vand.u32 2147483647, %v1150
  %vm1714 = vcmp.eq.f32.partialorder %v1713, 8.507059e+37
  %v1715 = vand.u32 %v1150, 2147483648
  %v1716 = vor.u32 1.1754944e-38, %v1715
  %v1717 = vsel %vm1714, %v1716, %v1712
  %v1718 = vmul.f32 1.0, %v1717
  %v1719 = vrcp.pop %v1151
  %v1720 = vmul.f32 %v1151, %v1719
  %v1721 = vsub.f32 1.0, %v1720
  %v1722 = vmul.f32 %v1719, %v1721
  %v1723 = vadd.f32 %v1719, %v1722
  %vm1724 = vweird.f32 %v1151
  %vm1725 = vweird.f32 %v1719
  %vm1726 = vmor %vm1724, %vm1725
  %v1727 = vsel %vm1726, %v1719, %v1723
  %v1728 = vand.u32 2147483647, %v1151
  %vm1729 = vcmp.eq.f32.partialorder %v1728, 8.507059e+37
  %v1730 = vand.u32 %v1151, 2147483648
  %v1731 = vor.u32 1.1754944e-38, %v1730
  %v1732 = vsel %vm1729, %v1731, %v1727
  %v1733 = vmul.f32 1.0, %v1732
  %v1734 = vrcp.pop %v1152
  %v1735 = vmul.f32 %v1152, %v1734
  %v1736 = vsub.f32 1.0, %v1735
  %v1737 = vmul.f32 %v1734, %v1736
  %v1738 = vadd.f32 %v1734, %v1737
  %vm1739 = vweird.f32 %v1152
  %vm1740 = vweird.f32 %v1734
  %vm1741 = vmor %vm1739, %vm1740
  %v1742 = vsel %vm1741, %v1734, %v1738
  %v1743 = vand.u32 2147483647, %v1152
  %vm1744 = vcmp.eq.f32.partialorder %v1743, 8.507059e+37
  %v1745 = vand.u32 %v1152, 2147483648
  %v1746 = vor.u32 1.1754944e-38, %v1745
  %v1747 = vsel %vm1744, %v1746, %v1742
  %v1748 = vmul.f32 1.0, %v1747
  %v1749 = vrcp.pop %v1153
  %v1750 = vmul.f32 %v1153, %v1749
  %v1751 = vsub.f32 1.0, %v1750
  %v1752 = vmul.f32 %v1749, %v1751
  %v1753 = vadd.f32 %v1749, %v1752
  %vm1754 = vweird.f32 %v1153
  %vm1755 = vweird.f32 %v1749
  %vm1756 = vmor %vm1754, %vm1755
  %v1757 = vsel %vm1756, %v1749, %v1753
  %v1758 = vand.u32 2147483647, %v1153
  %vm1759 = vcmp.eq.f32.partialorder %v1758, 8.507059e+37
  %v1760 = vand.u32 %v1153, 2147483648
  %v1761 = vor.u32 1.1754944e-38, %v1760
  %v1762 = vsel %vm1759, %v1761, %v1757
  %v1763 = vmul.f32 1.0, %v1762
  %v1764 = vrcp.pop %v1154
  %v1765 = vmul.f32 %v1154, %v1764
  %v1766 = vsub.f32 1.0, %v1765
  %v1767 = vmul.f32 %v1764, %v1766
  %v1768 = vadd.f32 %v1764, %v1767
  %vm1769 = vweird.f32 %v1154
  %vm1770 = vweird.f32 %v1764
  %vm1771 = vmor %vm1769, %vm1770
  %v1772 = vsel %vm1771, %v1764, %v1768
  %v1773 = vand.u32 2147483647, %v1154
  %vm1774 = vcmp.eq.f32.partialorder %v1773, 8.507059e+37
  %v1775 = vand.u32 %v1154, 2147483648
  %v1776 = vor.u32 1.1754944e-38, %v1775
  %v1777 = vsel %vm1774, %v1776, %v1772
  %v1778 = vmul.f32 1.0, %v1777
  %v1779 = vrcp.pop %v1155
  %v1780 = vmul.f32 %v1155, %v1779
  %v1781 = vsub.f32 1.0, %v1780
  %v1782 = vmul.f32 %v1779, %v1781
  %v1783 = vadd.f32 %v1779, %v1782
  %vm1784 = vweird.f32 %v1155
  %vm1785 = vweird.f32 %v1779
  %vm1786 = vmor %vm1784, %vm1785
  %v1787 = vsel %vm1786, %v1779, %v1783
  %v1788 = vand.u32 2147483647, %v1155
  %vm1789 = vcmp.eq.f32.partialorder %v1788, 8.507059e+37
  %v1790 = vand.u32 %v1155, 2147483648
  %v1791 = vor.u32 1.1754944e-38, %v1790
  %v1792 = vsel %vm1789, %v1791, %v1787
  %v1793 = vmul.f32 1.0, %v1792
  %v1794 = vrcp.pop %v1156
  %v1795 = vmul.f32 %v1156, %v1794
  %v1796 = vsub.f32 1.0, %v1795
  %v1797 = vmul.f32 %v1794, %v1796
  %v1798 = vadd.f32 %v1794, %v1797
  %vm1799 = vweird.f32 %v1156
  %vm1800 = vweird.f32 %v1794
  %vm1801 = vmor %vm1799, %vm1800
  %v1802 = vsel %vm1801, %v1794, %v1798
  %v1803 = vand.u32 2147483647, %v1156
  %vm1804 = vcmp.eq.f32.partialorder %v1803, 8.507059e+37
  %v1805 = vand.u32 %v1156, 2147483648
  %v1806 = vor.u32 1.1754944e-38, %v1805
  %v1807 = vsel %vm1804, %v1806, %v1802
  %v1808 = vmul.f32 1.0, %v1807
  %v1809 = vrcp.pop %v1157
  %v1810 = vmul.f32 %v1157, %v1809
  %v1811 = vsub.f32 1.0, %v1810
  %v1812 = vmul.f32 %v1809, %v1811
  %v1813 = vadd.f32 %v1809, %v1812
  %vm1814 = vweird.f32 %v1157
  %vm1815 = vweird.f32 %v1809
  %vm1816 = vmor %vm1814, %vm1815
  %v1817 = vsel %vm1816, %v1809, %v1813
  %v1818 = vand.u32 2147483647, %v1157
  %vm1819 = vcmp.eq.f32.partialorder %v1818, 8.507059e+37
  %v1820 = vand.u32 %v1157, 2147483648
  %v1821 = vor.u32 1.1754944e-38, %v1820
  %v1822 = vsel %vm1819, %v1821, %v1817
  %v1823 = vmul.f32 1.0, %v1822
  %v1824 = vrcp.pop %v1158
  %v1825 = vmul.f32 %v1158, %v1824
  %v1826 = vsub.f32 1.0, %v1825
  %v1827 = vmul.f32 %v1824, %v1826
  %v1828 = vadd.f32 %v1824, %v1827
  %vm1829 = vweird.f32 %v1158
  %vm1830 = vweird.f32 %v1824
  %vm1831 = vmor %vm1829, %vm1830
  %v1832 = vsel %vm1831, %v1824, %v1828
  %v1833 = vand.u32 2147483647, %v1158
  %vm1834 = vcmp.eq.f32.partialorder %v1833, 8.507059e+37
  %v1835 = vand.u32 %v1158, 2147483648
  %v1836 = vor.u32 1.1754944e-38, %v1835
  %v1837 = vsel %vm1834, %v1836, %v1832
  %v1838 = vmul.f32 1.0, %v1837
  %v1839 = vrcp.pop %v1159
  %v1840 = vmul.f32 %v1159, %v1839
  %v1841 = vsub.f32 1.0, %v1840
  %v1842 = vmul.f32 %v1839, %v1841
  %v1843 = vadd.f32 %v1839, %v1842
  %vm1844 = vweird.f32 %v1159
  %vm1845 = vweird.f32 %v1839
  %vm1846 = vmor %vm1844, %vm1845
  %v1847 = vsel %vm1846, %v1839, %v1843
  %v1848 = vand.u32 2147483647, %v1159
  %vm1849 = vcmp.eq.f32.partialorder %v1848, 8.507059e+37
  %v1850 = vand.u32 %v1159, 2147483648
  %v1851 = vor.u32 1.1754944e-38, %v1850
  %v1852 = vsel %vm1849, %v1851, %v1847
  %v1853 = vmul.f32 1.0, %v1852
  %v1854 = vrcp.pop %v1160
  %v1855 = vmul.f32 %v1160, %v1854
  %v1856 = vsub.f32 1.0, %v1855
  %v1857 = vmul.f32 %v1854, %v1856
  %v1858 = vadd.f32 %v1854, %v1857
  %vm1859 = vweird.f32 %v1160
  %vm1860 = vweird.f32 %v1854
  %vm1861 = vmor %vm1859, %vm1860
  %v1862 = vsel %vm1861, %v1854, %v1858
  %v1863 = vand.u32 2147483647, %v1160
  %vm1864 = vcmp.eq.f32.partialorder %v1863, 8.507059e+37
  %v1865 = vand.u32 %v1160, 2147483648
  %v1866 = vor.u32 1.1754944e-38, %v1865
  %v1867 = vsel %vm1864, %v1866, %v1862
  %v1868 = vmul.f32 1.0, %v1867
  %v1869 = vrcp.pop %v1161
  %v1870 = vmul.f32 %v1161, %v1869
  %v1871 = vsub.f32 1.0, %v1870
  %v1872 = vmul.f32 %v1869, %v1871
  %v1873 = vadd.f32 %v1869, %v1872
  %vm1874 = vweird.f32 %v1161
  %vm1875 = vweird.f32 %v1869
  %vm1876 = vmor %vm1874, %vm1875
  %v1877 = vsel %vm1876, %v1869, %v1873
  %v1878 = vand.u32 2147483647, %v1161
  %vm1879 = vcmp.eq.f32.partialorder %v1878, 8.507059e+37
  %v1880 = vand.u32 %v1161, 2147483648
  %v1881 = vor.u32 1.1754944e-38, %v1880
  %v1882 = vsel %vm1879, %v1881, %v1877
  %v1883 = vmul.f32 1.0, %v1882
  %v1884 = vrcp.pop %v1162
  %v1885 = vmul.f32 %v1162, %v1884
  %v1886 = vsub.f32 1.0, %v1885
  %v1887 = vmul.f32 %v1884, %v1886
  %v1888 = vadd.f32 %v1884, %v1887
  %vm1889 = vweird.f32 %v1162
  %vm1890 = vweird.f32 %v1884
  %vm1891 = vmor %vm1889, %vm1890
  %v1892 = vsel %vm1891, %v1884, %v1888
  %v1893 = vand.u32 2147483647, %v1162
  %vm1894 = vcmp.eq.f32.partialorder %v1893, 8.507059e+37
  %v1895 = vand.u32 %v1162, 2147483648
  %v1896 = vor.u32 1.1754944e-38, %v1895
  %v1897 = vsel %vm1894, %v1896, %v1892
  %v1898 = vmul.f32 1.0, %v1897
  %v1899 = vrcp.pop %v1163
  %v1900 = vmul.f32 %v1163, %v1899
  %v1901 = vsub.f32 1.0, %v1900
  %v1902 = vmul.f32 %v1899, %v1901
  %v1903 = vadd.f32 %v1899, %v1902
  %vm1904 = vweird.f32 %v1163
  %vm1905 = vweird.f32 %v1899
  %vm1906 = vmor %vm1904, %vm1905
  %v1907 = vsel %vm1906, %v1899, %v1903
  %v1908 = vand.u32 2147483647, %v1163
  %vm1909 = vcmp.eq.f32.partialorder %v1908, 8.507059e+37
  %v1910 = vand.u32 %v1163, 2147483648
  %v1911 = vor.u32 1.1754944e-38, %v1910
  %v1912 = vsel %vm1909, %v1911, %v1907
  %v1913 = vmul.f32 1.0, %v1912
  %v1914 = vrcp.pop %v1164
  %v1915 = vmul.f32 %v1164, %v1914
  %v1916 = vsub.f32 1.0, %v1915
  %v1917 = vmul.f32 %v1914, %v1916
  %v1918 = vadd.f32 %v1914, %v1917
  %vm1919 = vweird.f32 %v1164
  %vm1920 = vweird.f32 %v1914
  %vm1921 = vmor %vm1919, %vm1920
  %v1922 = vsel %vm1921, %v1914, %v1918
  %v1923 = vand.u32 2147483647, %v1164
  %vm1924 = vcmp.eq.f32.partialorder %v1923, 8.507059e+37
  %v1925 = vand.u32 %v1164, 2147483648
  %v1926 = vor.u32 1.1754944e-38, %v1925
  %v1927 = vsel %vm1924, %v1926, %v1922
  %v1928 = vmul.f32 1.0, %v1927
  %v1929 = vrcp.pop %v1165
  %v1930 = vmul.f32 %v1165, %v1929
  %v1931 = vsub.f32 1.0, %v1930
  %v1932 = vmul.f32 %v1929, %v1931
  %v1933 = vadd.f32 %v1929, %v1932
  %vm1934 = vweird.f32 %v1165
  %vm1935 = vweird.f32 %v1929
  %vm1936 = vmor %vm1934, %vm1935
  %v1937 = vsel %vm1936, %v1929, %v1933
  %v1938 = vand.u32 2147483647, %v1165
  %vm1939 = vcmp.eq.f32.partialorder %v1938, 8.507059e+37
  %v1940 = vand.u32 %v1165, 2147483648
  %v1941 = vor.u32 1.1754944e-38, %v1940
  %v1942 = vsel %vm1939, %v1941, %v1937
  %v1943 = vmul.f32 1.0, %v1942
  %v1944 = vrcp.pop %v1166
  %v1945 = vmul.f32 %v1166, %v1944
  %v1946 = vsub.f32 1.0, %v1945
  %v1947 = vmul.f32 %v1944, %v1946
  %v1948 = vadd.f32 %v1944, %v1947
  %vm1949 = vweird.f32 %v1166
  %vm1950 = vweird.f32 %v1944
  %vm1951 = vmor %vm1949, %vm1950
  %v1952 = vsel %vm1951, %v1944, %v1948
  %v1953 = vand.u32 2147483647, %v1166
  %vm1954 = vcmp.eq.f32.partialorder %v1953, 8.507059e+37
  %v1955 = vand.u32 %v1166, 2147483648
  %v1956 = vor.u32 1.1754944e-38, %v1955
  %v1957 = vsel %vm1954, %v1956, %v1952
  %v1958 = vmul.f32 1.0, %v1957
  %v1959 = vrcp.pop %v1167
  %v1960 = vmul.f32 %v1167, %v1959
  %v1961 = vsub.f32 1.0, %v1960
  %v1962 = vmul.f32 %v1959, %v1961
  %v1963 = vadd.f32 %v1959, %v1962
  %vm1964 = vweird.f32 %v1167
  %vm1965 = vweird.f32 %v1959
  %vm1966 = vmor %vm1964, %vm1965
  %v1967 = vsel %vm1966, %v1959, %v1963
  %v1968 = vand.u32 2147483647, %v1167
  %vm1969 = vcmp.eq.f32.partialorder %v1968, 8.507059e+37
  %v1970 = vand.u32 %v1167, 2147483648
  %v1971 = vor.u32 1.1754944e-38, %v1970
  %v1972 = vsel %vm1969, %v1971, %v1967
  %v1973 = vmul.f32 1.0, %v1972
  %v1974 = vrcp.pop %v1168
  %v1975 = vmul.f32 %v1168, %v1974
  %v1976 = vsub.f32 1.0, %v1975
  %v1977 = vmul.f32 %v1974, %v1976
  %v1978 = vadd.f32 %v1974, %v1977
  %vm1979 = vweird.f32 %v1168
  %vm1980 = vweird.f32 %v1974
  %vm1981 = vmor %vm1979, %vm1980
  %v1982 = vsel %vm1981, %v1974, %v1978
  %v1983 = vand.u32 2147483647, %v1168
  %vm1984 = vcmp.eq.f32.partialorder %v1983, 8.507059e+37
  %v1985 = vand.u32 %v1168, 2147483648
  %v1986 = vor.u32 1.1754944e-38, %v1985
  %v1987 = vsel %vm1984, %v1986, %v1982
  %v1988 = vmul.f32 1.0, %v1987
  %v1989 = vrcp.pop %v1169
  %v1990 = vmul.f32 %v1169, %v1989
  %v1991 = vsub.f32 1.0, %v1990
  %v1992 = vmul.f32 %v1989, %v1991
  %v1993 = vadd.f32 %v1989, %v1992
  %vm1994 = vweird.f32 %v1169
  %vm1995 = vweird.f32 %v1989
  %vm1996 = vmor %vm1994, %vm1995
  %v1997 = vsel %vm1996, %v1989, %v1993
  %v1998 = vand.u32 2147483647, %v1169
  %vm1999 = vcmp.eq.f32.partialorder %v1998, 8.507059e+37
  %v2000 = vand.u32 %v1169, 2147483648
  %v2001 = vor.u32 1.1754944e-38, %v2000
  %v2002 = vsel %vm1999, %v2001, %v1997
  %v2003 = vmul.f32 1.0, %v2002
  %v2004 = vrcp.pop %v1170
  %v2005 = vmul.f32 %v1170, %v2004
  %v2006 = vsub.f32 1.0, %v2005
  %v2007 = vmul.f32 %v2004, %v2006
  %v2008 = vadd.f32 %v2004, %v2007
  %vm2009 = vweird.f32 %v1170
  %vm2010 = vweird.f32 %v2004
  %vm2011 = vmor %vm2009, %vm2010
  %v2012 = vsel %vm2011, %v2004, %v2008
  %v2013 = vand.u32 2147483647, %v1170
  %vm2014 = vcmp.eq.f32.partialorder %v2013, 8.507059e+37
  %v2015 = vand.u32 %v1170, 2147483648
  %v2016 = vor.u32 1.1754944e-38, %v2015
  %v2017 = vsel %vm2014, %v2016, %v2012
  %v2018 = vmul.f32 1.0, %v2017
  %v2019 = vrcp.pop %v1171
  %v2020 = vmul.f32 %v1171, %v2019
  %v2021 = vsub.f32 1.0, %v2020
  %v2022 = vmul.f32 %v2019, %v2021
  %v2023 = vadd.f32 %v2019, %v2022
  %vm2024 = vweird.f32 %v1171
  %vm2025 = vweird.f32 %v2019
  %vm2026 = vmor %vm2024, %vm2025
  %v2027 = vsel %vm2026, %v2019, %v2023
  %v2028 = vand.u32 2147483647, %v1171
  %vm2029 = vcmp.eq.f32.partialorder %v2028, 8.507059e+37
  %v2030 = vand.u32 %v1171, 2147483648
  %v2031 = vor.u32 1.1754944e-38, %v2030
  %v2032 = vsel %vm2029, %v2031, %v2027
  %v2033 = vmul.f32 1.0, %v2032
  %v2034 = vrcp.pop %v1172
  %v2035 = vmul.f32 %v1172, %v2034
  %v2036 = vsub.f32 1.0, %v2035
  %v2037 = vmul.f32 %v2034, %v2036
  %v2038 = vadd.f32 %v2034, %v2037
  %vm2039 = vweird.f32 %v1172
  %vm2040 = vweird.f32 %v2034
  %vm2041 = vmor %vm2039, %vm2040
  %v2042 = vsel %vm2041, %v2034, %v2038
  %v2043 = vand.u32 2147483647, %v1172
  %vm2044 = vcmp.eq.f32.partialorder %v2043, 8.507059e+37
  %v2045 = vand.u32 %v1172, 2147483648
  %v2046 = vor.u32 1.1754944e-38, %v2045
  %v2047 = vsel %vm2044, %v2046, %v2042
  %v2048 = vmul.f32 1.0, %v2047
  %v2049 = vrcp.pop %v1173
  %v2050 = vmul.f32 %v1173, %v2049
  %v2051 = vsub.f32 1.0, %v2050
  %v2052 = vmul.f32 %v2049, %v2051
  %v2053 = vadd.f32 %v2049, %v2052
  %vm2054 = vweird.f32 %v1173
  %vm2055 = vweird.f32 %v2049
  %vm2056 = vmor %vm2054, %vm2055
  %v2057 = vsel %vm2056, %v2049, %v2053
  %v2058 = vand.u32 2147483647, %v1173
  %vm2059 = vcmp.eq.f32.partialorder %v2058, 8.507059e+37
  %v2060 = vand.u32 %v1173, 2147483648
  %v2061 = vor.u32 1.1754944e-38, %v2060
  %v2062 = vsel %vm2059, %v2061, %v2057
  %v2063 = vmul.f32 1.0, %v2062
  %v2064 = vrcp.pop %v1174
  %v2065 = vmul.f32 %v1174, %v2064
  %v2066 = vsub.f32 1.0, %v2065
  %v2067 = vmul.f32 %v2064, %v2066
  %v2068 = vadd.f32 %v2064, %v2067
  %vm2069 = vweird.f32 %v1174
  %vm2070 = vweird.f32 %v2064
  %vm2071 = vmor %vm2069, %vm2070
  %v2072 = vsel %vm2071, %v2064, %v2068
  %v2073 = vand.u32 2147483647, %v1174
  %vm2074 = vcmp.eq.f32.partialorder %v2073, 8.507059e+37
  %v2075 = vand.u32 %v1174, 2147483648
  %v2076 = vor.u32 1.1754944e-38, %v2075
  %v2077 = vsel %vm2074, %v2076, %v2072
  %v2078 = vmul.f32 1.0, %v2077
  %v2079 = vrcp.pop %v1175
  %v2080 = vmul.f32 %v1175, %v2079
  %v2081 = vsub.f32 1.0, %v2080
  %v2082 = vmul.f32 %v2079, %v2081
  %v2083 = vadd.f32 %v2079, %v2082
  %vm2084 = vweird.f32 %v1175
  %vm2085 = vweird.f32 %v2079
  %vm2086 = vmor %vm2084, %vm2085
  %v2087 = vsel %vm2086, %v2079, %v2083
  %v2088 = vand.u32 2147483647, %v1175
  %vm2089 = vcmp.eq.f32.partialorder %v2088, 8.507059e+37
  %v2090 = vand.u32 %v1175, 2147483648
  %v2091 = vor.u32 1.1754944e-38, %v2090
  %v2092 = vsel %vm2089, %v2091, %v2087
  %v2093 = vmul.f32 1.0, %v2092
  %v2094 = vrcp.pop %v1176
  %v2095 = vmul.f32 %v1176, %v2094
  %v2096 = vsub.f32 1.0, %v2095
  %v2097 = vmul.f32 %v2094, %v2096
  %v2098 = vadd.f32 %v2094, %v2097
  %vm2099 = vweird.f32 %v1176
  %vm2100 = vweird.f32 %v2094
  %vm2101 = vmor %vm2099, %vm2100
  %v2102 = vsel %vm2101, %v2094, %v2098
  %v2103 = vand.u32 2147483647, %v1176
  %vm2104 = vcmp.eq.f32.partialorder %v2103, 8.507059e+37
  %v2105 = vand.u32 %v1176, 2147483648
  %v2106 = vor.u32 1.1754944e-38, %v2105
  %v2107 = vsel %vm2104, %v2106, %v2102
  %v2108 = vmul.f32 1.0, %v2107
  %v2109 = vrcp.pop %v1177
  %v2110 = vmul.f32 %v1177, %v2109
  %v2111 = vsub.f32 1.0, %v2110
  %v2112 = vmul.f32 %v2109, %v2111
  %v2113 = vadd.f32 %v2109, %v2112
  %vm2114 = vweird.f32 %v1177
  %vm2115 = vweird.f32 %v2109
  %vm2116 = vmor %vm2114, %vm2115
  %v2117 = vsel %vm2116, %v2109, %v2113
  %v2118 = vand.u32 2147483647, %v1177
  %vm2119 = vcmp.eq.f32.partialorder %v2118, 8.507059e+37
  %v2120 = vand.u32 %v1177, 2147483648
  %v2121 = vor.u32 1.1754944e-38, %v2120
  %v2122 = vsel %vm2119, %v2121, %v2117
  %v2123 = vmul.f32 1.0, %v2122
  %v2124 = vrcp.pop %v1178
  %v2125 = vmul.f32 %v1178, %v2124
  %v2126 = vsub.f32 1.0, %v2125
  %v2127 = vmul.f32 %v2124, %v2126
  %v2128 = vadd.f32 %v2124, %v2127
  %vm2129 = vweird.f32 %v1178
  %vm2130 = vweird.f32 %v2124
  %vm2131 = vmor %vm2129, %vm2130
  %v2132 = vsel %vm2131, %v2124, %v2128
  %v2133 = vand.u32 2147483647, %v1178
  %vm2134 = vcmp.eq.f32.partialorder %v2133, 8.507059e+37
  %v2135 = vand.u32 %v1178, 2147483648
  %v2136 = vor.u32 1.1754944e-38, %v2135
  %v2137 = vsel %vm2134, %v2136, %v2132
  %v2138 = vmul.f32 1.0, %v2137
  %vm2139 = vcmp.ge.s32.totalorder %v922, 5
  %vm2140 = vcmp.lt.s32.totalorder %v922, 21
  %vm2141 = vmand %vm2139, %vm2140
  %v2142 = vsel %vm2141, %v762, 0.0
  %v2143 = vsel %vm2141, %v764, 0.0
  %v2144 = vsel %vm2141, %v767, 0.0
  %v2145 = vsel %vm2141, %v769, 0.0
  %v2146 = vsel %vm2141, %v772, 0.0
  %v2147 = vsel %vm2141, %v774, 0.0
  %v2148 = vsel %vm2141, %v777, 0.0
  %v2149 = vsel %vm2141, %v779, 0.0
  %v2150 = vsel %vm2141, %v782, 0.0
  %v2151 = vsel %vm2141, %v784, 0.0
  %v2152 = vsel %vm2141, %v787, 0.0
  %v2153 = vsel %vm2141, %v789, 0.0
  %v2154 = vsel %vm2141, %v792, 0.0
  %v2155 = vsel %vm2141, %v794, 0.0
  %v2156 = vsel %vm2141, %v797, 0.0
  %v2157 = vsel %vm2141, %v799, 0.0
  %v2158 = vsel %vm2141, %v802, 0.0
  %v2159 = vsel %vm2141, %v804, 0.0
  %v2160 = vsel %vm2141, %v807, 0.0
  %v2161 = vsel %vm2141, %v809, 0.0
  %v2162 = vsel %vm2141, %v812, 0.0
  %v2163 = vsel %vm2141, %v814, 0.0
  %v2164 = vsel %vm2141, %v817, 0.0
  %v2165 = vsel %vm2141, %v819, 0.0
  %v2166 = vsel %vm2141, %v822, 0.0
  %v2167 = vsel %vm2141, %v824, 0.0
  %v2168 = vsel %vm2141, %v827, 0.0
  %v2169 = vsel %vm2141, %v829, 0.0
  %v2170 = vsel %vm2141, %v832, 0.0
  %v2171 = vsel %vm2141, %v834, 0.0
  %v2172 = vsel %vm2141, %v837, 0.0
  %v2173 = vsel %vm2141, %v839, 0.0
  %v2174 = vsel %vm2141, %v842, 0.0
  %v2175 = vsel %vm2141, %v844, 0.0
  %v2176 = vsel %vm2141, %v847, 0.0
  %v2177 = vsel %vm2141, %v849, 0.0
  %v2178 = vsel %vm2141, %v852, 0.0
  %v2179 = vsel %vm2141, %v854, 0.0
  %v2180 = vsel %vm2141, %v857, 0.0
  %v2181 = vsel %vm2141, %v859, 0.0
  %v2182 = vsel %vm2141, %v862, 0.0
  %v2183 = vsel %vm2141, %v864, 0.0
  %v2184 = vsel %vm2141, %v867, 0.0
  %v2185 = vsel %vm2141, %v869, 0.0
  %v2186 = vsel %vm2141, %v872, 0.0
  %v2187 = vsel %vm2141, %v874, 0.0
  %v2188 = vsel %vm2141, %v877, 0.0
  %v2189 = vsel %vm2141, %v879, 0.0
  %v2190 = vsel %vm2141, %v882, 0.0
  %v2191 = vsel %vm2141, %v884, 0.0
  %v2192 = vsel %vm2141, %v887, 0.0
  %v2193 = vsel %vm2141, %v889, 0.0
  %v2194 = vsel %vm2141, %v892, 0.0
  %v2195 = vsel %vm2141, %v894, 0.0
  %v2196 = vsel %vm2141, %v897, 0.0
  %v2197 = vsel %vm2141, %v899, 0.0
  %v2198 = vsel %vm2141, %v902, 0.0
  %v2199 = vsel %vm2141, %v904, 0.0
  %v2200 = vsel %vm2141, %v907, 0.0
  %v2201 = vsel %vm2141, %v909, 0.0
  %v2202 = vsel %vm2141, %v912, 0.0
  %v2203 = vsel %vm2141, %v914, 0.0
  %v2204 = vsel %vm2141, %v917, 0.0
  %v2205 = vsel %vm2141, %v919, 0.0
  %v2206 = vmul.f32 %v2142, %v2142
  %v2207 = vmul.f32 %v2143, %v2143
  %v2208 = vmul.f32 %v2144, %v2144
  %v2209 = vmul.f32 %v2145, %v2145
  %v2210 = vmul.f32 %v2146, %v2146
  %v2211 = vmul.f32 %v2147, %v2147
  %v2212 = vmul.f32 %v2148, %v2148
  %v2213 = vmul.f32 %v2149, %v2149
  %v2214 = vmul.f32 %v2150, %v2150
  %v2215 = vmul.f32 %v2151, %v2151
  %v2216 = vmul.f32 %v2152, %v2152
  %v2217 = vmul.f32 %v2153, %v2153
  %v2218 = vmul.f32 %v2154, %v2154
  %v2219 = vmul.f32 %v2155, %v2155
  %v2220 = vmul.f32 %v2156, %v2156
  %v2221 = vmul.f32 %v2157, %v2157
  %v2222 = vmul.f32 %v2158, %v2158
  %v2223 = vmul.f32 %v2159, %v2159
  %v2224 = vmul.f32 %v2160, %v2160
  %v2225 = vmul.f32 %v2161, %v2161
  %v2226 = vmul.f32 %v2162, %v2162
  %v2227 = vmul.f32 %v2163, %v2163
  %v2228 = vmul.f32 %v2164, %v2164
  %v2229 = vmul.f32 %v2165, %v2165
  %v2230 = vmul.f32 %v2166, %v2166
  %v2231 = vmul.f32 %v2167, %v2167
  %v2232 = vmul.f32 %v2168, %v2168
  %v2233 = vmul.f32 %v2169, %v2169
  %v2234 = vmul.f32 %v2170, %v2170
  %v2235 = vmul.f32 %v2171, %v2171
  %v2236 = vmul.f32 %v2172, %v2172
  %v2237 = vmul.f32 %v2173, %v2173
  %v2238 = vmul.f32 %v2174, %v2174
  %v2239 = vmul.f32 %v2175, %v2175
  %v2240 = vmul.f32 %v2176, %v2176
  %v2241 = vmul.f32 %v2177, %v2177
  %v2242 = vmul.f32 %v2178, %v2178
  %v2243 = vmul.f32 %v2179, %v2179
  %v2244 = vmul.f32 %v2180, %v2180
  %v2245 = vmul.f32 %v2181, %v2181
  %v2246 = vmul.f32 %v2182, %v2182
  %v2247 = vmul.f32 %v2183, %v2183
  %v2248 = vmul.f32 %v2184, %v2184
  %v2249 = vmul.f32 %v2185, %v2185
  %v2250 = vmul.f32 %v2186, %v2186
  %v2251 = vmul.f32 %v2187, %v2187
  %v2252 = vmul.f32 %v2188, %v2188
  %v2253 = vmul.f32 %v2189, %v2189
  %v2254 = vmul.f32 %v2190, %v2190
  %v2255 = vmul.f32 %v2191, %v2191
  %v2256 = vmul.f32 %v2192, %v2192
  %v2257 = vmul.f32 %v2193, %v2193
  %v2258 = vmul.f32 %v2194, %v2194
  %v2259 = vmul.f32 %v2195, %v2195
  %v2260 = vmul.f32 %v2196, %v2196
  %v2261 = vmul.f32 %v2197, %v2197
  %v2262 = vmul.f32 %v2198, %v2198
  %v2263 = vmul.f32 %v2199, %v2199
  %v2264 = vmul.f32 %v2200, %v2200
  %v2265 = vmul.f32 %v2201, %v2201
  %v2266 = vmul.f32 %v2202, %v2202
  %v2267 = vmul.f32 %v2203, %v2203
  %v2268 = vmul.f32 %v2204, %v2204
  %v2269 = vmul.f32 %v2205, %v2205
  %2270 = vadd.xlane.f32.xlu0 %v2206
  %v2271 = vpop.xlane.xlu0 %2270
  %2272 = vadd.xlane.f32.xlu0 %v2207
  %v2273 = vpop.xlane.xlu0 %2272
  %2274 = vadd.xlane.f32.xlu0 %v2208
  %v2275 = vpop.xlane.xlu0 %2274
  %2276 = vadd.xlane.f32.xlu0 %v2209
  %v2277 = vpop.xlane.xlu0 %2276
  %2278 = vadd.xlane.f32.xlu0 %v2210
  %v2279 = vpop.xlane.xlu0 %2278
  %2280 = vadd.xlane.f32.xlu0 %v2211
  %v2281 = vpop.xlane.xlu0 %2280
  %2282 = vadd.xlane.f32.xlu0 %v2212
  %v2283 = vpop.xlane.xlu0 %2282
  %2284 = vadd.xlane.f32.xlu0 %v2213
  %v2285 = vpop.xlane.xlu0 %2284
  %2286 = vadd.xlane.f32.xlu0 %v2214
  %v2287 = vpop.xlane.xlu0 %2286
  %2288 = vadd.xlane.f32.xlu0 %v2215
  %v2289 = vpop.xlane.xlu0 %2288
  %2290 = vadd.xlane.f32.xlu0 %v2216
  %v2291 = vpop.xlane.xlu0 %2290
  %2292 = vadd.xlane.f32.xlu0 %v2217
  %v2293 = vpop.xlane.xlu0 %2292
  %2294 = vadd.xlane.f32.xlu0 %v2218
  %v2295 = vpop.xlane.xlu0 %2294
  %2296 = vadd.xlane.f32.xlu0 %v2219
  %v2297 = vpop.xlane.xlu0 %2296
  %2298 = vadd.xlane.f32.xlu0 %v2220
  %v2299 = vpop.xlane.xlu0 %2298
  %2300 = vadd.xlane.f32.xlu0 %v2221
  %v2301 = vpop.xlane.xlu0 %2300
  %2302 = vadd.xlane.f32.xlu0 %v2222
  %v2303 = vpop.xlane.xlu0 %2302
  %2304 = vadd.xlane.f32.xlu0 %v2223
  %v2305 = vpop.xlane.xlu0 %2304
  %2306 = vadd.xlane.f32.xlu0 %v2224
  %v2307 = vpop.xlane.xlu0 %2306
  %2308 = vadd.xlane.f32.xlu0 %v2225
  %v2309 = vpop.xlane.xlu0 %2308
  %2310 = vadd.xlane.f32.xlu0 %v2226
  %v2311 = vpop.xlane.xlu0 %2310
  %2312 = vadd.xlane.f32.xlu0 %v2227
  %v2313 = vpop.xlane.xlu0 %2312
  %2314 = vadd.xlane.f32.xlu0 %v2228
  %v2315 = vpop.xlane.xlu0 %2314
  %2316 = vadd.xlane.f32.xlu0 %v2229
  %v2317 = vpop.xlane.xlu0 %2316
  %2318 = vadd.xlane.f32.xlu0 %v2230
  %v2319 = vpop.xlane.xlu0 %2318
  %2320 = vadd.xlane.f32.xlu0 %v2231
  %v2321 = vpop.xlane.xlu0 %2320
  %2322 = vadd.xlane.f32.xlu0 %v2232
  %v2323 = vpop.xlane.xlu0 %2322
  %2324 = vadd.xlane.f32.xlu0 %v2233
  %v2325 = vpop.xlane.xlu0 %2324
  %2326 = vadd.xlane.f32.xlu0 %v2234
  %v2327 = vpop.xlane.xlu0 %2326
  %2328 = vadd.xlane.f32.xlu0 %v2235
  %v2329 = vpop.xlane.xlu0 %2328
  %2330 = vadd.xlane.f32.xlu0 %v2236
  %v2331 = vpop.xlane.xlu0 %2330
  %2332 = vadd.xlane.f32.xlu0 %v2237
  %v2333 = vpop.xlane.xlu0 %2332
  %2334 = vadd.xlane.f32.xlu0 %v2238
  %v2335 = vpop.xlane.xlu0 %2334
  %2336 = vadd.xlane.f32.xlu0 %v2239
  %v2337 = vpop.xlane.xlu0 %2336
  %2338 = vadd.xlane.f32.xlu0 %v2240
  %v2339 = vpop.xlane.xlu0 %2338
  %2340 = vadd.xlane.f32.xlu0 %v2241
  %v2341 = vpop.xlane.xlu0 %2340
  %2342 = vadd.xlane.f32.xlu0 %v2242
  %v2343 = vpop.xlane.xlu0 %2342
  %2344 = vadd.xlane.f32.xlu0 %v2243
  %v2345 = vpop.xlane.xlu0 %2344
  %2346 = vadd.xlane.f32.xlu0 %v2244
  %v2347 = vpop.xlane.xlu0 %2346
  %2348 = vadd.xlane.f32.xlu0 %v2245
  %v2349 = vpop.xlane.xlu0 %2348
  %2350 = vadd.xlane.f32.xlu0 %v2246
  %v2351 = vpop.xlane.xlu0 %2350
  %2352 = vadd.xlane.f32.xlu0 %v2247
  %v2353 = vpop.xlane.xlu0 %2352
  %2354 = vadd.xlane.f32.xlu0 %v2248
  %v2355 = vpop.xlane.xlu0 %2354
  %2356 = vadd.xlane.f32.xlu0 %v2249
  %v2357 = vpop.xlane.xlu0 %2356
  %2358 = vadd.xlane.f32.xlu0 %v2250
  %v2359 = vpop.xlane.xlu0 %2358
  %2360 = vadd.xlane.f32.xlu0 %v2251
  %v2361 = vpop.xlane.xlu0 %2360
  %2362 = vadd.xlane.f32.xlu0 %v2252
  %v2363 = vpop.xlane.xlu0 %2362
  %2364 = vadd.xlane.f32.xlu0 %v2253
  %v2365 = vpop.xlane.xlu0 %2364
  %2366 = vadd.xlane.f32.xlu0 %v2254
  %v2367 = vpop.xlane.xlu0 %2366
  %2368 = vadd.xlane.f32.xlu0 %v2255
  %v2369 = vpop.xlane.xlu0 %2368
  %2370 = vadd.xlane.f32.xlu0 %v2256
  %v2371 = vpop.xlane.xlu0 %2370
  %2372 = vadd.xlane.f32.xlu0 %v2257
  %v2373 = vpop.xlane.xlu0 %2372
  %2374 = vadd.xlane.f32.xlu0 %v2258
  %v2375 = vpop.xlane.xlu0 %2374
  %2376 = vadd.xlane.f32.xlu0 %v2259
  %v2377 = vpop.xlane.xlu0 %2376
  %2378 = vadd.xlane.f32.xlu0 %v2260
  %v2379 = vpop.xlane.xlu0 %2378
  %2380 = vadd.xlane.f32.xlu0 %v2261
  %v2381 = vpop.xlane.xlu0 %2380
  %2382 = vadd.xlane.f32.xlu0 %v2262
  %v2383 = vpop.xlane.xlu0 %2382
  %2384 = vadd.xlane.f32.xlu0 %v2263
  %v2385 = vpop.xlane.xlu0 %2384
  %2386 = vadd.xlane.f32.xlu0 %v2264
  %v2387 = vpop.xlane.xlu0 %2386
  %2388 = vadd.xlane.f32.xlu0 %v2265
  %v2389 = vpop.xlane.xlu0 %2388
  %2390 = vadd.xlane.f32.xlu0 %v2266
  %v2391 = vpop.xlane.xlu0 %2390
  %2392 = vadd.xlane.f32.xlu0 %v2267
  %v2393 = vpop.xlane.xlu0 %2392
  %2394 = vadd.xlane.f32.xlu0 %v2268
  %v2395 = vpop.xlane.xlu0 %2394
  %2396 = vadd.xlane.f32.xlu0 %v2269
  %v2397 = vpop.xlane.xlu0 %2396
  %v2398 = vadd.f32 %v2271, 1e-12
  %v2399 = vadd.f32 %v2273, 1e-12
  %v2400 = vadd.f32 %v2275, 1e-12
  %v2401 = vadd.f32 %v2277, 1e-12
  %v2402 = vadd.f32 %v2279, 1e-12
  %v2403 = vadd.f32 %v2281, 1e-12
  %v2404 = vadd.f32 %v2283, 1e-12
  %v2405 = vadd.f32 %v2285, 1e-12
  %v2406 = vadd.f32 %v2287, 1e-12
  %v2407 = vadd.f32 %v2289, 1e-12
  %v2408 = vadd.f32 %v2291, 1e-12
  %v2409 = vadd.f32 %v2293, 1e-12
  %v2410 = vadd.f32 %v2295, 1e-12
  %v2411 = vadd.f32 %v2297, 1e-12
  %v2412 = vadd.f32 %v2299, 1e-12
  %v2413 = vadd.f32 %v2301, 1e-12
  %v2414 = vadd.f32 %v2303, 1e-12
  %v2415 = vadd.f32 %v2305, 1e-12
  %v2416 = vadd.f32 %v2307, 1e-12
  %v2417 = vadd.f32 %v2309, 1e-12
  %v2418 = vadd.f32 %v2311, 1e-12
  %v2419 = vadd.f32 %v2313, 1e-12
  %v2420 = vadd.f32 %v2315, 1e-12
  %v2421 = vadd.f32 %v2317, 1e-12
  %v2422 = vadd.f32 %v2319, 1e-12
  %v2423 = vadd.f32 %v2321, 1e-12
  %v2424 = vadd.f32 %v2323, 1e-12
  %v2425 = vadd.f32 %v2325, 1e-12
  %v2426 = vadd.f32 %v2327, 1e-12
  %v2427 = vadd.f32 %v2329, 1e-12
  %v2428 = vadd.f32 %v2331, 1e-12
  %v2429 = vadd.f32 %v2333, 1e-12
  %v2430 = vadd.f32 %v2335, 1e-12
  %v2431 = vadd.f32 %v2337, 1e-12
  %v2432 = vadd.f32 %v2339, 1e-12
  %v2433 = vadd.f32 %v2341, 1e-12
  %v2434 = vadd.f32 %v2343, 1e-12
  %v2435 = vadd.f32 %v2345, 1e-12
  %v2436 = vadd.f32 %v2347, 1e-12
  %v2437 = vadd.f32 %v2349, 1e-12
  %v2438 = vadd.f32 %v2351, 1e-12
  %v2439 = vadd.f32 %v2353, 1e-12
  %v2440 = vadd.f32 %v2355, 1e-12
  %v2441 = vadd.f32 %v2357, 1e-12
  %v2442 = vadd.f32 %v2359, 1e-12
  %v2443 = vadd.f32 %v2361, 1e-12
  %v2444 = vadd.f32 %v2363, 1e-12
  %v2445 = vadd.f32 %v2365, 1e-12
  %v2446 = vadd.f32 %v2367, 1e-12
  %v2447 = vadd.f32 %v2369, 1e-12
  %v2448 = vadd.f32 %v2371, 1e-12
  %v2449 = vadd.f32 %v2373, 1e-12
  %v2450 = vadd.f32 %v2375, 1e-12
  %v2451 = vadd.f32 %v2377, 1e-12
  %v2452 = vadd.f32 %v2379, 1e-12
  %v2453 = vadd.f32 %v2381, 1e-12
  %v2454 = vadd.f32 %v2383, 1e-12
  %v2455 = vadd.f32 %v2385, 1e-12
  %v2456 = vadd.f32 %v2387, 1e-12
  %v2457 = vadd.f32 %v2389, 1e-12
  %v2458 = vadd.f32 %v2391, 1e-12
  %v2459 = vadd.f32 %v2393, 1e-12
  %v2460 = vadd.f32 %v2395, 1e-12
  %v2461 = vadd.f32 %v2397, 1e-12
  %v2462 = vrsqrt.pop %v2398
  %v2463 = vmul.f32 %v2462, %v2398
  %v2464 = vmul.f32 %v2463, %v2462
  %v2465 = vmul.f32 0.5, %v2464
  %v2466 = vsub.f32 1.5, %v2465
  %v2467 = vmul.f32 %v2462, %v2466
  %vm2468 = vweird.f32 %v2398
  %vm2469 = vweird.f32 %v2462
  %vm2470 = vmor %vm2468, %vm2469
  %v2471 = vsel %vm2470, %v2462, %v2467
  %v2472 = vrsqrt.pop %v2399
  %v2473 = vmul.f32 %v2472, %v2399
  %v2474 = vmul.f32 %v2473, %v2472
  %v2475 = vmul.f32 0.5, %v2474
  %v2476 = vsub.f32 1.5, %v2475
  %v2477 = vmul.f32 %v2472, %v2476
  %vm2478 = vweird.f32 %v2399
  %vm2479 = vweird.f32 %v2472
  %vm2480 = vmor %vm2478, %vm2479
  %v2481 = vsel %vm2480, %v2472, %v2477
  %v2482 = vrsqrt.pop %v2400
  %v2483 = vmul.f32 %v2482, %v2400
  %v2484 = vmul.f32 %v2483, %v2482
  %v2485 = vmul.f32 0.5, %v2484
  %v2486 = vsub.f32 1.5, %v2485
  %v2487 = vmul.f32 %v2482, %v2486
  %vm2488 = vweird.f32 %v2400
  %vm2489 = vweird.f32 %v2482
  %vm2490 = vmor %vm2488, %vm2489
  %v2491 = vsel %vm2490, %v2482, %v2487
  %v2492 = vrsqrt.pop %v2401
  %v2493 = vmul.f32 %v2492, %v2401
  %v2494 = vmul.f32 %v2493, %v2492
  %v2495 = vmul.f32 0.5, %v2494
  %v2496 = vsub.f32 1.5, %v2495
  %v2497 = vmul.f32 %v2492, %v2496
  %vm2498 = vweird.f32 %v2401
  %vm2499 = vweird.f32 %v2492
  %vm2500 = vmor %vm2498, %vm2499
  %v2501 = vsel %vm2500, %v2492, %v2497
  %v2502 = vrsqrt.pop %v2402
  %v2503 = vmul.f32 %v2502, %v2402
  %v2504 = vmul.f32 %v2503, %v2502
  %v2505 = vmul.f32 0.5, %v2504
  %v2506 = vsub.f32 1.5, %v2505
  %v2507 = vmul.f32 %v2502, %v2506
  %vm2508 = vweird.f32 %v2402
  %vm2509 = vweird.f32 %v2502
  %vm2510 = vmor %vm2508, %vm2509
  %v2511 = vsel %vm2510, %v2502, %v2507
  %v2512 = vrsqrt.pop %v2403
  %v2513 = vmul.f32 %v2512, %v2403
  %v2514 = vmul.f32 %v2513, %v2512
  %v2515 = vmul.f32 0.5, %v2514
  %v2516 = vsub.f32 1.5, %v2515
  %v2517 = vmul.f32 %v2512, %v2516
  %vm2518 = vweird.f32 %v2403
  %vm2519 = vweird.f32 %v2512
  %vm2520 = vmor %vm2518, %vm2519
  %v2521 = vsel %vm2520, %v2512, %v2517
  %v2522 = vrsqrt.pop %v2404
  %v2523 = vmul.f32 %v2522, %v2404
  %v2524 = vmul.f32 %v2523, %v2522
  %v2525 = vmul.f32 0.5, %v2524
  %v2526 = vsub.f32 1.5, %v2525
  %v2527 = vmul.f32 %v2522, %v2526
  %vm2528 = vweird.f32 %v2404
  %vm2529 = vweird.f32 %v2522
  %vm2530 = vmor %vm2528, %vm2529
  %v2531 = vsel %vm2530, %v2522, %v2527
  %v2532 = vrsqrt.pop %v2405
  %v2533 = vmul.f32 %v2532, %v2405
  %v2534 = vmul.f32 %v2533, %v2532
  %v2535 = vmul.f32 0.5, %v2534
  %v2536 = vsub.f32 1.5, %v2535
  %v2537 = vmul.f32 %v2532, %v2536
  %vm2538 = vweird.f32 %v2405
  %vm2539 = vweird.f32 %v2532
  %vm2540 = vmor %vm2538, %vm2539
  %v2541 = vsel %vm2540, %v2532, %v2537
  %v2542 = vrsqrt.pop %v2406
  %v2543 = vmul.f32 %v2542, %v2406
  %v2544 = vmul.f32 %v2543, %v2542
  %v2545 = vmul.f32 0.5, %v2544
  %v2546 = vsub.f32 1.5, %v2545
  %v2547 = vmul.f32 %v2542, %v2546
  %vm2548 = vweird.f32 %v2406
  %vm2549 = vweird.f32 %v2542
  %vm2550 = vmor %vm2548, %vm2549
  %v2551 = vsel %vm2550, %v2542, %v2547
  %v2552 = vrsqrt.pop %v2407
  %v2553 = vmul.f32 %v2552, %v2407
  %v2554 = vmul.f32 %v2553, %v2552
  %v2555 = vmul.f32 0.5, %v2554
  %v2556 = vsub.f32 1.5, %v2555
  %v2557 = vmul.f32 %v2552, %v2556
  %vm2558 = vweird.f32 %v2407
  %vm2559 = vweird.f32 %v2552
  %vm2560 = vmor %vm2558, %vm2559
  %v2561 = vsel %vm2560, %v2552, %v2557
  %v2562 = vrsqrt.pop %v2408
  %v2563 = vmul.f32 %v2562, %v2408
  %v2564 = vmul.f32 %v2563, %v2562
  %v2565 = vmul.f32 0.5, %v2564
  %v2566 = vsub.f32 1.5, %v2565
  %v2567 = vmul.f32 %v2562, %v2566
  %vm2568 = vweird.f32 %v2408
  %vm2569 = vweird.f32 %v2562
  %vm2570 = vmor %vm2568, %vm2569
  %v2571 = vsel %vm2570, %v2562, %v2567
  %v2572 = vrsqrt.pop %v2409
  %v2573 = vmul.f32 %v2572, %v2409
  %v2574 = vmul.f32 %v2573, %v2572
  %v2575 = vmul.f32 0.5, %v2574
  %v2576 = vsub.f32 1.5, %v2575
  %v2577 = vmul.f32 %v2572, %v2576
  %vm2578 = vweird.f32 %v2409
  %vm2579 = vweird.f32 %v2572
  %vm2580 = vmor %vm2578, %vm2579
  %v2581 = vsel %vm2580, %v2572, %v2577
  %v2582 = vrsqrt.pop %v2410
  %v2583 = vmul.f32 %v2582, %v2410
  %v2584 = vmul.f32 %v2583, %v2582
  %v2585 = vmul.f32 0.5, %v2584
  %v2586 = vsub.f32 1.5, %v2585
  %v2587 = vmul.f32 %v2582, %v2586
  %vm2588 = vweird.f32 %v2410
  %vm2589 = vweird.f32 %v2582
  %vm2590 = vmor %vm2588, %vm2589
  %v2591 = vsel %vm2590, %v2582, %v2587
  %v2592 = vrsqrt.pop %v2411
  %v2593 = vmul.f32 %v2592, %v2411
  %v2594 = vmul.f32 %v2593, %v2592
  %v2595 = vmul.f32 0.5, %v2594
  %v2596 = vsub.f32 1.5, %v2595
  %v2597 = vmul.f32 %v2592, %v2596
  %vm2598 = vweird.f32 %v2411
  %vm2599 = vweird.f32 %v2592
  %vm2600 = vmor %vm2598, %vm2599
  %v2601 = vsel %vm2600, %v2592, %v2597
  %v2602 = vrsqrt.pop %v2412
  %v2603 = vmul.f32 %v2602, %v2412
  %v2604 = vmul.f32 %v2603, %v2602
  %v2605 = vmul.f32 0.5, %v2604
  %v2606 = vsub.f32 1.5, %v2605
  %v2607 = vmul.f32 %v2602, %v2606
  %vm2608 = vweird.f32 %v2412
  %vm2609 = vweird.f32 %v2602
  %vm2610 = vmor %vm2608, %vm2609
  %v2611 = vsel %vm2610, %v2602, %v2607
  %v2612 = vrsqrt.pop %v2413
  %v2613 = vmul.f32 %v2612, %v2413
  %v2614 = vmul.f32 %v2613, %v2612
  %v2615 = vmul.f32 0.5, %v2614
  %v2616 = vsub.f32 1.5, %v2615
  %v2617 = vmul.f32 %v2612, %v2616
  %vm2618 = vweird.f32 %v2413
  %vm2619 = vweird.f32 %v2612
  %vm2620 = vmor %vm2618, %vm2619
  %v2621 = vsel %vm2620, %v2612, %v2617
  %v2622 = vrsqrt.pop %v2414
  %v2623 = vmul.f32 %v2622, %v2414
  %v2624 = vmul.f32 %v2623, %v2622
  %v2625 = vmul.f32 0.5, %v2624
  %v2626 = vsub.f32 1.5, %v2625
  %v2627 = vmul.f32 %v2622, %v2626
  %vm2628 = vweird.f32 %v2414
  %vm2629 = vweird.f32 %v2622
  %vm2630 = vmor %vm2628, %vm2629
  %v2631 = vsel %vm2630, %v2622, %v2627
  %v2632 = vrsqrt.pop %v2415
  %v2633 = vmul.f32 %v2632, %v2415
  %v2634 = vmul.f32 %v2633, %v2632
  %v2635 = vmul.f32 0.5, %v2634
  %v2636 = vsub.f32 1.5, %v2635
  %v2637 = vmul.f32 %v2632, %v2636
  %vm2638 = vweird.f32 %v2415
  %vm2639 = vweird.f32 %v2632
  %vm2640 = vmor %vm2638, %vm2639
  %v2641 = vsel %vm2640, %v2632, %v2637
  %v2642 = vrsqrt.pop %v2416
  %v2643 = vmul.f32 %v2642, %v2416
  %v2644 = vmul.f32 %v2643, %v2642
  %v2645 = vmul.f32 0.5, %v2644
  %v2646 = vsub.f32 1.5, %v2645
  %v2647 = vmul.f32 %v2642, %v2646
  %vm2648 = vweird.f32 %v2416
  %vm2649 = vweird.f32 %v2642
  %vm2650 = vmor %vm2648, %vm2649
  %v2651 = vsel %vm2650, %v2642, %v2647
  %v2652 = vrsqrt.pop %v2417
  %v2653 = vmul.f32 %v2652, %v2417
  %v2654 = vmul.f32 %v2653, %v2652
  %v2655 = vmul.f32 0.5, %v2654
  %v2656 = vsub.f32 1.5, %v2655
  %v2657 = vmul.f32 %v2652, %v2656
  %vm2658 = vweird.f32 %v2417
  %vm2659 = vweird.f32 %v2652
  %vm2660 = vmor %vm2658, %vm2659
  %v2661 = vsel %vm2660, %v2652, %v2657
  %v2662 = vrsqrt.pop %v2418
  %v2663 = vmul.f32 %v2662, %v2418
  %v2664 = vmul.f32 %v2663, %v2662
  %v2665 = vmul.f32 0.5, %v2664
  %v2666 = vsub.f32 1.5, %v2665
  %v2667 = vmul.f32 %v2662, %v2666
  %vm2668 = vweird.f32 %v2418
  %vm2669 = vweird.f32 %v2662
  %vm2670 = vmor %vm2668, %vm2669
  %v2671 = vsel %vm2670, %v2662, %v2667
  %v2672 = vrsqrt.pop %v2419
  %v2673 = vmul.f32 %v2672, %v2419
  %v2674 = vmul.f32 %v2673, %v2672
  %v2675 = vmul.f32 0.5, %v2674
  %v2676 = vsub.f32 1.5, %v2675
  %v2677 = vmul.f32 %v2672, %v2676
  %vm2678 = vweird.f32 %v2419
  %vm2679 = vweird.f32 %v2672
  %vm2680 = vmor %vm2678, %vm2679
  %v2681 = vsel %vm2680, %v2672, %v2677
  %v2682 = vrsqrt.pop %v2420
  %v2683 = vmul.f32 %v2682, %v2420
  %v2684 = vmul.f32 %v2683, %v2682
  %v2685 = vmul.f32 0.5, %v2684
  %v2686 = vsub.f32 1.5, %v2685
  %v2687 = vmul.f32 %v2682, %v2686
  %vm2688 = vweird.f32 %v2420
  %vm2689 = vweird.f32 %v2682
  %vm2690 = vmor %vm2688, %vm2689
  %v2691 = vsel %vm2690, %v2682, %v2687
  %v2692 = vrsqrt.pop %v2421
  %v2693 = vmul.f32 %v2692, %v2421
  %v2694 = vmul.f32 %v2693, %v2692
  %v2695 = vmul.f32 0.5, %v2694
  %v2696 = vsub.f32 1.5, %v2695
  %v2697 = vmul.f32 %v2692, %v2696
  %vm2698 = vweird.f32 %v2421
  %vm2699 = vweird.f32 %v2692
  %vm2700 = vmor %vm2698, %vm2699
  %v2701 = vsel %vm2700, %v2692, %v2697
  %v2702 = vrsqrt.pop %v2422
  %v2703 = vmul.f32 %v2702, %v2422
  %v2704 = vmul.f32 %v2703, %v2702
  %v2705 = vmul.f32 0.5, %v2704
  %v2706 = vsub.f32 1.5, %v2705
  %v2707 = vmul.f32 %v2702, %v2706
  %vm2708 = vweird.f32 %v2422
  %vm2709 = vweird.f32 %v2702
  %vm2710 = vmor %vm2708, %vm2709
  %v2711 = vsel %vm2710, %v2702, %v2707
  %v2712 = vrsqrt.pop %v2423
  %v2713 = vmul.f32 %v2712, %v2423
  %v2714 = vmul.f32 %v2713, %v2712
  %v2715 = vmul.f32 0.5, %v2714
  %v2716 = vsub.f32 1.5, %v2715
  %v2717 = vmul.f32 %v2712, %v2716
  %vm2718 = vweird.f32 %v2423
  %vm2719 = vweird.f32 %v2712
  %vm2720 = vmor %vm2718, %vm2719
  %v2721 = vsel %vm2720, %v2712, %v2717
  %v2722 = vrsqrt.pop %v2424
  %v2723 = vmul.f32 %v2722, %v2424
  %v2724 = vmul.f32 %v2723, %v2722
  %v2725 = vmul.f32 0.5, %v2724
  %v2726 = vsub.f32 1.5, %v2725
  %v2727 = vmul.f32 %v2722, %v2726
  %vm2728 = vweird.f32 %v2424
  %vm2729 = vweird.f32 %v2722
  %vm2730 = vmor %vm2728, %vm2729
  %v2731 = vsel %vm2730, %v2722, %v2727
  %v2732 = vrsqrt.pop %v2425
  %v2733 = vmul.f32 %v2732, %v2425
  %v2734 = vmul.f32 %v2733, %v2732
  %v2735 = vmul.f32 0.5, %v2734
  %v2736 = vsub.f32 1.5, %v2735
  %v2737 = vmul.f32 %v2732, %v2736
  %vm2738 = vweird.f32 %v2425
  %vm2739 = vweird.f32 %v2732
  %vm2740 = vmor %vm2738, %vm2739
  %v2741 = vsel %vm2740, %v2732, %v2737
  %v2742 = vrsqrt.pop %v2426
  %v2743 = vmul.f32 %v2742, %v2426
  %v2744 = vmul.f32 %v2743, %v2742
  %v2745 = vmul.f32 0.5, %v2744
  %v2746 = vsub.f32 1.5, %v2745
  %v2747 = vmul.f32 %v2742, %v2746
  %vm2748 = vweird.f32 %v2426
  %vm2749 = vweird.f32 %v2742
  %vm2750 = vmor %vm2748, %vm2749
  %v2751 = vsel %vm2750, %v2742, %v2747
  %v2752 = vrsqrt.pop %v2427
  %v2753 = vmul.f32 %v2752, %v2427
  %v2754 = vmul.f32 %v2753, %v2752
  %v2755 = vmul.f32 0.5, %v2754
  %v2756 = vsub.f32 1.5, %v2755
  %v2757 = vmul.f32 %v2752, %v2756
  %vm2758 = vweird.f32 %v2427
  %vm2759 = vweird.f32 %v2752
  %vm2760 = vmor %vm2758, %vm2759
  %v2761 = vsel %vm2760, %v2752, %v2757
  %v2762 = vrsqrt.pop %v2428
  %v2763 = vmul.f32 %v2762, %v2428
  %v2764 = vmul.f32 %v2763, %v2762
  %v2765 = vmul.f32 0.5, %v2764
  %v2766 = vsub.f32 1.5, %v2765
  %v2767 = vmul.f32 %v2762, %v2766
  %vm2768 = vweird.f32 %v2428
  %vm2769 = vweird.f32 %v2762
  %vm2770 = vmor %vm2768, %vm2769
  %v2771 = vsel %vm2770, %v2762, %v2767
  %v2772 = vrsqrt.pop %v2429
  %v2773 = vmul.f32 %v2772, %v2429
  %v2774 = vmul.f32 %v2773, %v2772
  %v2775 = vmul.f32 0.5, %v2774
  %v2776 = vsub.f32 1.5, %v2775
  %v2777 = vmul.f32 %v2772, %v2776
  %vm2778 = vweird.f32 %v2429
  %vm2779 = vweird.f32 %v2772
  %vm2780 = vmor %vm2778, %vm2779
  %v2781 = vsel %vm2780, %v2772, %v2777
  %v2782 = vrsqrt.pop %v2430
  %v2783 = vmul.f32 %v2782, %v2430
  %v2784 = vmul.f32 %v2783, %v2782
  %v2785 = vmul.f32 0.5, %v2784
  %v2786 = vsub.f32 1.5, %v2785
  %v2787 = vmul.f32 %v2782, %v2786
  %vm2788 = vweird.f32 %v2430
  %vm2789 = vweird.f32 %v2782
  %vm2790 = vmor %vm2788, %vm2789
  %v2791 = vsel %vm2790, %v2782, %v2787
  %v2792 = vrsqrt.pop %v2431
  %v2793 = vmul.f32 %v2792, %v2431
  %v2794 = vmul.f32 %v2793, %v2792
  %v2795 = vmul.f32 0.5, %v2794
  %v2796 = vsub.f32 1.5, %v2795
  %v2797 = vmul.f32 %v2792, %v2796
  %vm2798 = vweird.f32 %v2431
  %vm2799 = vweird.f32 %v2792
  %vm2800 = vmor %vm2798, %vm2799
  %v2801 = vsel %vm2800, %v2792, %v2797
  %v2802 = vrsqrt.pop %v2432
  %v2803 = vmul.f32 %v2802, %v2432
  %v2804 = vmul.f32 %v2803, %v2802
  %v2805 = vmul.f32 0.5, %v2804
  %v2806 = vsub.f32 1.5, %v2805
  %v2807 = vmul.f32 %v2802, %v2806
  %vm2808 = vweird.f32 %v2432
  %vm2809 = vweird.f32 %v2802
  %vm2810 = vmor %vm2808, %vm2809
  %v2811 = vsel %vm2810, %v2802, %v2807
  %v2812 = vrsqrt.pop %v2433
  %v2813 = vmul.f32 %v2812, %v2433
  %v2814 = vmul.f32 %v2813, %v2812
  %v2815 = vmul.f32 0.5, %v2814
  %v2816 = vsub.f32 1.5, %v2815
  %v2817 = vmul.f32 %v2812, %v2816
  %vm2818 = vweird.f32 %v2433
  %vm2819 = vweird.f32 %v2812
  %vm2820 = vmor %vm2818, %vm2819
  %v2821 = vsel %vm2820, %v2812, %v2817
  %v2822 = vrsqrt.pop %v2434
  %v2823 = vmul.f32 %v2822, %v2434
  %v2824 = vmul.f32 %v2823, %v2822
  %v2825 = vmul.f32 0.5, %v2824
  %v2826 = vsub.f32 1.5, %v2825
  %v2827 = vmul.f32 %v2822, %v2826
  %vm2828 = vweird.f32 %v2434
  %vm2829 = vweird.f32 %v2822
  %vm2830 = vmor %vm2828, %vm2829
  %v2831 = vsel %vm2830, %v2822, %v2827
  %v2832 = vrsqrt.pop %v2435
  %v2833 = vmul.f32 %v2832, %v2435
  %v2834 = vmul.f32 %v2833, %v2832
  %v2835 = vmul.f32 0.5, %v2834
  %v2836 = vsub.f32 1.5, %v2835
  %v2837 = vmul.f32 %v2832, %v2836
  %vm2838 = vweird.f32 %v2435
  %vm2839 = vweird.f32 %v2832
  %vm2840 = vmor %vm2838, %vm2839
  %v2841 = vsel %vm2840, %v2832, %v2837
  %v2842 = vrsqrt.pop %v2436
  %v2843 = vmul.f32 %v2842, %v2436
  %v2844 = vmul.f32 %v2843, %v2842
  %v2845 = vmul.f32 0.5, %v2844
  %v2846 = vsub.f32 1.5, %v2845
  %v2847 = vmul.f32 %v2842, %v2846
  %vm2848 = vweird.f32 %v2436
  %vm2849 = vweird.f32 %v2842
  %vm2850 = vmor %vm2848, %vm2849
  %v2851 = vsel %vm2850, %v2842, %v2847
  %v2852 = vrsqrt.pop %v2437
  %v2853 = vmul.f32 %v2852, %v2437
  %v2854 = vmul.f32 %v2853, %v2852
  %v2855 = vmul.f32 0.5, %v2854
  %v2856 = vsub.f32 1.5, %v2855
  %v2857 = vmul.f32 %v2852, %v2856
  %vm2858 = vweird.f32 %v2437
  %vm2859 = vweird.f32 %v2852
  %vm2860 = vmor %vm2858, %vm2859
  %v2861 = vsel %vm2860, %v2852, %v2857
  %v2862 = vrsqrt.pop %v2438
  %v2863 = vmul.f32 %v2862, %v2438
  %v2864 = vmul.f32 %v2863, %v2862
  %v2865 = vmul.f32 0.5, %v2864
  %v2866 = vsub.f32 1.5, %v2865
  %v2867 = vmul.f32 %v2862, %v2866
  %vm2868 = vweird.f32 %v2438
  %vm2869 = vweird.f32 %v2862
  %vm2870 = vmor %vm2868, %vm2869
  %v2871 = vsel %vm2870, %v2862, %v2867
  %v2872 = vrsqrt.pop %v2439
  %v2873 = vmul.f32 %v2872, %v2439
  %v2874 = vmul.f32 %v2873, %v2872
  %v2875 = vmul.f32 0.5, %v2874
  %v2876 = vsub.f32 1.5, %v2875
  %v2877 = vmul.f32 %v2872, %v2876
  %vm2878 = vweird.f32 %v2439
  %vm2879 = vweird.f32 %v2872
  %vm2880 = vmor %vm2878, %vm2879
  %v2881 = vsel %vm2880, %v2872, %v2877
  %v2882 = vrsqrt.pop %v2440
  %v2883 = vmul.f32 %v2882, %v2440
  %v2884 = vmul.f32 %v2883, %v2882
  %v2885 = vmul.f32 0.5, %v2884
  %v2886 = vsub.f32 1.5, %v2885
  %v2887 = vmul.f32 %v2882, %v2886
  %vm2888 = vweird.f32 %v2440
  %vm2889 = vweird.f32 %v2882
  %vm2890 = vmor %vm2888, %vm2889
  %v2891 = vsel %vm2890, %v2882, %v2887
  %v2892 = vrsqrt.pop %v2441
  %v2893 = vmul.f32 %v2892, %v2441
  %v2894 = vmul.f32 %v2893, %v2892
  %v2895 = vmul.f32 0.5, %v2894
  %v2896 = vsub.f32 1.5, %v2895
  %v2897 = vmul.f32 %v2892, %v2896
  %vm2898 = vweird.f32 %v2441
  %vm2899 = vweird.f32 %v2892
  %vm2900 = vmor %vm2898, %vm2899
  %v2901 = vsel %vm2900, %v2892, %v2897
  %v2902 = vrsqrt.pop %v2442
  %v2903 = vmul.f32 %v2902, %v2442
  %v2904 = vmul.f32 %v2903, %v2902
  %v2905 = vmul.f32 0.5, %v2904
  %v2906 = vsub.f32 1.5, %v2905
  %v2907 = vmul.f32 %v2902, %v2906
  %vm2908 = vweird.f32 %v2442
  %vm2909 = vweird.f32 %v2902
  %vm2910 = vmor %vm2908, %vm2909
  %v2911 = vsel %vm2910, %v2902, %v2907
  %v2912 = vrsqrt.pop %v2443
  %v2913 = vmul.f32 %v2912, %v2443
  %v2914 = vmul.f32 %v2913, %v2912
  %v2915 = vmul.f32 0.5, %v2914
  %v2916 = vsub.f32 1.5, %v2915
  %v2917 = vmul.f32 %v2912, %v2916
  %vm2918 = vweird.f32 %v2443
  %vm2919 = vweird.f32 %v2912
  %vm2920 = vmor %vm2918, %vm2919
  %v2921 = vsel %vm2920, %v2912, %v2917
  %v2922 = vrsqrt.pop %v2444
  %v2923 = vmul.f32 %v2922, %v2444
  %v2924 = vmul.f32 %v2923, %v2922
  %v2925 = vmul.f32 0.5, %v2924
  %v2926 = vsub.f32 1.5, %v2925
  %v2927 = vmul.f32 %v2922, %v2926
  %vm2928 = vweird.f32 %v2444
  %vm2929 = vweird.f32 %v2922
  %vm2930 = vmor %vm2928, %vm2929
  %v2931 = vsel %vm2930, %v2922, %v2927
  %v2932 = vrsqrt.pop %v2445
  %v2933 = vmul.f32 %v2932, %v2445
  %v2934 = vmul.f32 %v2933, %v2932
  %v2935 = vmul.f32 0.5, %v2934
  %v2936 = vsub.f32 1.5, %v2935
  %v2937 = vmul.f32 %v2932, %v2936
  %vm2938 = vweird.f32 %v2445
  %vm2939 = vweird.f32 %v2932
  %vm2940 = vmor %vm2938, %vm2939
  %v2941 = vsel %vm2940, %v2932, %v2937
  %v2942 = vrsqrt.pop %v2446
  %v2943 = vmul.f32 %v2942, %v2446
  %v2944 = vmul.f32 %v2943, %v2942
  %v2945 = vmul.f32 0.5, %v2944
  %v2946 = vsub.f32 1.5, %v2945
  %v2947 = vmul.f32 %v2942, %v2946
  %vm2948 = vweird.f32 %v2446
  %vm2949 = vweird.f32 %v2942
  %vm2950 = vmor %vm2948, %vm2949
  %v2951 = vsel %vm2950, %v2942, %v2947
  %v2952 = vrsqrt.pop %v2447
  %v2953 = vmul.f32 %v2952, %v2447
  %v2954 = vmul.f32 %v2953, %v2952
  %v2955 = vmul.f32 0.5, %v2954
  %v2956 = vsub.f32 1.5, %v2955
  %v2957 = vmul.f32 %v2952, %v2956
  %vm2958 = vweird.f32 %v2447
  %vm2959 = vweird.f32 %v2952
  %vm2960 = vmor %vm2958, %vm2959
  %v2961 = vsel %vm2960, %v2952, %v2957
  %v2962 = vrsqrt.pop %v2448
  %v2963 = vmul.f32 %v2962, %v2448
  %v2964 = vmul.f32 %v2963, %v2962
  %v2965 = vmul.f32 0.5, %v2964
  %v2966 = vsub.f32 1.5, %v2965
  %v2967 = vmul.f32 %v2962, %v2966
  %vm2968 = vweird.f32 %v2448
  %vm2969 = vweird.f32 %v2962
  %vm2970 = vmor %vm2968, %vm2969
  %v2971 = vsel %vm2970, %v2962, %v2967
  %v2972 = vrsqrt.pop %v2449
  %v2973 = vmul.f32 %v2972, %v2449
  %v2974 = vmul.f32 %v2973, %v2972
  %v2975 = vmul.f32 0.5, %v2974
  %v2976 = vsub.f32 1.5, %v2975
  %v2977 = vmul.f32 %v2972, %v2976
  %vm2978 = vweird.f32 %v2449
  %vm2979 = vweird.f32 %v2972
  %vm2980 = vmor %vm2978, %vm2979
  %v2981 = vsel %vm2980, %v2972, %v2977
  %v2982 = vrsqrt.pop %v2450
  %v2983 = vmul.f32 %v2982, %v2450
  %v2984 = vmul.f32 %v2983, %v2982
  %v2985 = vmul.f32 0.5, %v2984
  %v2986 = vsub.f32 1.5, %v2985
  %v2987 = vmul.f32 %v2982, %v2986
  %vm2988 = vweird.f32 %v2450
  %vm2989 = vweird.f32 %v2982
  %vm2990 = vmor %vm2988, %vm2989
  %v2991 = vsel %vm2990, %v2982, %v2987
  %v2992 = vrsqrt.pop %v2451
  %v2993 = vmul.f32 %v2992, %v2451
  %v2994 = vmul.f32 %v2993, %v2992
  %v2995 = vmul.f32 0.5, %v2994
  %v2996 = vsub.f32 1.5, %v2995
  %v2997 = vmul.f32 %v2992, %v2996
  %vm2998 = vweird.f32 %v2451
  %vm2999 = vweird.f32 %v2992
  %vm3000 = vmor %vm2998, %vm2999
  %v3001 = vsel %vm3000, %v2992, %v2997
  %v3002 = vrsqrt.pop %v2452
  %v3003 = vmul.f32 %v3002, %v2452
  %v3004 = vmul.f32 %v3003, %v3002
  %v3005 = vmul.f32 0.5, %v3004
  %v3006 = vsub.f32 1.5, %v3005
  %v3007 = vmul.f32 %v3002, %v3006
  %vm3008 = vweird.f32 %v2452
  %vm3009 = vweird.f32 %v3002
  %vm3010 = vmor %vm3008, %vm3009
  %v3011 = vsel %vm3010, %v3002, %v3007
  %v3012 = vrsqrt.pop %v2453
  %v3013 = vmul.f32 %v3012, %v2453
  %v3014 = vmul.f32 %v3013, %v3012
  %v3015 = vmul.f32 0.5, %v3014
  %v3016 = vsub.f32 1.5, %v3015
  %v3017 = vmul.f32 %v3012, %v3016
  %vm3018 = vweird.f32 %v2453
  %vm3019 = vweird.f32 %v3012
  %vm3020 = vmor %vm3018, %vm3019
  %v3021 = vsel %vm3020, %v3012, %v3017
  %v3022 = vrsqrt.pop %v2454
  %v3023 = vmul.f32 %v3022, %v2454
  %v3024 = vmul.f32 %v3023, %v3022
  %v3025 = vmul.f32 0.5, %v3024
  %v3026 = vsub.f32 1.5, %v3025
  %v3027 = vmul.f32 %v3022, %v3026
  %vm3028 = vweird.f32 %v2454
  %vm3029 = vweird.f32 %v3022
  %vm3030 = vmor %vm3028, %vm3029
  %v3031 = vsel %vm3030, %v3022, %v3027
  %v3032 = vrsqrt.pop %v2455
  %v3033 = vmul.f32 %v3032, %v2455
  %v3034 = vmul.f32 %v3033, %v3032
  %v3035 = vmul.f32 0.5, %v3034
  %v3036 = vsub.f32 1.5, %v3035
  %v3037 = vmul.f32 %v3032, %v3036
  %vm3038 = vweird.f32 %v2455
  %vm3039 = vweird.f32 %v3032
  %vm3040 = vmor %vm3038, %vm3039
  %v3041 = vsel %vm3040, %v3032, %v3037
  %v3042 = vrsqrt.pop %v2456
  %v3043 = vmul.f32 %v3042, %v2456
  %v3044 = vmul.f32 %v3043, %v3042
  %v3045 = vmul.f32 0.5, %v3044
  %v3046 = vsub.f32 1.5, %v3045
  %v3047 = vmul.f32 %v3042, %v3046
  %vm3048 = vweird.f32 %v2456
  %vm3049 = vweird.f32 %v3042
  %vm3050 = vmor %vm3048, %vm3049
  %v3051 = vsel %vm3050, %v3042, %v3047
  %v3052 = vrsqrt.pop %v2457
  %v3053 = vmul.f32 %v3052, %v2457
  %v3054 = vmul.f32 %v3053, %v3052
  %v3055 = vmul.f32 0.5, %v3054
  %v3056 = vsub.f32 1.5, %v3055
  %v3057 = vmul.f32 %v3052, %v3056
  %vm3058 = vweird.f32 %v2457
  %vm3059 = vweird.f32 %v3052
  %vm3060 = vmor %vm3058, %vm3059
  %v3061 = vsel %vm3060, %v3052, %v3057
  %v3062 = vrsqrt.pop %v2458
  %v3063 = vmul.f32 %v3062, %v2458
  %v3064 = vmul.f32 %v3063, %v3062
  %v3065 = vmul.f32 0.5, %v3064
  %v3066 = vsub.f32 1.5, %v3065
  %v3067 = vmul.f32 %v3062, %v3066
  %vm3068 = vweird.f32 %v2458
  %vm3069 = vweird.f32 %v3062
  %vm3070 = vmor %vm3068, %vm3069
  %v3071 = vsel %vm3070, %v3062, %v3067
  %v3072 = vrsqrt.pop %v2459
  %v3073 = vmul.f32 %v3072, %v2459
  %v3074 = vmul.f32 %v3073, %v3072
  %v3075 = vmul.f32 0.5, %v3074
  %v3076 = vsub.f32 1.5, %v3075
  %v3077 = vmul.f32 %v3072, %v3076
  %vm3078 = vweird.f32 %v2459
  %vm3079 = vweird.f32 %v3072
  %vm3080 = vmor %vm3078, %vm3079
  %v3081 = vsel %vm3080, %v3072, %v3077
  %v3082 = vrsqrt.pop %v2460
  %v3083 = vmul.f32 %v3082, %v2460
  %v3084 = vmul.f32 %v3083, %v3082
  %v3085 = vmul.f32 0.5, %v3084
  %v3086 = vsub.f32 1.5, %v3085
  %v3087 = vmul.f32 %v3082, %v3086
  %vm3088 = vweird.f32 %v2460
  %vm3089 = vweird.f32 %v3082
  %vm3090 = vmor %vm3088, %vm3089
  %v3091 = vsel %vm3090, %v3082, %v3087
  %v3092 = vrsqrt.pop %v2461
  %v3093 = vmul.f32 %v3092, %v2461
  %v3094 = vmul.f32 %v3093, %v3092
  %v3095 = vmul.f32 0.5, %v3094
  %v3096 = vsub.f32 1.5, %v3095
  %v3097 = vmul.f32 %v3092, %v3096
  %vm3098 = vweird.f32 %v2461
  %vm3099 = vweird.f32 %v3092
  %vm3100 = vmor %vm3098, %vm3099
  %v3101 = vsel %vm3100, %v3092, %v3097
  %v3102 = vmul.f32 %v762, %v2471
  %v3103 = vmul.f32 %v764, %v2481
  %v3104 = vmul.f32 %v767, %v2491
  %v3105 = vmul.f32 %v769, %v2501
  %v3106 = vmul.f32 %v772, %v2511
  %v3107 = vmul.f32 %v774, %v2521
  %v3108 = vmul.f32 %v777, %v2531
  %v3109 = vmul.f32 %v779, %v2541
  %v3110 = vmul.f32 %v782, %v2551
  %v3111 = vmul.f32 %v784, %v2561
  %v3112 = vmul.f32 %v787, %v2571
  %v3113 = vmul.f32 %v789, %v2581
  %v3114 = vmul.f32 %v792, %v2591
  %v3115 = vmul.f32 %v794, %v2601
  %v3116 = vmul.f32 %v797, %v2611
  %v3117 = vmul.f32 %v799, %v2621
  %v3118 = vmul.f32 %v802, %v2631
  %v3119 = vmul.f32 %v804, %v2641
  %v3120 = vmul.f32 %v807, %v2651
  %v3121 = vmul.f32 %v809, %v2661
  %v3122 = vmul.f32 %v812, %v2671
  %v3123 = vmul.f32 %v814, %v2681
  %v3124 = vmul.f32 %v817, %v2691
  %v3125 = vmul.f32 %v819, %v2701
  %v3126 = vmul.f32 %v822, %v2711
  %v3127 = vmul.f32 %v824, %v2721
  %v3128 = vmul.f32 %v827, %v2731
  %v3129 = vmul.f32 %v829, %v2741
  %v3130 = vmul.f32 %v832, %v2751
  %v3131 = vmul.f32 %v834, %v2761
  %v3132 = vmul.f32 %v837, %v2771
  %v3133 = vmul.f32 %v839, %v2781
  %v3134 = vmul.f32 %v842, %v2791
  %v3135 = vmul.f32 %v844, %v2801
  %v3136 = vmul.f32 %v847, %v2811
  %v3137 = vmul.f32 %v849, %v2821
  %v3138 = vmul.f32 %v852, %v2831
  %v3139 = vmul.f32 %v854, %v2841
  %v3140 = vmul.f32 %v857, %v2851
  %v3141 = vmul.f32 %v859, %v2861
  %v3142 = vmul.f32 %v862, %v2871
  %v3143 = vmul.f32 %v864, %v2881
  %v3144 = vmul.f32 %v867, %v2891
  %v3145 = vmul.f32 %v869, %v2901
  %v3146 = vmul.f32 %v872, %v2911
  %v3147 = vmul.f32 %v874, %v2921
  %v3148 = vmul.f32 %v877, %v2931
  %v3149 = vmul.f32 %v879, %v2941
  %v3150 = vmul.f32 %v882, %v2951
  %v3151 = vmul.f32 %v884, %v2961
  %v3152 = vmul.f32 %v887, %v2971
  %v3153 = vmul.f32 %v889, %v2981
  %v3154 = vmul.f32 %v892, %v2991
  %v3155 = vmul.f32 %v894, %v3001
  %v3156 = vmul.f32 %v897, %v3011
  %v3157 = vmul.f32 %v899, %v3021
  %v3158 = vmul.f32 %v902, %v3031
  %v3159 = vmul.f32 %v904, %v3041
  %v3160 = vmul.f32 %v907, %v3051
  %v3161 = vmul.f32 %v909, %v3061
  %v3162 = vmul.f32 %v912, %v3071
  %v3163 = vmul.f32 %v914, %v3081
  %v3164 = vmul.f32 %v917, %v3091
  %v3165 = vmul.f32 %v919, %v3101
  %v3166 = vsel %vm2141, %v3102, %v762
  %v3167 = vsel %vm2141, %v3103, %v764
  %v3168 = vsel %vm2141, %v3104, %v767
  %v3169 = vsel %vm2141, %v3105, %v769
  %v3170 = vsel %vm2141, %v3106, %v772
  %v3171 = vsel %vm2141, %v3107, %v774
  %v3172 = vsel %vm2141, %v3108, %v777
  %v3173 = vsel %vm2141, %v3109, %v779
  %v3174 = vsel %vm2141, %v3110, %v782
  %v3175 = vsel %vm2141, %v3111, %v784
  %v3176 = vsel %vm2141, %v3112, %v787
  %v3177 = vsel %vm2141, %v3113, %v789
  %v3178 = vsel %vm2141, %v3114, %v792
  %v3179 = vsel %vm2141, %v3115, %v794
  %v3180 = vsel %vm2141, %v3116, %v797
  %v3181 = vsel %vm2141, %v3117, %v799
  %v3182 = vsel %vm2141, %v3118, %v802
  %v3183 = vsel %vm2141, %v3119, %v804
  %v3184 = vsel %vm2141, %v3120, %v807
  %v3185 = vsel %vm2141, %v3121, %v809
  %v3186 = vsel %vm2141, %v3122, %v812
  %v3187 = vsel %vm2141, %v3123, %v814
  %v3188 = vsel %vm2141, %v3124, %v817
  %v3189 = vsel %vm2141, %v3125, %v819
  %v3190 = vsel %vm2141, %v3126, %v822
  %v3191 = vsel %vm2141, %v3127, %v824
  %v3192 = vsel %vm2141, %v3128, %v827
  %v3193 = vsel %vm2141, %v3129, %v829
  %v3194 = vsel %vm2141, %v3130, %v832
  %v3195 = vsel %vm2141, %v3131, %v834
  %v3196 = vsel %vm2141, %v3132, %v837
  %v3197 = vsel %vm2141, %v3133, %v839
  %v3198 = vsel %vm2141, %v3134, %v842
  %v3199 = vsel %vm2141, %v3135, %v844
  %v3200 = vsel %vm2141, %v3136, %v847
  %v3201 = vsel %vm2141, %v3137, %v849
  %v3202 = vsel %vm2141, %v3138, %v852
  %v3203 = vsel %vm2141, %v3139, %v854
  %v3204 = vsel %vm2141, %v3140, %v857
  %v3205 = vsel %vm2141, %v3141, %v859
  %v3206 = vsel %vm2141, %v3142, %v862
  %v3207 = vsel %vm2141, %v3143, %v864
  %v3208 = vsel %vm2141, %v3144, %v867
  %v3209 = vsel %vm2141, %v3145, %v869
  %v3210 = vsel %vm2141, %v3146, %v872
  %v3211 = vsel %vm2141, %v3147, %v874
  %v3212 = vsel %vm2141, %v3148, %v877
  %v3213 = vsel %vm2141, %v3149, %v879
  %v3214 = vsel %vm2141, %v3150, %v882
  %v3215 = vsel %vm2141, %v3151, %v884
  %v3216 = vsel %vm2141, %v3152, %v887
  %v3217 = vsel %vm2141, %v3153, %v889
  %v3218 = vsel %vm2141, %v3154, %v892
  %v3219 = vsel %vm2141, %v3155, %v894
  %v3220 = vsel %vm2141, %v3156, %v897
  %v3221 = vsel %vm2141, %v3157, %v899
  %v3222 = vsel %vm2141, %v3158, %v902
  %v3223 = vsel %vm2141, %v3159, %v904
  %v3224 = vsel %vm2141, %v3160, %v907
  %v3225 = vsel %vm2141, %v3161, %v909
  %v3226 = vsel %vm2141, %v3162, %v912
  %v3227 = vsel %vm2141, %v3163, %v914
  %v3228 = vsel %vm2141, %v3164, %v917
  %v3229 = vsel %vm2141, %v3165, %v919
  %vm3230 = vcmp.eq.s32.totalorder %v922, 0
  %3232 = vset.pattern.permute.xlu0 0
  %3233 = vperm.xlu0 %3232, %v1193
  %v3234 = vpop.permute.xlu0 %3233
  %3237 = vset.pattern.permute.xlu0 0
  %3238 = vperm.xlu0 %3237, %v1208
  %v3239 = vpop.permute.xlu0 %3238
  %3242 = vset.pattern.permute.xlu0 0
  %3243 = vperm.xlu0 %3242, %v1223
  %v3244 = vpop.permute.xlu0 %3243
  %3247 = vset.pattern.permute.xlu0 0
  %3248 = vperm.xlu0 %3247, %v1238
  %v3249 = vpop.permute.xlu0 %3248
  %3252 = vset.pattern.permute.xlu0 0
  %3253 = vperm.xlu0 %3252, %v1253
  %v3254 = vpop.permute.xlu0 %3253
  %3257 = vset.pattern.permute.xlu0 0
  %3258 = vperm.xlu0 %3257, %v1268
  %v3259 = vpop.permute.xlu0 %3258
  %3262 = vset.pattern.permute.xlu0 0
  %3263 = vperm.xlu0 %3262, %v1283
  %v3264 = vpop.permute.xlu0 %3263
  %3267 = vset.pattern.permute.xlu0 0
  %3268 = vperm.xlu0 %3267, %v1298
  %v3269 = vpop.permute.xlu0 %3268
  %3272 = vset.pattern.permute.xlu0 0
  %3273 = vperm.xlu0 %3272, %v1313
  %v3274 = vpop.permute.xlu0 %3273
  %3277 = vset.pattern.permute.xlu0 0
  %3278 = vperm.xlu0 %3277, %v1328
  %v3279 = vpop.permute.xlu0 %3278
  %3282 = vset.pattern.permute.xlu0 0
  %3283 = vperm.xlu0 %3282, %v1343
  %v3284 = vpop.permute.xlu0 %3283
  %3287 = vset.pattern.permute.xlu0 0
  %3288 = vperm.xlu0 %3287, %v1358
  %v3289 = vpop.permute.xlu0 %3288
  %3292 = vset.pattern.permute.xlu0 0
  %3293 = vperm.xlu0 %3292, %v1373
  %v3294 = vpop.permute.xlu0 %3293
  %3297 = vset.pattern.permute.xlu0 0
  %3298 = vperm.xlu0 %3297, %v1388
  %v3299 = vpop.permute.xlu0 %3298
  %3302 = vset.pattern.permute.xlu0 0
  %3303 = vperm.xlu0 %3302, %v1403
  %v3304 = vpop.permute.xlu0 %3303
  %3307 = vset.pattern.permute.xlu0 0
  %3308 = vperm.xlu0 %3307, %v1418
  %v3309 = vpop.permute.xlu0 %3308
  %3312 = vset.pattern.permute.xlu0 0
  %3313 = vperm.xlu0 %3312, %v1433
  %v3314 = vpop.permute.xlu0 %3313
  %3317 = vset.pattern.permute.xlu0 0
  %3318 = vperm.xlu0 %3317, %v1448
  %v3319 = vpop.permute.xlu0 %3318
  %3322 = vset.pattern.permute.xlu0 0
  %3323 = vperm.xlu0 %3322, %v1463
  %v3324 = vpop.permute.xlu0 %3323
  %3327 = vset.pattern.permute.xlu0 0
  %3328 = vperm.xlu0 %3327, %v1478
  %v3329 = vpop.permute.xlu0 %3328
  %3332 = vset.pattern.permute.xlu0 0
  %3333 = vperm.xlu0 %3332, %v1493
  %v3334 = vpop.permute.xlu0 %3333
  %3337 = vset.pattern.permute.xlu0 0
  %3338 = vperm.xlu0 %3337, %v1508
  %v3339 = vpop.permute.xlu0 %3338
  %3342 = vset.pattern.permute.xlu0 0
  %3343 = vperm.xlu0 %3342, %v1523
  %v3344 = vpop.permute.xlu0 %3343
  %3347 = vset.pattern.permute.xlu0 0
  %3348 = vperm.xlu0 %3347, %v1538
  %v3349 = vpop.permute.xlu0 %3348
  %3352 = vset.pattern.permute.xlu0 0
  %3353 = vperm.xlu0 %3352, %v1553
  %v3354 = vpop.permute.xlu0 %3353
  %3357 = vset.pattern.permute.xlu0 0
  %3358 = vperm.xlu0 %3357, %v1568
  %v3359 = vpop.permute.xlu0 %3358
  %3362 = vset.pattern.permute.xlu0 0
  %3363 = vperm.xlu0 %3362, %v1583
  %v3364 = vpop.permute.xlu0 %3363
  %3367 = vset.pattern.permute.xlu0 0
  %3368 = vperm.xlu0 %3367, %v1598
  %v3369 = vpop.permute.xlu0 %3368
  %3372 = vset.pattern.permute.xlu0 0
  %3373 = vperm.xlu0 %3372, %v1613
  %v3374 = vpop.permute.xlu0 %3373
  %3377 = vset.pattern.permute.xlu0 0
  %3378 = vperm.xlu0 %3377, %v1628
  %v3379 = vpop.permute.xlu0 %3378
  %3382 = vset.pattern.permute.xlu0 0
  %3383 = vperm.xlu0 %3382, %v1643
  %v3384 = vpop.permute.xlu0 %3383
  %3387 = vset.pattern.permute.xlu0 0
  %3388 = vperm.xlu0 %3387, %v1658
  %v3389 = vpop.permute.xlu0 %3388
  %3392 = vset.pattern.permute.xlu0 0
  %3393 = vperm.xlu0 %3392, %v1673
  %v3394 = vpop.permute.xlu0 %3393
  %3397 = vset.pattern.permute.xlu0 0
  %3398 = vperm.xlu0 %3397, %v1688
  %v3399 = vpop.permute.xlu0 %3398
  %3402 = vset.pattern.permute.xlu0 0
  %3403 = vperm.xlu0 %3402, %v1703
  %v3404 = vpop.permute.xlu0 %3403
  %3407 = vset.pattern.permute.xlu0 0
  %3408 = vperm.xlu0 %3407, %v1718
  %v3409 = vpop.permute.xlu0 %3408
  %3412 = vset.pattern.permute.xlu0 0
  %3413 = vperm.xlu0 %3412, %v1733
  %v3414 = vpop.permute.xlu0 %3413
  %3417 = vset.pattern.permute.xlu0 0
  %3418 = vperm.xlu0 %3417, %v1748
  %v3419 = vpop.permute.xlu0 %3418
  %3422 = vset.pattern.permute.xlu0 0
  %3423 = vperm.xlu0 %3422, %v1763
  %v3424 = vpop.permute.xlu0 %3423
  %3427 = vset.pattern.permute.xlu0 0
  %3428 = vperm.xlu0 %3427, %v1778
  %v3429 = vpop.permute.xlu0 %3428
  %3432 = vset.pattern.permute.xlu0 0
  %3433 = vperm.xlu0 %3432, %v1793
  %v3434 = vpop.permute.xlu0 %3433
  %3437 = vset.pattern.permute.xlu0 0
  %3438 = vperm.xlu0 %3437, %v1808
  %v3439 = vpop.permute.xlu0 %3438
  %3442 = vset.pattern.permute.xlu0 0
  %3443 = vperm.xlu0 %3442, %v1823
  %v3444 = vpop.permute.xlu0 %3443
  %3447 = vset.pattern.permute.xlu0 0
  %3448 = vperm.xlu0 %3447, %v1838
  %v3449 = vpop.permute.xlu0 %3448
  %3452 = vset.pattern.permute.xlu0 0
  %3453 = vperm.xlu0 %3452, %v1853
  %v3454 = vpop.permute.xlu0 %3453
  %3457 = vset.pattern.permute.xlu0 0
  %3458 = vperm.xlu0 %3457, %v1868
  %v3459 = vpop.permute.xlu0 %3458
  %3462 = vset.pattern.permute.xlu0 0
  %3463 = vperm.xlu0 %3462, %v1883
  %v3464 = vpop.permute.xlu0 %3463
  %3467 = vset.pattern.permute.xlu0 0
  %3468 = vperm.xlu0 %3467, %v1898
  %v3469 = vpop.permute.xlu0 %3468
  %3472 = vset.pattern.permute.xlu0 0
  %3473 = vperm.xlu0 %3472, %v1913
  %v3474 = vpop.permute.xlu0 %3473
  %3477 = vset.pattern.permute.xlu0 0
  %3478 = vperm.xlu0 %3477, %v1928
  %v3479 = vpop.permute.xlu0 %3478
  %3482 = vset.pattern.permute.xlu0 0
  %3483 = vperm.xlu0 %3482, %v1943
  %v3484 = vpop.permute.xlu0 %3483
  %3487 = vset.pattern.permute.xlu0 0
  %3488 = vperm.xlu0 %3487, %v1958
  %v3489 = vpop.permute.xlu0 %3488
  %3492 = vset.pattern.permute.xlu0 0
  %3493 = vperm.xlu0 %3492, %v1973
  %v3494 = vpop.permute.xlu0 %3493
  %3497 = vset.pattern.permute.xlu0 0
  %3498 = vperm.xlu0 %3497, %v1988
  %v3499 = vpop.permute.xlu0 %3498
  %3502 = vset.pattern.permute.xlu0 0
  %3503 = vperm.xlu0 %3502, %v2003
  %v3504 = vpop.permute.xlu0 %3503
  %3507 = vset.pattern.permute.xlu0 0
  %3508 = vperm.xlu0 %3507, %v2018
  %v3509 = vpop.permute.xlu0 %3508
  %3512 = vset.pattern.permute.xlu0 0
  %3513 = vperm.xlu0 %3512, %v2033
  %v3514 = vpop.permute.xlu0 %3513
  %3517 = vset.pattern.permute.xlu0 0
  %3518 = vperm.xlu0 %3517, %v2048
  %v3519 = vpop.permute.xlu0 %3518
  %3522 = vset.pattern.permute.xlu0 0
  %3523 = vperm.xlu0 %3522, %v2063
  %v3524 = vpop.permute.xlu0 %3523
  %3527 = vset.pattern.permute.xlu0 0
  %3528 = vperm.xlu0 %3527, %v2078
  %v3529 = vpop.permute.xlu0 %3528
  %3532 = vset.pattern.permute.xlu0 0
  %3533 = vperm.xlu0 %3532, %v2093
  %v3534 = vpop.permute.xlu0 %3533
  %3537 = vset.pattern.permute.xlu0 0
  %3538 = vperm.xlu0 %3537, %v2108
  %v3539 = vpop.permute.xlu0 %3538
  %3542 = vset.pattern.permute.xlu0 0
  %3543 = vperm.xlu0 %3542, %v2123
  %v3544 = vpop.permute.xlu0 %3543
  %3547 = vset.pattern.permute.xlu0 0
  %3548 = vperm.xlu0 %3547, %v2138
  %v3549 = vpop.permute.xlu0 %3548
  %v3551 = vsel %vm3230, %v3234, %v3166
  %v3552 = vsel %vm3230, %v3239, %v3167
  %v3553 = vsel %vm3230, %v3244, %v3168
  %v3554 = vsel %vm3230, %v3249, %v3169
  %v3555 = vsel %vm3230, %v3254, %v3170
  %v3556 = vsel %vm3230, %v3259, %v3171
  %v3557 = vsel %vm3230, %v3264, %v3172
  %v3558 = vsel %vm3230, %v3269, %v3173
  %v3559 = vsel %vm3230, %v3274, %v3174
  %v3560 = vsel %vm3230, %v3279, %v3175
  %v3561 = vsel %vm3230, %v3284, %v3176
  %v3562 = vsel %vm3230, %v3289, %v3177
  %v3563 = vsel %vm3230, %v3294, %v3178
  %v3564 = vsel %vm3230, %v3299, %v3179
  %v3565 = vsel %vm3230, %v3304, %v3180
  %v3566 = vsel %vm3230, %v3309, %v3181
  %v3567 = vsel %vm3230, %v3314, %v3182
  %v3568 = vsel %vm3230, %v3319, %v3183
  %v3569 = vsel %vm3230, %v3324, %v3184
  %v3570 = vsel %vm3230, %v3329, %v3185
  %v3571 = vsel %vm3230, %v3334, %v3186
  %v3572 = vsel %vm3230, %v3339, %v3187
  %v3573 = vsel %vm3230, %v3344, %v3188
  %v3574 = vsel %vm3230, %v3349, %v3189
  %v3575 = vsel %vm3230, %v3354, %v3190
  %v3576 = vsel %vm3230, %v3359, %v3191
  %v3577 = vsel %vm3230, %v3364, %v3192
  %v3578 = vsel %vm3230, %v3369, %v3193
  %v3579 = vsel %vm3230, %v3374, %v3194
  %v3580 = vsel %vm3230, %v3379, %v3195
  %v3581 = vsel %vm3230, %v3384, %v3196
  %v3582 = vsel %vm3230, %v3389, %v3197
  %v3583 = vsel %vm3230, %v3394, %v3198
  %v3584 = vsel %vm3230, %v3399, %v3199
  %v3585 = vsel %vm3230, %v3404, %v3200
  %v3586 = vsel %vm3230, %v3409, %v3201
  %v3587 = vsel %vm3230, %v3414, %v3202
  %v3588 = vsel %vm3230, %v3419, %v3203
  %v3589 = vsel %vm3230, %v3424, %v3204
  %v3590 = vsel %vm3230, %v3429, %v3205
  %v3591 = vsel %vm3230, %v3434, %v3206
  %v3592 = vsel %vm3230, %v3439, %v3207
  %v3593 = vsel %vm3230, %v3444, %v3208
  %v3594 = vsel %vm3230, %v3449, %v3209
  %v3595 = vsel %vm3230, %v3454, %v3210
  %v3596 = vsel %vm3230, %v3459, %v3211
  %v3597 = vsel %vm3230, %v3464, %v3212
  %v3598 = vsel %vm3230, %v3469, %v3213
  %v3599 = vsel %vm3230, %v3474, %v3214
  %v3600 = vsel %vm3230, %v3479, %v3215
  %v3601 = vsel %vm3230, %v3484, %v3216
  %v3602 = vsel %vm3230, %v3489, %v3217
  %v3603 = vsel %vm3230, %v3494, %v3218
  %v3604 = vsel %vm3230, %v3499, %v3219
  %v3605 = vsel %vm3230, %v3504, %v3220
  %v3606 = vsel %vm3230, %v3509, %v3221
  %v3607 = vsel %vm3230, %v3514, %v3222
  %v3608 = vsel %vm3230, %v3519, %v3223
  %v3609 = vsel %vm3230, %v3524, %v3224
  %v3610 = vsel %vm3230, %v3529, %v3225
  %v3611 = vsel %vm3230, %v3534, %v3226
  %v3612 = vsel %vm3230, %v3539, %v3227
  %v3613 = vsel %vm3230, %v3544, %v3228
  %v3614 = vsel %vm3230, %v3549, %v3229
  %v3615 = vsel %vm2140, %v3551, 0.0
  %v3616 = vsel %vm2140, %v3552, 0.0
  %v3617 = vsel %vm2140, %v3553, 0.0
  %v3618 = vsel %vm2140, %v3554, 0.0
  %v3619 = vsel %vm2140, %v3555, 0.0
  %v3620 = vsel %vm2140, %v3556, 0.0
  %v3621 = vsel %vm2140, %v3557, 0.0
  %v3622 = vsel %vm2140, %v3558, 0.0
  %v3623 = vsel %vm2140, %v3559, 0.0
  %v3624 = vsel %vm2140, %v3560, 0.0
  %v3625 = vsel %vm2140, %v3561, 0.0
  %v3626 = vsel %vm2140, %v3562, 0.0
  %v3627 = vsel %vm2140, %v3563, 0.0
  %v3628 = vsel %vm2140, %v3564, 0.0
  %v3629 = vsel %vm2140, %v3565, 0.0
  %v3630 = vsel %vm2140, %v3566, 0.0
  %v3631 = vsel %vm2140, %v3567, 0.0
  %v3632 = vsel %vm2140, %v3568, 0.0
  %v3633 = vsel %vm2140, %v3569, 0.0
  %v3634 = vsel %vm2140, %v3570, 0.0
  %v3635 = vsel %vm2140, %v3571, 0.0
  %v3636 = vsel %vm2140, %v3572, 0.0
  %v3637 = vsel %vm2140, %v3573, 0.0
  %v3638 = vsel %vm2140, %v3574, 0.0
  %v3639 = vsel %vm2140, %v3575, 0.0
  %v3640 = vsel %vm2140, %v3576, 0.0
  %v3641 = vsel %vm2140, %v3577, 0.0
  %v3642 = vsel %vm2140, %v3578, 0.0
  %v3643 = vsel %vm2140, %v3579, 0.0
  %v3644 = vsel %vm2140, %v3580, 0.0
  %v3645 = vsel %vm2140, %v3581, 0.0
  %v3646 = vsel %vm2140, %v3582, 0.0
  %v3647 = vsel %vm2140, %v3583, 0.0
  %v3648 = vsel %vm2140, %v3584, 0.0
  %v3649 = vsel %vm2140, %v3585, 0.0
  %v3650 = vsel %vm2140, %v3586, 0.0
  %v3651 = vsel %vm2140, %v3587, 0.0
  %v3652 = vsel %vm2140, %v3588, 0.0
  %v3653 = vsel %vm2140, %v3589, 0.0
  %v3654 = vsel %vm2140, %v3590, 0.0
  %v3655 = vsel %vm2140, %v3591, 0.0
  %v3656 = vsel %vm2140, %v3592, 0.0
  %v3657 = vsel %vm2140, %v3593, 0.0
  %v3658 = vsel %vm2140, %v3594, 0.0
  %v3659 = vsel %vm2140, %v3595, 0.0
  %v3660 = vsel %vm2140, %v3596, 0.0
  %v3661 = vsel %vm2140, %v3597, 0.0
  %v3662 = vsel %vm2140, %v3598, 0.0
  %v3663 = vsel %vm2140, %v3599, 0.0
  %v3664 = vsel %vm2140, %v3600, 0.0
  %v3665 = vsel %vm2140, %v3601, 0.0
  %v3666 = vsel %vm2140, %v3602, 0.0
  %v3667 = vsel %vm2140, %v3603, 0.0
  %v3668 = vsel %vm2140, %v3604, 0.0
  %v3669 = vsel %vm2140, %v3605, 0.0
  %v3670 = vsel %vm2140, %v3606, 0.0
  %v3671 = vsel %vm2140, %v3607, 0.0
  %v3672 = vsel %vm2140, %v3608, 0.0
  %v3673 = vsel %vm2140, %v3609, 0.0
  %v3674 = vsel %vm2140, %v3610, 0.0
  %v3675 = vsel %vm2140, %v3611, 0.0
  %v3676 = vsel %vm2140, %v3612, 0.0
  %v3677 = vsel %vm2140, %v3613, 0.0
  %v3678 = vsel %vm2140, %v3614, 0.0
  %3679 = vst [vmem:[%s5] sm:$0xff] %v3615
  %3680 = vst [vmem:[%s5 + $0x8] sm:$0xff] %v3616
  %3681 = vst [vmem:[%s5 + $0x10] sm:$0xff] %v3617
  %3682 = vst [vmem:[%s5 + $0x18] sm:$0xff] %v3618
  %3683 = vst [vmem:[%s5 + $0x20] sm:$0xff] %v3619
  %3684 = vst [vmem:[%s5 + $0x28] sm:$0xff] %v3620
  %3685 = vst [vmem:[%s5 + $0x30] sm:$0xff] %v3621
  %3686 = vst [vmem:[%s5 + $0x38] sm:$0xff] %v3622
  %3687 = vst [vmem:[%s5 + $0x40] sm:$0xff] %v3623
  %3688 = vst [vmem:[%s5 + $0x48] sm:$0xff] %v3624
  %3689 = vst [vmem:[%s5 + $0x50] sm:$0xff] %v3625
  %3690 = vst [vmem:[%s5 + $0x58] sm:$0xff] %v3626
  %3691 = vst [vmem:[%s5 + $0x60] sm:$0xff] %v3627
  %3692 = vst [vmem:[%s5 + $0x68] sm:$0xff] %v3628
  %3693 = vst [vmem:[%s5 + $0x70] sm:$0xff] %v3629
  %3694 = vst [vmem:[%s5 + $0x78] sm:$0xff] %v3630
  %3695 = vst [vmem:[%s5 + $0x80] sm:$0xff] %v3631
  %3696 = vst [vmem:[%s5 + $0x88] sm:$0xff] %v3632
  %3697 = vst [vmem:[%s5 + $0x90] sm:$0xff] %v3633
  %3698 = vst [vmem:[%s5 + $0x98] sm:$0xff] %v3634
  %3699 = vst [vmem:[%s5 + $0xa0] sm:$0xff] %v3635
  %3700 = vst [vmem:[%s5 + $0xa8] sm:$0xff] %v3636
  %3701 = vst [vmem:[%s5 + $0xb0] sm:$0xff] %v3637
  %3702 = vst [vmem:[%s5 + $0xb8] sm:$0xff] %v3638
  %3703 = vst [vmem:[%s5 + $0xc0] sm:$0xff] %v3639
  %3704 = vst [vmem:[%s5 + $0xc8] sm:$0xff] %v3640
  %3705 = vst [vmem:[%s5 + $0xd0] sm:$0xff] %v3641
  %3706 = vst [vmem:[%s5 + $0xd8] sm:$0xff] %v3642
  %3707 = vst [vmem:[%s5 + $0xe0] sm:$0xff] %v3643
  %3708 = vst [vmem:[%s5 + $0xe8] sm:$0xff] %v3644
  %3709 = vst [vmem:[%s5 + $0xf0] sm:$0xff] %v3645
  %3710 = vst [vmem:[%s5 + $0xf8] sm:$0xff] %v3646
  %3711 = vst [vmem:[%s5 + $0x100] sm:$0xff] %v3647
  %3712 = vst [vmem:[%s5 + $0x108] sm:$0xff] %v3648
  %3713 = vst [vmem:[%s5 + $0x110] sm:$0xff] %v3649
  %3714 = vst [vmem:[%s5 + $0x118] sm:$0xff] %v3650
  %3715 = vst [vmem:[%s5 + $0x120] sm:$0xff] %v3651
  %3716 = vst [vmem:[%s5 + $0x128] sm:$0xff] %v3652
  %3717 = vst [vmem:[%s5 + $0x130] sm:$0xff] %v3653
  %3718 = vst [vmem:[%s5 + $0x138] sm:$0xff] %v3654
  %3719 = vst [vmem:[%s5 + $0x140] sm:$0xff] %v3655
  %3720 = vst [vmem:[%s5 + $0x148] sm:$0xff] %v3656
  %3721 = vst [vmem:[%s5 + $0x150] sm:$0xff] %v3657
  %3722 = vst [vmem:[%s5 + $0x158] sm:$0xff] %v3658
  %3723 = vst [vmem:[%s5 + $0x160] sm:$0xff] %v3659
  %3724 = vst [vmem:[%s5 + $0x168] sm:$0xff] %v3660
  %3725 = vst [vmem:[%s5 + $0x170] sm:$0xff] %v3661
  %3726 = vst [vmem:[%s5 + $0x178] sm:$0xff] %v3662
  %3727 = vst [vmem:[%s5 + $0x180] sm:$0xff] %v3663
  %3728 = vst [vmem:[%s5 + $0x188] sm:$0xff] %v3664
  %3729 = vst [vmem:[%s5 + $0x190] sm:$0xff] %v3665
  %3730 = vst [vmem:[%s5 + $0x198] sm:$0xff] %v3666
  %3731 = vst [vmem:[%s5 + $0x1a0] sm:$0xff] %v3667
  %3732 = vst [vmem:[%s5 + $0x1a8] sm:$0xff] %v3668
  %3733 = vst [vmem:[%s5 + $0x1b0] sm:$0xff] %v3669
  %3734 = vst [vmem:[%s5 + $0x1b8] sm:$0xff] %v3670
  %3735 = vst [vmem:[%s5 + $0x1c0] sm:$0xff] %v3671
  %3736 = vst [vmem:[%s5 + $0x1c8] sm:$0xff] %v3672
  %3737 = vst [vmem:[%s5 + $0x1d0] sm:$0xff] %v3673
  %3738 = vst [vmem:[%s5 + $0x1d8] sm:$0xff] %v3674
  %3739 = vst [vmem:[%s5 + $0x1e0] sm:$0xff] %v3675
  %3740 = vst [vmem:[%s5 + $0x1e8] sm:$0xff] %v3676
  %3741 = vst [vmem:[%s5 + $0x1f0] sm:$0xff] %v3677
  %3742 = vst [vmem:[%s5 + $0x1f8] sm:$0xff] %v3678
  %vm3743 = vcmask 7168
  %3744 = vst.msk [vmem:[%s6] sm:$0xff] %vm3743, %v1193
  %3745 = vst.msk [vmem:[%s6 + $0x8] sm:$0xff] %vm3743, %v1208
  %3746 = vst.msk [vmem:[%s6 + $0x10] sm:$0xff] %vm3743, %v1223
  %3747 = vst.msk [vmem:[%s6 + $0x18] sm:$0xff] %vm3743, %v1238
  %3748 = vst.msk [vmem:[%s6 + $0x20] sm:$0xff] %vm3743, %v1253
  %3749 = vst.msk [vmem:[%s6 + $0x28] sm:$0xff] %vm3743, %v1268
  %3750 = vst.msk [vmem:[%s6 + $0x30] sm:$0xff] %vm3743, %v1283
  %3751 = vst.msk [vmem:[%s6 + $0x38] sm:$0xff] %vm3743, %v1298
  %3752 = vst.msk [vmem:[%s6 + $0x40] sm:$0xff] %vm3743, %v1313
  %3753 = vst.msk [vmem:[%s6 + $0x48] sm:$0xff] %vm3743, %v1328
  %3754 = vst.msk [vmem:[%s6 + $0x50] sm:$0xff] %vm3743, %v1343
  %3755 = vst.msk [vmem:[%s6 + $0x58] sm:$0xff] %vm3743, %v1358
  %3756 = vst.msk [vmem:[%s6 + $0x60] sm:$0xff] %vm3743, %v1373
  %3757 = vst.msk [vmem:[%s6 + $0x68] sm:$0xff] %vm3743, %v1388
  %3758 = vst.msk [vmem:[%s6 + $0x70] sm:$0xff] %vm3743, %v1403
  %3759 = vst.msk [vmem:[%s6 + $0x78] sm:$0xff] %vm3743, %v1418
  %3760 = vst.msk [vmem:[%s6 + $0x80] sm:$0xff] %vm3743, %v1433
  %3761 = vst.msk [vmem:[%s6 + $0x88] sm:$0xff] %vm3743, %v1448
  %3762 = vst.msk [vmem:[%s6 + $0x90] sm:$0xff] %vm3743, %v1463
  %3763 = vst.msk [vmem:[%s6 + $0x98] sm:$0xff] %vm3743, %v1478
  %3764 = vst.msk [vmem:[%s6 + $0xa0] sm:$0xff] %vm3743, %v1493
  %3765 = vst.msk [vmem:[%s6 + $0xa8] sm:$0xff] %vm3743, %v1508
  %3766 = vst.msk [vmem:[%s6 + $0xb0] sm:$0xff] %vm3743, %v1523
  %3767 = vst.msk [vmem:[%s6 + $0xb8] sm:$0xff] %vm3743, %v1538
  %3768 = vst.msk [vmem:[%s6 + $0xc0] sm:$0xff] %vm3743, %v1553
  %3769 = vst.msk [vmem:[%s6 + $0xc8] sm:$0xff] %vm3743, %v1568
  %3770 = vst.msk [vmem:[%s6 + $0xd0] sm:$0xff] %vm3743, %v1583
  %3771 = vst.msk [vmem:[%s6 + $0xd8] sm:$0xff] %vm3743, %v1598
  %3772 = vst.msk [vmem:[%s6 + $0xe0] sm:$0xff] %vm3743, %v1613
  %3773 = vst.msk [vmem:[%s6 + $0xe8] sm:$0xff] %vm3743, %v1628
  %3774 = vst.msk [vmem:[%s6 + $0xf0] sm:$0xff] %vm3743, %v1643
  %3775 = vst.msk [vmem:[%s6 + $0xf8] sm:$0xff] %vm3743, %v1658
  %3776 = vst.msk [vmem:[%s6 + $0x100] sm:$0xff] %vm3743, %v1673
  %3777 = vst.msk [vmem:[%s6 + $0x108] sm:$0xff] %vm3743, %v1688
  %3778 = vst.msk [vmem:[%s6 + $0x110] sm:$0xff] %vm3743, %v1703
  %3779 = vst.msk [vmem:[%s6 + $0x118] sm:$0xff] %vm3743, %v1718
  %3780 = vst.msk [vmem:[%s6 + $0x120] sm:$0xff] %vm3743, %v1733
  %3781 = vst.msk [vmem:[%s6 + $0x128] sm:$0xff] %vm3743, %v1748
  %3782 = vst.msk [vmem:[%s6 + $0x130] sm:$0xff] %vm3743, %v1763
  %3783 = vst.msk [vmem:[%s6 + $0x138] sm:$0xff] %vm3743, %v1778
  %3784 = vst.msk [vmem:[%s6 + $0x140] sm:$0xff] %vm3743, %v1793
  %3785 = vst.msk [vmem:[%s6 + $0x148] sm:$0xff] %vm3743, %v1808
  %3786 = vst.msk [vmem:[%s6 + $0x150] sm:$0xff] %vm3743, %v1823
  %3787 = vst.msk [vmem:[%s6 + $0x158] sm:$0xff] %vm3743, %v1838
  %3788 = vst.msk [vmem:[%s6 + $0x160] sm:$0xff] %vm3743, %v1853
  %3789 = vst.msk [vmem:[%s6 + $0x168] sm:$0xff] %vm3743, %v1868
  %3790 = vst.msk [vmem:[%s6 + $0x170] sm:$0xff] %vm3743, %v1883
  %3791 = vst.msk [vmem:[%s6 + $0x178] sm:$0xff] %vm3743, %v1898
  %3792 = vst.msk [vmem:[%s6 + $0x180] sm:$0xff] %vm3743, %v1913
  %3793 = vst.msk [vmem:[%s6 + $0x188] sm:$0xff] %vm3743, %v1928
  %3794 = vst.msk [vmem:[%s6 + $0x190] sm:$0xff] %vm3743, %v1943
  %3795 = vst.msk [vmem:[%s6 + $0x198] sm:$0xff] %vm3743, %v1958
  %3796 = vst.msk [vmem:[%s6 + $0x1a0] sm:$0xff] %vm3743, %v1973
  %3797 = vst.msk [vmem:[%s6 + $0x1a8] sm:$0xff] %vm3743, %v1988
  %3798 = vst.msk [vmem:[%s6 + $0x1b0] sm:$0xff] %vm3743, %v2003
  %3799 = vst.msk [vmem:[%s6 + $0x1b8] sm:$0xff] %vm3743, %v2018
  %3800 = vst.msk [vmem:[%s6 + $0x1c0] sm:$0xff] %vm3743, %v2033
  %3801 = vst.msk [vmem:[%s6 + $0x1c8] sm:$0xff] %vm3743, %v2048
  %3802 = vst.msk [vmem:[%s6 + $0x1d0] sm:$0xff] %vm3743, %v2063
  %3803 = vst.msk [vmem:[%s6 + $0x1d8] sm:$0xff] %vm3743, %v2078
  %3804 = vst.msk [vmem:[%s6 + $0x1e0] sm:$0xff] %vm3743, %v2093
  %3805 = vst.msk [vmem:[%s6 + $0x1e8] sm:$0xff] %vm3743, %v2108
  %3806 = vst.msk [vmem:[%s6 + $0x1f0] sm:$0xff] %vm3743, %v2123
  %3807 = vst.msk [vmem:[%s6 + $0x1f8] sm:$0xff] %vm3743, %v2138
  // Predicated region
  $region22: #{fairmot_forward.2} parent=0 // pred_check
    _
  $region23: #{fairmot_forward.2} parent=0 // pred_check_branch
    %3809 = sbr.rel (0) target = $region25
  $region24: #{fairmot_forward.2} parent=0 // pred_region
    _
  $region25: #{fairmot_forward.2} parent=0 // pred_fallthru
    _
  // Predicated region
  $region26: #{fairmot_forward.2} parent=0 // pred_check
    _
  $region27: #{fairmot_forward.2} parent=0 // pred_check_branch
    %3811 = sbr.rel (0) target = $region29
  $region28: #{fairmot_forward.2} parent=0 // pred_region
    _
  $region29: #{fairmot_forward.2} parent=0 // pred_fallthru
    _
  // Predicated region
  $region30: #{fairmot_forward.2} parent=0 // pred_check
    _
  $region31: #{fairmot_forward.2} parent=0 // pred_check_branch
    %3813 = sbr.rel (0) target = $region33
  $region32: #{fairmot_forward.2} parent=0 // pred_region
    _
  $region33: #{fairmot_forward.2} parent=0 // pred_fallthru
    _
  // Predicated region
  $region34: #{fairmot_forward.2} parent=0 // pred_check
    _
  $region35: #{fairmot_forward.2} parent=0 // pred_check_branch
    %3815 = sbr.rel (0) target = $region37
  $region36: #{fairmot_forward.2} parent=0 // pred_region
    _
  $region37: #{fairmot_forward.2} parent=0 // pred_fallthru
    _

</llo_original>
